<compile_context>
chip_gen: v6e
topology: v6e:2x2x1
jax: 0.10.0
libtpu: 0.0.40
codegen_flags: <defaults>
</compile_context>

<pallas_src>
import jax
import jax.numpy as jnp
from jax.experimental import pallas as pl
from jax.experimental.pallas import tpu as pltpu


def _dconv_kernel(xpad_ref, weff_ref, beff_ref, out_ref):
    # xpad_ref: (1, Cin, Hp, Wp)  zero-padded image of current batch element
    #                             (resident across the h-tile grid axis)
    # weff_ref: (Cout, 9*Cin)     folded depthwise*pointwise weights
    # beff_ref: (Cout, 1)         folded bias
    # out_ref : (1, Cout, TH, W)  current output tile (NCHW)
    _, Cout, TH, W = out_ref.shape

    h = pl.program_id(1)
    row0 = pl.multiple_of(h * TH, TH)  # first padded row needed by this tile

    weff = weff_ref[...]               # (Cout, 9*Cin) -- hoisted out of the loop
    beff = beff_ref[...]               # (Cout, 1)

    # Static unroll over the TH output rows of this tile.  Per row:
    #   gather the 3 padded input rows it needs, build the 9 shifted taps
    #   stacked along the channel axis, one MXU matmul, lane-dense store.
    for r in range(TH):
        rows = [xpad_ref[0, :, pl.ds(row0 + r + ky, 1), :] for ky in range(3)]
        # rows[ky]: (Cin, 1, Wp) ; taps ordered tap = ky*3 + kx (matches w_eff)
        taps = [rows[ky][:, 0, kx:kx + W] for ky in range(3) for kx in range(3)]
        stacked = jnp.concatenate(taps, axis=0)            # (9*Cin, W)

        res = jnp.dot(weff, stacked,
                      preferred_element_type=jnp.float32) + beff  # (Cout, W)
        out_ref[0, :, r, :] = res.astype(out_ref.dtype)


def _pick_th(h):
    """Row-tile: multiple of 8 (aligned output block), divides H, modest unroll."""
    for th in (64, 56, 48, 40, 32, 24, 16, 8):
        if h % th == 0:
            return th
    return h  # fall back to a single full-height tile


def dconv_forward(x_nchw, w_dw, b_dw, w_pw, b_pw):
    """Forward pass matching the PyTorch `dconv` module.

    x_nchw: (N, Cin, H, W) float32
    w_dw  : (Cin, 1, 3, 3)    ConvTranspose2d depthwise weight (PyTorch layout)
    b_dw  : (Cin,)
    w_pw  : (Cout, Cin, 1, 1) Conv2d 1x1 weight (PyTorch layout)
    b_pw  : (Cout,)
    returns: (N, Cout, H, W) float32
    """
    N, Cin, H, W = x_nchw.shape
    Cout = w_pw.shape[0]

    # 1-pixel spatial halo, staying in NCHW (no transposes anywhere).
    # TODO(synk): fold the halo padding into the kernel (border masking) to
    # drop this last extra pass over the input.
    xpad = jnp.pad(x_nchw, ((0, 0), (0, 0), (1, 1), (1, 1)))
    Hp, Wp = H + 2, W + 2

    # Flip the depthwise 3x3 kernel (transposed-conv semantics), flatten taps.
    wdw_flip = w_dw[:, 0, ::-1, ::-1]                                # (Cin, 3, 3)
    wdw_taps = jnp.transpose(wdw_flip, (1, 2, 0)).reshape(9, Cin)    # (9, Cin)
    wpw_oc = w_pw[:, :, 0, 0]                                        # (Cout, Cin)

    # Fold depthwise into the pointwise matmul (channel-major for NCHW output).
    w_eff = (wpw_oc[:, None, :] * wdw_taps[None, :, :]).reshape(Cout, 9 * Cin)
    b_eff = (b_pw + wpw_oc @ b_dw).reshape(Cout, 1)

    TH = _pick_th(H)
    grid = (N, H // TH)

    out = pl.pallas_call(
        _dconv_kernel,
        out_shape=jax.ShapeDtypeStruct((N, Cout, H, W), jnp.float32),
        grid_spec=pltpu.PrefetchScalarGridSpec(
            num_scalar_prefetch=0,
            grid=grid,
            in_specs=[
                # Full padded image of batch element n, resident across h tiles.
                pl.BlockSpec((1, Cin, Hp, Wp), lambda n, h: (n, 0, 0, 0)),
                # Folded weights / bias: single block, resident for whole grid.
                pl.BlockSpec((Cout, 9 * Cin), lambda n, h: (0, 0)),
                pl.BlockSpec((Cout, 1), lambda n, h: (0, 0)),
            ],
            out_specs=pl.BlockSpec((1, Cout, TH, W), lambda n, h: (n, 0, h, 0)),
        ),
        compiler_params=pltpu.CompilerParams(
            dimension_semantics=("parallel", "parallel"),
            vmem_limit_bytes=32 * 1024 * 1024,
        ),
        cost_estimate=pl.CostEstimate(
            flops=2 * N * H * W * 9 * Cin * Cout,
            transcendentals=0,
            bytes_accessed=4 * (N * Cin * Hp * Wp + N * Cout * H * W
                                + Cout * 9 * Cin + Cout),
        ),
    )(xpad, w_eff, b_eff)

    return out  # already NCHW


def _reference(x_nchw, w_dw, b_dw, w_pw, b_pw):
    """Pure-JAX reference using lax convolutions."""
    Cin = x_nchw.shape[1]
    wdw_flip = w_dw[:, :, ::-1, ::-1]  # (Cin, 1, 3, 3) OIHW, grouped
    dn = jax.lax.conv_dimension_numbers(x_nchw.shape, wdw_flip.shape,
                                        ('NCHW', 'OIHW', 'NCHW'))
    dw = jax.lax.conv_general_dilated(x_nchw, wdw_flip, (1, 1),
                                      [(1, 1), (1, 1)],
                                      dimension_numbers=dn,
                                      feature_group_count=Cin)
    dw = dw + b_dw.reshape(1, Cin, 1, 1)
    dn2 = jax.lax.conv_dimension_numbers(dw.shape, w_pw.shape,
                                         ('NCHW', 'OIHW', 'NCHW'))
    out = jax.lax.conv_general_dilated(dw, w_pw, (1, 1), [(0, 0), (0, 0)],
                                       dimension_numbers=dn2)
    return out + b_pw.reshape(1, -1, 1, 1)


if __name__ == "__main__":
    key = jax.random.PRNGKey(0)
    k_x, k_wdw, k_bdw, k_wpw, k_bpw = jax.random.split(key, 5)

    N, Cin, Cout, H, W = 2, 4, 8, 16, 16

    x = jax.random.normal(k_x, (N, Cin, H, W), dtype=jnp.float32)
    w_dw = 0.1 * jax.random.normal(k_wdw, (Cin, 1, 3, 3), dtype=jnp.float32)
    b_dw = 0.1 * jax.random.normal(k_bdw, (Cin,), dtype=jnp.float32)
    w_pw = 0.1 * jax.random.normal(k_wpw, (Cout, Cin, 1, 1), dtype=jnp.float32)
    b_pw = 0.1 * jax.random.normal(k_bpw, (Cout,), dtype=jnp.float32)

    fwd = jax.jit(dconv_forward)
    out = jax.block_until_ready(fwd(x, w_dw, b_dw, w_pw, b_pw))

    ref = jax.block_until_ready(_reference(x, w_dw, b_dw, w_pw, b_pw))
    assert out.shape == (N, Cout, H, W)
    assert jnp.allclose(out, ref, atol=1e-4, rtol=1e-4), "mismatch vs reference"

    print("KERNEL_OK")
</pallas_src>

<mosaic_0001>
module attributes {stable_mosaic.version = 11 : i64} {
  func.func @_dconv_kernel(%arg0: i32, %arg1: i32, %arg2: memref<1x4x18x18xf32, #tpu.memory_space<vmem>>, %arg3: memref<8x36xf32, #tpu.memory_space<vmem>>, %arg4: memref<8x1xf32, #tpu.memory_space<vmem>>, %arg5: memref<1x8x16x16xf32, #tpu.memory_space<vmem>>) attributes {dimension_semantics = [#tpu.dimension_semantics<parallel>, #tpu.dimension_semantics<parallel>], iteration_bounds = array<i64: 2, 1>, scalar_prefetch = 0 : i64, scratch_operands = 0 : i64, tpu.core_type = #tpu.core_type<tc>, window_params = [{transform_indices = @transform_0, window_bounds = array<i64: 1, 4, 18, 18>}, {pipeline_mode = #tpu.pipeline_mode<synchronous>, transform_indices = @transform_1, window_bounds = array<i64: 8, 36>}, {pipeline_mode = #tpu.pipeline_mode<synchronous>, transform_indices = @transform_2, window_bounds = array<i64: 8, 1>}, {transform_indices = @transform_3, window_bounds = array<i64: 1, 8, 16, 16>}]} {
    %c16_i32 = arith.constant 16 : i32
    %0 = arith.muli %arg1, %c16_i32 : i32
    %1 = tpu.assume_multiple %0, 16 : i32
    %c0 = arith.constant 0 : index
    %c0_0 = arith.constant 0 : index
    %2 = vector.load %arg3[%c0, %c0_0] : memref<8x36xf32, #tpu.memory_space<vmem>>, vector<8x36xf32>
    %c0_1 = arith.constant 0 : index
    %c0_2 = arith.constant 0 : index
    %3 = vector.load %arg4[%c0_1, %c0_2] : memref<8x1xf32, #tpu.memory_space<vmem>>, vector<8x1xf32>
    %c0_i32 = arith.constant 0 : i32
    %4 = arith.addi %1, %c0_i32 : i32
    %c0_i32_3 = arith.constant 0 : i32
    %5 = arith.addi %4, %c0_i32_3 : i32
    %c0_4 = arith.constant 0 : index
    %c0_5 = arith.constant 0 : index
    %6 = arith.index_cast %5 : i32 to index
    %c0_6 = arith.constant 0 : index
    %7 = vector.load %arg2[%c0_4, %c0_5, %6, %c0_6] : memref<1x4x18x18xf32, #tpu.memory_space<vmem>>, vector<1x4x1x18xf32>
    %8 = vector.shape_cast %7 : vector<1x4x1x18xf32> to vector<4x1x18xf32>
    %c0_i32_7 = arith.constant 0 : i32
    %9 = arith.addi %1, %c0_i32_7 : i32
    %c1_i32 = arith.constant 1 : i32
    %10 = arith.addi %9, %c1_i32 : i32
    %c0_8 = arith.constant 0 : index
    %c0_9 = arith.constant 0 : index
    %11 = arith.index_cast %10 : i32 to index
    %c0_10 = arith.constant 0 : index
    %12 = vector.load %arg2[%c0_8, %c0_9, %11, %c0_10] : memref<1x4x18x18xf32, #tpu.memory_space<vmem>>, vector<1x4x1x18xf32>
    %13 = vector.shape_cast %12 : vector<1x4x1x18xf32> to vector<4x1x18xf32>
    %c0_i32_11 = arith.constant 0 : i32
    %14 = arith.addi %1, %c0_i32_11 : i32
    %c2_i32 = arith.constant 2 : i32
    %15 = arith.addi %14, %c2_i32 : i32
    %c0_12 = arith.constant 0 : index
    %c0_13 = arith.constant 0 : index
    %16 = arith.index_cast %15 : i32 to index
    %c0_14 = arith.constant 0 : index
    %17 = vector.load %arg2[%c0_12, %c0_13, %16, %c0_14] : memref<1x4x18x18xf32, #tpu.memory_space<vmem>>, vector<1x4x1x18xf32>
    %18 = vector.shape_cast %17 : vector<1x4x1x18xf32> to vector<4x1x18xf32>
    %19 = vector.extract_strided_slice %8 {offsets = [0, 0, 0], sizes = [4, 1, 16], strides = [1, 1, 1]} : vector<4x1x18xf32> to vector<4x1x16xf32>
    %20 = vector.shape_cast %19 : vector<4x1x16xf32> to vector<4x16xf32>
    %21 = vector.extract_strided_slice %8 {offsets = [0, 0, 1], sizes = [4, 1, 16], strides = [1, 1, 1]} : vector<4x1x18xf32> to vector<4x1x16xf32>
    %22 = vector.shape_cast %21 : vector<4x1x16xf32> to vector<4x16xf32>
    %23 = vector.extract_strided_slice %8 {offsets = [0, 0, 2], sizes = [4, 1, 16], strides = [1, 1, 1]} : vector<4x1x18xf32> to vector<4x1x16xf32>
    %24 = vector.shape_cast %23 : vector<4x1x16xf32> to vector<4x16xf32>
    %25 = vector.extract_strided_slice %13 {offsets = [0, 0, 0], sizes = [4, 1, 16], strides = [1, 1, 1]} : vector<4x1x18xf32> to vector<4x1x16xf32>
    %26 = vector.shape_cast %25 : vector<4x1x16xf32> to vector<4x16xf32>
    %27 = vector.extract_strided_slice %13 {offsets = [0, 0, 1], sizes = [4, 1, 16], strides = [1, 1, 1]} : vector<4x1x18xf32> to vector<4x1x16xf32>
    %28 = vector.shape_cast %27 : vector<4x1x16xf32> to vector<4x16xf32>
    %29 = vector.extract_strided_slice %13 {offsets = [0, 0, 2], sizes = [4, 1, 16], strides = [1, 1, 1]} : vector<4x1x18xf32> to vector<4x1x16xf32>
    %30 = vector.shape_cast %29 : vector<4x1x16xf32> to vector<4x16xf32>
    %31 = vector.extract_strided_slice %18 {offsets = [0, 0, 0], sizes = [4, 1, 16], strides = [1, 1, 1]} : vector<4x1x18xf32> to vector<4x1x16xf32>
    %32 = vector.shape_cast %31 : vector<4x1x16xf32> to vector<4x16xf32>
    %33 = vector.extract_strided_slice %18 {offsets = [0, 0, 1], sizes = [4, 1, 16], strides = [1, 1, 1]} : vector<4x1x18xf32> to vector<4x1x16xf32>
    %34 = vector.shape_cast %33 : vector<4x1x16xf32> to vector<4x16xf32>
    %35 = vector.extract_strided_slice %18 {offsets = [0, 0, 2], sizes = [4, 1, 16], strides = [1, 1, 1]} : vector<4x1x18xf32> to vector<4x1x16xf32>
    %36 = vector.shape_cast %35 : vector<4x1x16xf32> to vector<4x16xf32>
    %37 = tpu.concatenate %20, %22, %24, %26, %28, %30, %32, %34, %36 in 0 : vector<4x16xf32>, vector<4x16xf32>, vector<4x16xf32>, vector<4x16xf32>, vector<4x16xf32>, vector<4x16xf32>, vector<4x16xf32>, vector<4x16xf32>, vector<4x16xf32> -> vector<36x16xf32>
    %cst = arith.constant dense<0.000000e+00> : vector<8x16xf32>
    %38 = tpu.matmul %2, %37, %cst {dimension_numbers = #tpu.dot_dimension_numbers<[1], [0], [0], [1], [0, 0, 1, 1], [], []>} : vector<8x36xf32>, vector<36x16xf32>, vector<8x16xf32> -> vector<8x16xf32>
    %39 = vector.broadcast %3 : vector<8x1xf32> to vector<8x16xf32>
    %40 = arith.addf %38, %39 : vector<8x16xf32>
    %c0_15 = arith.constant 0 : index
    %c0_16 = arith.constant 0 : index
    %c0_17 = arith.constant 0 : index
    %c0_18 = arith.constant 0 : index
    %41 = vector.load %arg5[%c0_15, %c0_16, %c0_17, %c0_18] : memref<1x8x16x16xf32, #tpu.memory_space<vmem>>, vector<1x8x1x16xf32>
    %42 = vector.shape_cast %41 : vector<1x8x1x16xf32> to vector<8x16xf32>
    %43 = vector.shape_cast %40 : vector<8x16xf32> to vector<1x8x1x16xf32>
    tpu.vector_store %arg5[%c0_15, %c0_16, %c0_17, %c0_18], %43 {strides = array<i32>} : memref<1x8x16x16xf32, #tpu.memory_space<vmem>>, vector<1x8x1x16xf32>,
    %c1_i32_19 = arith.constant 1 : i32
    %44 = arith.addi %1, %c1_i32_19 : i32
    %c0_i32_20 = arith.constant 0 : i32
    %45 = arith.addi %44, %c0_i32_20 : i32
    %c0_21 = arith.constant 0 : index
    %c0_22 = arith.constant 0 : index
    %46 = arith.index_cast %45 : i32 to index
    %c0_23 = arith.constant 0 : index
    %47 = vector.load %arg2[%c0_21, %c0_22, %46, %c0_23] : memref<1x4x18x18xf32, #tpu.memory_space<vmem>>, vector<1x4x1x18xf32>
    %48 = vector.shape_cast %47 : vector<1x4x1x18xf32> to vector<4x1x18xf32>
    %c1_i32_24 = arith.constant 1 : i32
    %49 = arith.addi %1, %c1_i32_24 : i32
    %c1_i32_25 = arith.constant 1 : i32
    %50 = arith.addi %49, %c1_i32_25 : i32
    %c0_26 = arith.constant 0 : index
    %c0_27 = arith.constant 0 : index
    %51 = arith.index_cast %50 : i32 to index
    %c0_28 = arith.constant 0 : index
    %52 = vector.load %arg2[%c0_26, %c0_27, %51, %c0_28] : memref<1x4x18x18xf32, #tpu.memory_space<vmem>>, vector<1x4x1x18xf32>
    %53 = vector.shape_cast %52 : vector<1x4x1x18xf32> to vector<4x1x18xf32>
    %c1_i32_29 = arith.constant 1 : i32
    %54 = arith.addi %1, %c1_i32_29 : i32
    %c2_i32_30 = arith.constant 2 : i32
    %55 = arith.addi %54, %c2_i32_30 : i32
    %c0_31 = arith.constant 0 : index
    %c0_32 = arith.constant 0 : index
    %56 = arith.index_cast %55 : i32 to index
    %c0_33 = arith.constant 0 : index
    %57 = vector.load %arg2[%c0_31, %c0_32, %56, %c0_33] : memref<1x4x18x18xf32, #tpu.memory_space<vmem>>, vector<1x4x1x18xf32>
    %58 = vector.shape_cast %57 : vector<1x4x1x18xf32> to vector<4x1x18xf32>
    %59 = vector.extract_strided_slice %48 {offsets = [0, 0, 0], sizes = [4, 1, 16], strides = [1, 1, 1]} : vector<4x1x18xf32> to vector<4x1x16xf32>
    %60 = vector.shape_cast %59 : vector<4x1x16xf32> to vector<4x16xf32>
    %61 = vector.extract_strided_slice %48 {offsets = [0, 0, 1], sizes = [4, 1, 16], strides = [1, 1, 1]} : vector<4x1x18xf32> to vector<4x1x16xf32>
    %62 = vector.shape_cast %61 : vector<4x1x16xf32> to vector<4x16xf32>
    %63 = vector.extract_strided_slice %48 {offsets = [0, 0, 2], sizes = [4, 1, 16], strides = [1, 1, 1]} : vector<4x1x18xf32> to vector<4x1x16xf32>
    %64 = vector.shape_cast %63 : vector<4x1x16xf32> to vector<4x16xf32>
    %65 = vector.extract_strided_slice %53 {offsets = [0, 0, 0], sizes = [4, 1, 16], strides = [1, 1, 1]} : vector<4x1x18xf32> to vector<4x1x16xf32>
    %66 = vector.shape_cast %65 : vector<4x1x16xf32> to vector<4x16xf32>
    %67 = vector.extract_strided_slice %53 {offsets = [0, 0, 1], sizes = [4, 1, 16], strides = [1, 1, 1]} : vector<4x1x18xf32> to vector<4x1x16xf32>
    %68 = vector.shape_cast %67 : vector<4x1x16xf32> to vector<4x16xf32>
    %69 = vector.extract_strided_slice %53 {offsets = [0, 0, 2], sizes = [4, 1, 16], strides = [1, 1, 1]} : vector<4x1x18xf32> to vector<4x1x16xf32>
    %70 = vector.shape_cast %69 : vector<4x1x16xf32> to vector<4x16xf32>
    %71 = vector.extract_strided_slice %58 {offsets = [0, 0, 0], sizes = [4, 1, 16], strides = [1, 1, 1]} : vector<4x1x18xf32> to vector<4x1x16xf32>
    %72 = vector.shape_cast %71 : vector<4x1x16xf32> to vector<4x16xf32>
    %73 = vector.extract_strided_slice %58 {offsets = [0, 0, 1], sizes = [4, 1, 16], strides = [1, 1, 1]} : vector<4x1x18xf32> to vector<4x1x16xf32>
    %74 = vector.shape_cast %73 : vector<4x1x16xf32> to vector<4x16xf32>
    %75 = vector.extract_strided_slice %58 {offsets = [0, 0, 2], sizes = [4, 1, 16], strides = [1, 1, 1]} : vector<4x1x18xf32> to vector<4x1x16xf32>
    %76 = vector.shape_cast %75 : vector<4x1x16xf32> to vector<4x16xf32>
    %77 = tpu.concatenate %60, %62, %64, %66, %68, %70, %72, %74, %76 in 0 : vector<4x16xf32>, vector<4x16xf32>, vector<4x16xf32>, vector<4x16xf32>, vector<4x16xf32>, vector<4x16xf32>, vector<4x16xf32>, vector<4x16xf32>, vector<4x16xf32> -> vector<36x16xf32>
    %cst_34 = arith.constant dense<0.000000e+00> : vector<8x16xf32>
    %78 = tpu.matmul %2, %77, %cst_34 {dimension_numbers = #tpu.dot_dimension_numbers<[1], [0], [0], [1], [0, 0, 1, 1], [], []>} : vector<8x36xf32>, vector<36x16xf32>, vector<8x16xf32> -> vector<8x16xf32>
    %79 = vector.broadcast %3 : vector<8x1xf32> to vector<8x16xf32>
    %80 = arith.addf %78, %79 : vector<8x16xf32>
    %c0_35 = arith.constant 0 : index
    %c0_36 = arith.constant 0 : index
    %c1 = arith.constant 1 : index
    %c0_37 = arith.constant 0 : index
    %81 = vector.load %arg5[%c0_35, %c0_36, %c1, %c0_37] : memref<1x8x16x16xf32, #tpu.memory_space<vmem>>, vector<1x8x1x16xf32>
    %82 = vector.shape_cast %81 : vector<1x8x1x16xf32> to vector<8x16xf32>
    %83 = vector.shape_cast %80 : vector<8x16xf32> to vector<1x8x1x16xf32>
    tpu.vector_store %arg5[%c0_35, %c0_36, %c1, %c0_37], %83 {strides = array<i32>} : memref<1x8x16x16xf32, #tpu.memory_space<vmem>>, vector<1x8x1x16xf32>,
    %c2_i32_38 = arith.constant 2 : i32
    %84 = arith.addi %1, %c2_i32_38 : i32
    %c0_i32_39 = arith.constant 0 : i32
    %85 = arith.addi %84, %c0_i32_39 : i32
    %c0_40 = arith.constant 0 : index
    %c0_41 = arith.constant 0 : index
    %86 = arith.index_cast %85 : i32 to index
    %c0_42 = arith.constant 0 : index
    %87 = vector.load %arg2[%c0_40, %c0_41, %86, %c0_42] : memref<1x4x18x18xf32, #tpu.memory_space<vmem>>, vector<1x4x1x18xf32>
    %88 = vector.shape_cast %87 : vector<1x4x1x18xf32> to vector<4x1x18xf32>
    %c2_i32_43 = arith.constant 2 : i32
    %89 = arith.addi %1, %c2_i32_43 : i32
    %c1_i32_44 = arith.constant 1 : i32
    %90 = arith.addi %89, %c1_i32_44 : i32
    %c0_45 = arith.constant 0 : index
    %c0_46 = arith.constant 0 : index
    %91 = arith.index_cast %90 : i32 to index
    %c0_47 = arith.constant 0 : index
    %92 = vector.load %arg2[%c0_45, %c0_46, %91, %c0_47] : memref<1x4x18x18xf32, #tpu.memory_space<vmem>>, vector<1x4x1x18xf32>
    %93 = vector.shape_cast %92 : vector<1x4x1x18xf32> to vector<4x1x18xf32>
    %c2_i32_48 = arith.constant 2 : i32
    %94 = arith.addi %1, %c2_i32_48 : i32
    %c2_i32_49 = arith.constant 2 : i32
    %95 = arith.addi %94, %c2_i32_49 : i32
    %c0_50 = arith.constant 0 : index
    %c0_51 = arith.constant 0 : index
    %96 = arith.index_cast %95 : i32 to index
    %c0_52 = arith.constant 0 : index
    %97 = vector.load %arg2[%c0_50, %c0_51, %96, %c0_52] : memref<1x4x18x18xf32, #tpu.memory_space<vmem>>, vector<1x4x1x18xf32>
    %98 = vector.shape_cast %97 : vector<1x4x1x18xf32> to vector<4x1x18xf32>
    %99 = vector.extract_strided_slice %88 {offsets = [0, 0, 0], sizes = [4, 1, 16], strides = [1, 1, 1]} : vector<4x1x18xf32> to vector<4x1x16xf32>
    %100 = vector.shape_cast %99 : vector<4x1x16xf32> to vector<4x16xf32>
    %101 = vector.extract_strided_slice %88 {offsets = [0, 0, 1], sizes = [4, 1, 16], strides = [1, 1, 1]} : vector<4x1x18xf32> to vector<4x1x16xf32>
    %102 = vector.shape_cast %101 : vector<4x1x16xf32> to vector<4x16xf32>
    %103 = vector.extract_strided_slice %88 {offsets = [0, 0, 2], sizes = [4, 1, 16], strides = [1, 1, 1]} : vector<4x1x18xf32> to vector<4x1x16xf32>
    %104 = vector.shape_cast %103 : vector<4x1x16xf32> to vector<4x16xf32>
    %105 = vector.extract_strided_slice %93 {offsets = [0, 0, 0], sizes = [4, 1, 16], strides = [1, 1, 1]} : vector<4x1x18xf32> to vector<4x1x16xf32>
    %106 = vector.shape_cast %105 : vector<4x1x16xf32> to vector<4x16xf32>
    %107 = vector.extract_strided_slice %93 {offsets = [0, 0, 1], sizes = [4, 1, 16], strides = [1, 1, 1]} : vector<4x1x18xf32> to vector<4x1x16xf32>
    %108 = vector.shape_cast %107 : vector<4x1x16xf32> to vector<4x16xf32>
    %109 = vector.extract_strided_slice %93 {offsets = [0, 0, 2], sizes = [4, 1, 16], strides = [1, 1, 1]} : vector<4x1x18xf32> to vector<4x1x16xf32>
    %110 = vector.shape_cast %109 : vector<4x1x16xf32> to vector<4x16xf32>
    %111 = vector.extract_strided_slice %98 {offsets = [0, 0, 0], sizes = [4, 1, 16], strides = [1, 1, 1]} : vector<4x1x18xf32> to vector<4x1x16xf32>
    %112 = vector.shape_cast %111 : vector<4x1x16xf32> to vector<4x16xf32>
    %113 = vector.extract_strided_slice %98 {offsets = [0, 0, 1], sizes = [4, 1, 16], strides = [1, 1, 1]} : vector<4x1x18xf32> to vector<4x1x16xf32>
    %114 = vector.shape_cast %113 : vector<4x1x16xf32> to vector<4x16xf32>
    %115 = vector.extract_strided_slice %98 {offsets = [0, 0, 2], sizes = [4, 1, 16], strides = [1, 1, 1]} : vector<4x1x18xf32> to vector<4x1x16xf32>
    %116 = vector.shape_cast %115 : vector<4x1x16xf32> to vector<4x16xf32>
    %117 = tpu.concatenate %100, %102, %104, %106, %108, %110, %112, %114, %116 in 0 : vector<4x16xf32>, vector<4x16xf32>, vector<4x16xf32>, vector<4x16xf32>, vector<4x16xf32>, vector<4x16xf32>, vector<4x16xf32>, vector<4x16xf32>, vector<4x16xf32> -> vector<36x16xf32>
    %cst_53 = arith.constant dense<0.000000e+00> : vector<8x16xf32>
    %118 = tpu.matmul %2, %117, %cst_53 {dimension_numbers = #tpu.dot_dimension_numbers<[1], [0], [0], [1], [0, 0, 1, 1], [], []>} : vector<8x36xf32>, vector<36x16xf32>, vector<8x16xf32> -> vector<8x16xf32>
    %119 = vector.broadcast %3 : vector<8x1xf32> to vector<8x16xf32>
    %120 = arith.addf %118, %119 : vector<8x16xf32>
    %c0_54 = arith.constant 0 : index
    %c0_55 = arith.constant 0 : index
    %c2 = arith.constant 2 : index
    %c0_56 = arith.constant 0 : index
    %121 = vector.load %arg5[%c0_54, %c0_55, %c2, %c0_56] : memref<1x8x16x16xf32, #tpu.memory_space<vmem>>, vector<1x8x1x16xf32>
    %122 = vector.shape_cast %121 : vector<1x8x1x16xf32> to vector<8x16xf32>
    %123 = vector.shape_cast %120 : vector<8x16xf32> to vector<1x8x1x16xf32>
    tpu.vector_store %arg5[%c0_54, %c0_55, %c2, %c0_56], %123 {strides = array<i32>} : memref<1x8x16x16xf32, #tpu.memory_space<vmem>>, vector<1x8x1x16xf32>,
    %c3_i32 = arith.constant 3 : i32
    %124 = arith.addi %1, %c3_i32 : i32
    %c0_i32_57 = arith.constant 0 : i32
    %125 = arith.addi %124, %c0_i32_57 : i32
    %c0_58 = arith.constant 0 : index
    %c0_59 = arith.constant 0 : index
    %126 = arith.index_cast %125 : i32 to index
    %c0_60 = arith.constant 0 : index
    %127 = vector.load %arg2[%c0_58, %c0_59, %126, %c0_60] : memref<1x4x18x18xf32, #tpu.memory_space<vmem>>, vector<1x4x1x18xf32>
    %128 = vector.shape_cast %127 : vector<1x4x1x18xf32> to vector<4x1x18xf32>
    %c3_i32_61 = arith.constant 3 : i32
    %129 = arith.addi %1, %c3_i32_61 : i32
    %c1_i32_62 = arith.constant 1 : i32
    %130 = arith.addi %129, %c1_i32_62 : i32
    %c0_63 = arith.constant 0 : index
    %c0_64 = arith.constant 0 : index
    %131 = arith.index_cast %130 : i32 to index
    %c0_65 = arith.constant 0 : index
    %132 = vector.load %arg2[%c0_63, %c0_64, %131, %c0_65] : memref<1x4x18x18xf32, #tpu.memory_space<vmem>>, vector<1x4x1x18xf32>
    %133 = vector.shape_cast %132 : vector<1x4x1x18xf32> to vector<4x1x18xf32>
    %c3_i32_66 = arith.constant 3 : i32
    %134 = arith.addi %1, %c3_i32_66 : i32
    %c2_i32_67 = arith.constant 2 : i32
    %135 = arith.addi %134, %c2_i32_67 : i32
    %c0_68 = arith.constant 0 : index
    %c0_69 = arith.constant 0 : index
    %136 = arith.index_cast %135 : i32 to index
    %c0_70 = arith.constant 0 : index
    %137 = vector.load %arg2[%c0_68, %c0_69, %136, %c0_70] : memref<1x4x18x18xf32, #tpu.memory_space<vmem>>, vector<1x4x1x18xf32>
    %138 = vector.shape_cast %137 : vector<1x4x1x18xf32> to vector<4x1x18xf32>
    %139 = vector.extract_strided_slice %128 {offsets = [0, 0, 0], sizes = [4, 1, 16], strides = [1, 1, 1]} : vector<4x1x18xf32> to vector<4x1x16xf32>
    %140 = vector.shape_cast %139 : vector<4x1x16xf32> to vector<4x16xf32>
    %141 = vector.extract_strided_slice %128 {offsets = [0, 0, 1], sizes = [4, 1, 16], strides = [1, 1, 1]} : vector<4x1x18xf32> to vector<4x1x16xf32>
    %142 = vector.shape_cast %141 : vector<4x1x16xf32> to vector<4x16xf32>
    %143 = vector.extract_strided_slice %128 {offsets = [0, 0, 2], sizes = [4, 1, 16], strides = [1, 1, 1]} : vector<4x1x18xf32> to vector<4x1x16xf32>
    %144 = vector.shape_cast %143 : vector<4x1x16xf32> to vector<4x16xf32>
    %145 = vector.extract_strided_slice %133 {offsets = [0, 0, 0], sizes = [4, 1, 16], strides = [1, 1, 1]} : vector<4x1x18xf32> to vector<4x1x16xf32>
    %146 = vector.shape_cast %145 : vector<4x1x16xf32> to vector<4x16xf32>
    %147 = vector.extract_strided_slice %133 {offsets = [0, 0, 1], sizes = [4, 1, 16], strides = [1, 1, 1]} : vector<4x1x18xf32> to vector<4x1x16xf32>
    %148 = vector.shape_cast %147 : vector<4x1x16xf32> to vector<4x16xf32>
    %149 = vector.extract_strided_slice %133 {offsets = [0, 0, 2], sizes = [4, 1, 16], strides = [1, 1, 1]} : vector<4x1x18xf32> to vector<4x1x16xf32>
    %150 = vector.shape_cast %149 : vector<4x1x16xf32> to vector<4x16xf32>
    %151 = vector.extract_strided_slice %138 {offsets = [0, 0, 0], sizes = [4, 1, 16], strides = [1, 1, 1]} : vector<4x1x18xf32> to vector<4x1x16xf32>
    %152 = vector.shape_cast %151 : vector<4x1x16xf32> to vector<4x16xf32>
    %153 = vector.extract_strided_slice %138 {offsets = [0, 0, 1], sizes = [4, 1, 16], strides = [1, 1, 1]} : vector<4x1x18xf32> to vector<4x1x16xf32>
    %154 = vector.shape_cast %153 : vector<4x1x16xf32> to vector<4x16xf32>
    %155 = vector.extract_strided_slice %138 {offsets = [0, 0, 2], sizes = [4, 1, 16], strides = [1, 1, 1]} : vector<4x1x18xf32> to vector<4x1x16xf32>
    %156 = vector.shape_cast %155 : vector<4x1x16xf32> to vector<4x16xf32>
    %157 = tpu.concatenate %140, %142, %144, %146, %148, %150, %152, %154, %156 in 0 : vector<4x16xf32>, vector<4x16xf32>, vector<4x16xf32>, vector<4x16xf32>, vector<4x16xf32>, vector<4x16xf32>, vector<4x16xf32>, vector<4x16xf32>, vector<4x16xf32> -> vector<36x16xf32>
    %cst_71 = arith.constant dense<0.000000e+00> : vector<8x16xf32>
    %158 = tpu.matmul %2, %157, %cst_71 {dimension_numbers = #tpu.dot_dimension_numbers<[1], [0], [0], [1], [0, 0, 1, 1], [], []>} : vector<8x36xf32>, vector<36x16xf32>, vector<8x16xf32> -> vector<8x16xf32>
    %159 = vector.broadcast %3 : vector<8x1xf32> to vector<8x16xf32>
    %160 = arith.addf %158, %159 : vector<8x16xf32>
    %c0_72 = arith.constant 0 : index
    %c0_73 = arith.constant 0 : index
    %c3 = arith.constant 3 : index
    %c0_74 = arith.constant 0 : index
    %161 = vector.load %arg5[%c0_72, %c0_73, %c3, %c0_74] : memref<1x8x16x16xf32, #tpu.memory_space<vmem>>, vector<1x8x1x16xf32>
    %162 = vector.shape_cast %161 : vector<1x8x1x16xf32> to vector<8x16xf32>
    %163 = vector.shape_cast %160 : vector<8x16xf32> to vector<1x8x1x16xf32>
    tpu.vector_store %arg5[%c0_72, %c0_73, %c3, %c0_74], %163 {strides = array<i32>} : memref<1x8x16x16xf32, #tpu.memory_space<vmem>>, vector<1x8x1x16xf32>,
    %c4_i32 = arith.constant 4 : i32
    %164 = arith.addi %1, %c4_i32 : i32
    %c0_i32_75 = arith.constant 0 : i32
    %165 = arith.addi %164, %c0_i32_75 : i32
    %c0_76 = arith.constant 0 : index
    %c0_77 = arith.constant 0 : index
    %166 = arith.index_cast %165 : i32 to index
    %c0_78 = arith.constant 0 : index
    %167 = vector.load %arg2[%c0_76, %c0_77, %166, %c0_78] : memref<1x4x18x18xf32, #tpu.memory_space<vmem>>, vector<1x4x1x18xf32>
    %168 = vector.shape_cast %167 : vector<1x4x1x18xf32> to vector<4x1x18xf32>
    %c4_i32_79 = arith.constant 4 : i32
    %169 = arith.addi %1, %c4_i32_79 : i32
    %c1_i32_80 = arith.constant 1 : i32
    %170 = arith.addi %169, %c1_i32_80 : i32
    %c0_81 = arith.constant 0 : index
    %c0_82 = arith.constant 0 : index
    %171 = arith.index_cast %170 : i32 to index
    %c0_83 = arith.constant 0 : index
    %172 = vector.load %arg2[%c0_81, %c0_82, %171, %c0_83] : memref<1x4x18x18xf32, #tpu.memory_space<vmem>>, vector<1x4x1x18xf32>
    %173 = vector.shape_cast %172 : vector<1x4x1x18xf32> to vector<4x1x18xf32>
    %c4_i32_84 = arith.constant 4 : i32
    %174 = arith.addi %1, %c4_i32_84 : i32
    %c2_i32_85 = arith.constant 2 : i32
    %175 = arith.addi %174, %c2_i32_85 : i32
    %c0_86 = arith.constant 0 : index
    %c0_87 = arith.constant 0 : index
    %176 = arith.index_cast %175 : i32 to index
    %c0_88 = arith.constant 0 : index
    %177 = vector.load %arg2[%c0_86, %c0_87, %176, %c0_88] : memref<1x4x18x18xf32, #tpu.memory_space<vmem>>, vector<1x4x1x18xf32>
    %178 = vector.shape_cast %177 : vector<1x4x1x18xf32> to vector<4x1x18xf32>
    %179 = vector.extract_strided_slice %168 {offsets = [0, 0, 0], sizes = [4, 1, 16], strides = [1, 1, 1]} : vector<4x1x18xf32> to vector<4x1x16xf32>
    %180 = vector.shape_cast %179 : vector<4x1x16xf32> to vector<4x16xf32>
    %181 = vector.extract_strided_slice %168 {offsets = [0, 0, 1], sizes = [4, 1, 16], strides = [1, 1, 1]} : vector<4x1x18xf32> to vector<4x1x16xf32>
    %182 = vector.shape_cast %181 : vector<4x1x16xf32> to vector<4x16xf32>
    %183 = vector.extract_strided_slice %168 {offsets = [0, 0, 2], sizes = [4, 1, 16], strides = [1, 1, 1]} : vector<4x1x18xf32> to vector<4x1x16xf32>
    %184 = vector.shape_cast %183 : vector<4x1x16xf32> to vector<4x16xf32>
    %185 = vector.extract_strided_slice %173 {offsets = [0, 0, 0], sizes = [4, 1, 16], strides = [1, 1, 1]} : vector<4x1x18xf32> to vector<4x1x16xf32>
    %186 = vector.shape_cast %185 : vector<4x1x16xf32> to vector<4x16xf32>
    %187 = vector.extract_strided_slice %173 {offsets = [0, 0, 1], sizes = [4, 1, 16], strides = [1, 1, 1]} : vector<4x1x18xf32> to vector<4x1x16xf32>
    %188 = vector.shape_cast %187 : vector<4x1x16xf32> to vector<4x16xf32>
    %189 = vector.extract_strided_slice %173 {offsets = [0, 0, 2], sizes = [4, 1, 16], strides = [1, 1, 1]} : vector<4x1x18xf32> to vector<4x1x16xf32>
    %190 = vector.shape_cast %189 : vector<4x1x16xf32> to vector<4x16xf32>
    %191 = vector.extract_strided_slice %178 {offsets = [0, 0, 0], sizes = [4, 1, 16], strides = [1, 1, 1]} : vector<4x1x18xf32> to vector<4x1x16xf32>
    %192 = vector.shape_cast %191 : vector<4x1x16xf32> to vector<4x16xf32>
    %193 = vector.extract_strided_slice %178 {offsets = [0, 0, 1], sizes = [4, 1, 16], strides = [1, 1, 1]} : vector<4x1x18xf32> to vector<4x1x16xf32>
    %194 = vector.shape_cast %193 : vector<4x1x16xf32> to vector<4x16xf32>
    %195 = vector.extract_strided_slice %178 {offsets = [0, 0, 2], sizes = [4, 1, 16], strides = [1, 1, 1]} : vector<4x1x18xf32> to vector<4x1x16xf32>
    %196 = vector.shape_cast %195 : vector<4x1x16xf32> to vector<4x16xf32>
    %197 = tpu.concatenate %180, %182, %184, %186, %188, %190, %192, %194, %196 in 0 : vector<4x16xf32>, vector<4x16xf32>, vector<4x16xf32>, vector<4x16xf32>, vector<4x16xf32>, vector<4x16xf32>, vector<4x16xf32>, vector<4x16xf32>, vector<4x16xf32> -> vector<36x16xf32>
    %cst_89 = arith.constant dense<0.000000e+00> : vector<8x16xf32>
    %198 = tpu.matmul %2, %197, %cst_89 {dimension_numbers = #tpu.dot_dimension_numbers<[1], [0], [0], [1], [0, 0, 1, 1], [], []>} : vector<8x36xf32>, vector<36x16xf32>, vector<8x16xf32> -> vector<8x16xf32>
    %199 = vector.broadcast %3 : vector<8x1xf32> to vector<8x16xf32>
    %200 = arith.addf %198, %199 : vector<8x16xf32>
    %c0_90 = arith.constant 0 : index
    %c0_91 = arith.constant 0 : index
    %c4 = arith.constant 4 : index
    %c0_92 = arith.constant 0 : index
    %201 = vector.load %arg5[%c0_90, %c0_91, %c4, %c0_92] : memref<1x8x16x16xf32, #tpu.memory_space<vmem>>, vector<1x8x1x16xf32>
    %202 = vector.shape_cast %201 : vector<1x8x1x16xf32> to vector<8x16xf32>
    %203 = vector.shape_cast %200 : vector<8x16xf32> to vector<1x8x1x16xf32>
    tpu.vector_store %arg5[%c0_90, %c0_91, %c4, %c0_92], %203 {strides = array<i32>} : memref<1x8x16x16xf32, #tpu.memory_space<vmem>>, vector<1x8x1x16xf32>,
    %c5_i32 = arith.constant 5 : i32
    %204 = arith.addi %1, %c5_i32 : i32
    %c0_i32_93 = arith.constant 0 : i32
    %205 = arith.addi %204, %c0_i32_93 : i32
    %c0_94 = arith.constant 0 : index
    %c0_95 = arith.constant 0 : index
    %206 = arith.index_cast %205 : i32 to index
    %c0_96 = arith.constant 0 : index
    %207 = vector.load %arg2[%c0_94, %c0_95, %206, %c0_96] : memref<1x4x18x18xf32, #tpu.memory_space<vmem>>, vector<1x4x1x18xf32>
    %208 = vector.shape_cast %207 : vector<1x4x1x18xf32> to vector<4x1x18xf32>
    %c5_i32_97 = arith.constant 5 : i32
    %209 = arith.addi %1, %c5_i32_97 : i32
    %c1_i32_98 = arith.constant 1 : i32
    %210 = arith.addi %209, %c1_i32_98 : i32
    %c0_99 = arith.constant 0 : index
    %c0_100 = arith.constant 0 : index
    %211 = arith.index_cast %210 : i32 to index
    %c0_101 = arith.constant 0 : index
    %212 = vector.load %arg2[%c0_99, %c0_100, %211, %c0_101] : memref<1x4x18x18xf32, #tpu.memory_space<vmem>>, vector<1x4x1x18xf32>
    %213 = vector.shape_cast %212 : vector<1x4x1x18xf32> to vector<4x1x18xf32>
    %c5_i32_102 = arith.constant 5 : i32
    %214 = arith.addi %1, %c5_i32_102 : i32
    %c2_i32_103 = arith.constant 2 : i32
    %215 = arith.addi %214, %c2_i32_103 : i32
    %c0_104 = arith.constant 0 : index
    %c0_105 = arith.constant 0 : index
    %216 = arith.index_cast %215 : i32 to index
    %c0_106 = arith.constant 0 : index
    %217 = vector.load %arg2[%c0_104, %c0_105, %216, %c0_106] : memref<1x4x18x18xf32, #tpu.memory_space<vmem>>, vector<1x4x1x18xf32>
    %218 = vector.shape_cast %217 : vector<1x4x1x18xf32> to vector<4x1x18xf32>
    %219 = vector.extract_strided_slice %208 {offsets = [0, 0, 0], sizes = [4, 1, 16], strides = [1, 1, 1]} : vector<4x1x18xf32> to vector<4x1x16xf32>
    %220 = vector.shape_cast %219 : vector<4x1x16xf32> to vector<4x16xf32>
    %221 = vector.extract_strided_slice %208 {offsets = [0, 0, 1], sizes = [4, 1, 16], strides = [1, 1, 1]} : vector<4x1x18xf32> to vector<4x1x16xf32>
    %222 = vector.shape_cast %221 : vector<4x1x16xf32> to vector<4x16xf32>
    %223 = vector.extract_strided_slice %208 {offsets = [0, 0, 2], sizes = [4, 1, 16], strides = [1, 1, 1]} : vector<4x1x18xf32> to vector<4x1x16xf32>
    %224 = vector.shape_cast %223 : vector<4x1x16xf32> to vector<4x16xf32>
    %225 = vector.extract_strided_slice %213 {offsets = [0, 0, 0], sizes = [4, 1, 16], strides = [1, 1, 1]} : vector<4x1x18xf32> to vector<4x1x16xf32>
    %226 = vector.shape_cast %225 : vector<4x1x16xf32> to vector<4x16xf32>
    %227 = vector.extract_strided_slice %213 {offsets = [0, 0, 1], sizes = [4, 1, 16], strides = [1, 1, 1]} : vector<4x1x18xf32> to vector<4x1x16xf32>
    %228 = vector.shape_cast %227 : vector<4x1x16xf32> to vector<4x16xf32>
    %229 = vector.extract_strided_slice %213 {offsets = [0, 0, 2], sizes = [4, 1, 16], strides = [1, 1, 1]} : vector<4x1x18xf32> to vector<4x1x16xf32>
    %230 = vector.shape_cast %229 : vector<4x1x16xf32> to vector<4x16xf32>
    %231 = vector.extract_strided_slice %218 {offsets = [0, 0, 0], sizes = [4, 1, 16], strides = [1, 1, 1]} : vector<4x1x18xf32> to vector<4x1x16xf32>
    %232 = vector.shape_cast %231 : vector<4x1x16xf32> to vector<4x16xf32>
    %233 = vector.extract_strided_slice %218 {offsets = [0, 0, 1], sizes = [4, 1, 16], strides = [1, 1, 1]} : vector<4x1x18xf32> to vector<4x1x16xf32>
    %234 = vector.shape_cast %233 : vector<4x1x16xf32> to vector<4x16xf32>
    %235 = vector.extract_strided_slice %218 {offsets = [0, 0, 2], sizes = [4, 1, 16], strides = [1, 1, 1]} : vector<4x1x18xf32> to vector<4x1x16xf32>
    %236 = vector.shape_cast %235 : vector<4x1x16xf32> to vector<4x16xf32>
    %237 = tpu.concatenate %220, %222, %224, %226, %228, %230, %232, %234, %236 in 0 : vector<4x16xf32>, vector<4x16xf32>, vector<4x16xf32>, vector<4x16xf32>, vector<4x16xf32>, vector<4x16xf32>, vector<4x16xf32>, vector<4x16xf32>, vector<4x16xf32> -> vector<36x16xf32>
    %cst_107 = arith.constant dense<0.000000e+00> : vector<8x16xf32>
    %238 = tpu.matmul %2, %237, %cst_107 {dimension_numbers = #tpu.dot_dimension_numbers<[1], [0], [0], [1], [0, 0, 1, 1], [], []>} : vector<8x36xf32>, vector<36x16xf32>, vector<8x16xf32> -> vector<8x16xf32>
    %239 = vector.broadcast %3 : vector<8x1xf32> to vector<8x16xf32>
    %240 = arith.addf %238, %239 : vector<8x16xf32>
    %c0_108 = arith.constant 0 : index
    %c0_109 = arith.constant 0 : index
    %c5 = arith.constant 5 : index
    %c0_110 = arith.constant 0 : index
    %241 = vector.load %arg5[%c0_108, %c0_109, %c5, %c0_110] : memref<1x8x16x16xf32, #tpu.memory_space<vmem>>, vector<1x8x1x16xf32>
    %242 = vector.shape_cast %241 : vector<1x8x1x16xf32> to vector<8x16xf32>
    %243 = vector.shape_cast %240 : vector<8x16xf32> to vector<1x8x1x16xf32>
    tpu.vector_store %arg5[%c0_108, %c0_109, %c5, %c0_110], %243 {strides = array<i32>} : memref<1x8x16x16xf32, #tpu.memory_space<vmem>>, vector<1x8x1x16xf32>,
    %c6_i32 = arith.constant 6 : i32
    %244 = arith.addi %1, %c6_i32 : i32
    %c0_i32_111 = arith.constant 0 : i32
    %245 = arith.addi %244, %c0_i32_111 : i32
    %c0_112 = arith.constant 0 : index
    %c0_113 = arith.constant 0 : index
    %246 = arith.index_cast %245 : i32 to index
    %c0_114 = arith.constant 0 : index
    %247 = vector.load %arg2[%c0_112, %c0_113, %246, %c0_114] : memref<1x4x18x18xf32, #tpu.memory_space<vmem>>, vector<1x4x1x18xf32>
    %248 = vector.shape_cast %247 : vector<1x4x1x18xf32> to vector<4x1x18xf32>
    %c6_i32_115 = arith.constant 6 : i32
    %249 = arith.addi %1, %c6_i32_115 : i32
    %c1_i32_116 = arith.constant 1 : i32
    %250 = arith.addi %249, %c1_i32_116 : i32
    %c0_117 = arith.constant 0 : index
    %c0_118 = arith.constant 0 : index
    %251 = arith.index_cast %250 : i32 to index
    %c0_119 = arith.constant 0 : index
    %252 = vector.load %arg2[%c0_117, %c0_118, %251, %c0_119] : memref<1x4x18x18xf32, #tpu.memory_space<vmem>>, vector<1x4x1x18xf32>
    %253 = vector.shape_cast %252 : vector<1x4x1x18xf32> to vector<4x1x18xf32>
    %c6_i32_120 = arith.constant 6 : i32
    %254 = arith.addi %1, %c6_i32_120 : i32
    %c2_i32_121 = arith.constant 2 : i32
    %255 = arith.addi %254, %c2_i32_121 : i32
    %c0_122 = arith.constant 0 : index
    %c0_123 = arith.constant 0 : index
    %256 = arith.index_cast %255 : i32 to index
    %c0_124 = arith.constant 0 : index
    %257 = vector.load %arg2[%c0_122, %c0_123, %256, %c0_124] : memref<1x4x18x18xf32, #tpu.memory_space<vmem>>, vector<1x4x1x18xf32>
    %258 = vector.shape_cast %257 : vector<1x4x1x18xf32> to vector<4x1x18xf32>
    %259 = vector.extract_strided_slice %248 {offsets = [0, 0, 0], sizes = [4, 1, 16], strides = [1, 1, 1]} : vector<4x1x18xf32> to vector<4x1x16xf32>
    %260 = vector.shape_cast %259 : vector<4x1x16xf32> to vector<4x16xf32>
    %261 = vector.extract_strided_slice %248 {offsets = [0, 0, 1], sizes = [4, 1, 16], strides = [1, 1, 1]} : vector<4x1x18xf32> to vector<4x1x16xf32>
    %262 = vector.shape_cast %261 : vector<4x1x16xf32> to vector<4x16xf32>
    %263 = vector.extract_strided_slice %248 {offsets = [0, 0, 2], sizes = [4, 1, 16], strides = [1, 1, 1]} : vector<4x1x18xf32> to vector<4x1x16xf32>
    %264 = vector.shape_cast %263 : vector<4x1x16xf32> to vector<4x16xf32>
    %265 = vector.extract_strided_slice %253 {offsets = [0, 0, 0], sizes = [4, 1, 16], strides = [1, 1, 1]} : vector<4x1x18xf32> to vector<4x1x16xf32>
    %266 = vector.shape_cast %265 : vector<4x1x16xf32> to vector<4x16xf32>
    %267 = vector.extract_strided_slice %253 {offsets = [0, 0, 1], sizes = [4, 1, 16], strides = [1, 1, 1]} : vector<4x1x18xf32> to vector<4x1x16xf32>
    %268 = vector.shape_cast %267 : vector<4x1x16xf32> to vector<4x16xf32>
    %269 = vector.extract_strided_slice %253 {offsets = [0, 0, 2], sizes = [4, 1, 16], strides = [1, 1, 1]} : vector<4x1x18xf32> to vector<4x1x16xf32>
    %270 = vector.shape_cast %269 : vector<4x1x16xf32> to vector<4x16xf32>
    %271 = vector.extract_strided_slice %258 {offsets = [0, 0, 0], sizes = [4, 1, 16], strides = [1, 1, 1]} : vector<4x1x18xf32> to vector<4x1x16xf32>
    %272 = vector.shape_cast %271 : vector<4x1x16xf32> to vector<4x16xf32>
    %273 = vector.extract_strided_slice %258 {offsets = [0, 0, 1], sizes = [4, 1, 16], strides = [1, 1, 1]} : vector<4x1x18xf32> to vector<4x1x16xf32>
    %274 = vector.shape_cast %273 : vector<4x1x16xf32> to vector<4x16xf32>
    %275 = vector.extract_strided_slice %258 {offsets = [0, 0, 2], sizes = [4, 1, 16], strides = [1, 1, 1]} : vector<4x1x18xf32> to vector<4x1x16xf32>
    %276 = vector.shape_cast %275 : vector<4x1x16xf32> to vector<4x16xf32>
    %277 = tpu.concatenate %260, %262, %264, %266, %268, %270, %272, %274, %276 in 0 : vector<4x16xf32>, vector<4x16xf32>, vector<4x16xf32>, vector<4x16xf32>, vector<4x16xf32>, vector<4x16xf32>, vector<4x16xf32>, vector<4x16xf32>, vector<4x16xf32> -> vector<36x16xf32>
    %cst_125 = arith.constant dense<0.000000e+00> : vector<8x16xf32>
    %278 = tpu.matmul %2, %277, %cst_125 {dimension_numbers = #tpu.dot_dimension_numbers<[1], [0], [0], [1], [0, 0, 1, 1], [], []>} : vector<8x36xf32>, vector<36x16xf32>, vector<8x16xf32> -> vector<8x16xf32>
    %279 = vector.broadcast %3 : vector<8x1xf32> to vector<8x16xf32>
    %280 = arith.addf %278, %279 : vector<8x16xf32>
    %c0_126 = arith.constant 0 : index
    %c0_127 = arith.constant 0 : index
    %c6 = arith.constant 6 : index
    %c0_128 = arith.constant 0 : index
    %281 = vector.load %arg5[%c0_126, %c0_127, %c6, %c0_128] : memref<1x8x16x16xf32, #tpu.memory_space<vmem>>, vector<1x8x1x16xf32>
    %282 = vector.shape_cast %281 : vector<1x8x1x16xf32> to vector<8x16xf32>
    %283 = vector.shape_cast %280 : vector<8x16xf32> to vector<1x8x1x16xf32>
    tpu.vector_store %arg5[%c0_126, %c0_127, %c6, %c0_128], %283 {strides = array<i32>} : memref<1x8x16x16xf32, #tpu.memory_space<vmem>>, vector<1x8x1x16xf32>,
    %c7_i32 = arith.constant 7 : i32
    %284 = arith.addi %1, %c7_i32 : i32
    %c0_i32_129 = arith.constant 0 : i32
    %285 = arith.addi %284, %c0_i32_129 : i32
    %c0_130 = arith.constant 0 : index
    %c0_131 = arith.constant 0 : index
    %286 = arith.index_cast %285 : i32 to index
    %c0_132 = arith.constant 0 : index
    %287 = vector.load %arg2[%c0_130, %c0_131, %286, %c0_132] : memref<1x4x18x18xf32, #tpu.memory_space<vmem>>, vector<1x4x1x18xf32>
    %288 = vector.shape_cast %287 : vector<1x4x1x18xf32> to vector<4x1x18xf32>
    %c7_i32_133 = arith.constant 7 : i32
    %289 = arith.addi %1, %c7_i32_133 : i32
    %c1_i32_134 = arith.constant 1 : i32
    %290 = arith.addi %289, %c1_i32_134 : i32
    %c0_135 = arith.constant 0 : index
    %c0_136 = arith.constant 0 : index
    %291 = arith.index_cast %290 : i32 to index
    %c0_137 = arith.constant 0 : index
    %292 = vector.load %arg2[%c0_135, %c0_136, %291, %c0_137] : memref<1x4x18x18xf32, #tpu.memory_space<vmem>>, vector<1x4x1x18xf32>
    %293 = vector.shape_cast %292 : vector<1x4x1x18xf32> to vector<4x1x18xf32>
    %c7_i32_138 = arith.constant 7 : i32
    %294 = arith.addi %1, %c7_i32_138 : i32
    %c2_i32_139 = arith.constant 2 : i32
    %295 = arith.addi %294, %c2_i32_139 : i32
    %c0_140 = arith.constant 0 : index
    %c0_141 = arith.constant 0 : index
    %296 = arith.index_cast %295 : i32 to index
    %c0_142 = arith.constant 0 : index
    %297 = vector.load %arg2[%c0_140, %c0_141, %296, %c0_142] : memref<1x4x18x18xf32, #tpu.memory_space<vmem>>, vector<1x4x1x18xf32>
    %298 = vector.shape_cast %297 : vector<1x4x1x18xf32> to vector<4x1x18xf32>
    %299 = vector.extract_strided_slice %288 {offsets = [0, 0, 0], sizes = [4, 1, 16], strides = [1, 1, 1]} : vector<4x1x18xf32> to vector<4x1x16xf32>
    %300 = vector.shape_cast %299 : vector<4x1x16xf32> to vector<4x16xf32>
    %301 = vector.extract_strided_slice %288 {offsets = [0, 0, 1], sizes = [4, 1, 16], strides = [1, 1, 1]} : vector<4x1x18xf32> to vector<4x1x16xf32>
    %302 = vector.shape_cast %301 : vector<4x1x16xf32> to vector<4x16xf32>
    %303 = vector.extract_strided_slice %288 {offsets = [0, 0, 2], sizes = [4, 1, 16], strides = [1, 1, 1]} : vector<4x1x18xf32> to vector<4x1x16xf32>
    %304 = vector.shape_cast %303 : vector<4x1x16xf32> to vector<4x16xf32>
    %305 = vector.extract_strided_slice %293 {offsets = [0, 0, 0], sizes = [4, 1, 16], strides = [1, 1, 1]} : vector<4x1x18xf32> to vector<4x1x16xf32>
    %306 = vector.shape_cast %305 : vector<4x1x16xf32> to vector<4x16xf32>
    %307 = vector.extract_strided_slice %293 {offsets = [0, 0, 1], sizes = [4, 1, 16], strides = [1, 1, 1]} : vector<4x1x18xf32> to vector<4x1x16xf32>
    %308 = vector.shape_cast %307 : vector<4x1x16xf32> to vector<4x16xf32>
    %309 = vector.extract_strided_slice %293 {offsets = [0, 0, 2], sizes = [4, 1, 16], strides = [1, 1, 1]} : vector<4x1x18xf32> to vector<4x1x16xf32>
    %310 = vector.shape_cast %309 : vector<4x1x16xf32> to vector<4x16xf32>
    %311 = vector.extract_strided_slice %298 {offsets = [0, 0, 0], sizes = [4, 1, 16], strides = [1, 1, 1]} : vector<4x1x18xf32> to vector<4x1x16xf32>
    %312 = vector.shape_cast %311 : vector<4x1x16xf32> to vector<4x16xf32>
    %313 = vector.extract_strided_slice %298 {offsets = [0, 0, 1], sizes = [4, 1, 16], strides = [1, 1, 1]} : vector<4x1x18xf32> to vector<4x1x16xf32>
    %314 = vector.shape_cast %313 : vector<4x1x16xf32> to vector<4x16xf32>
    %315 = vector.extract_strided_slice %298 {offsets = [0, 0, 2], sizes = [4, 1, 16], strides = [1, 1, 1]} : vector<4x1x18xf32> to vector<4x1x16xf32>
    %316 = vector.shape_cast %315 : vector<4x1x16xf32> to vector<4x16xf32>
    %317 = tpu.concatenate %300, %302, %304, %306, %308, %310, %312, %314, %316 in 0 : vector<4x16xf32>, vector<4x16xf32>, vector<4x16xf32>, vector<4x16xf32>, vector<4x16xf32>, vector<4x16xf32>, vector<4x16xf32>, vector<4x16xf32>, vector<4x16xf32> -> vector<36x16xf32>
    %cst_143 = arith.constant dense<0.000000e+00> : vector<8x16xf32>
    %318 = tpu.matmul %2, %317, %cst_143 {dimension_numbers = #tpu.dot_dimension_numbers<[1], [0], [0], [1], [0, 0, 1, 1], [], []>} : vector<8x36xf32>, vector<36x16xf32>, vector<8x16xf32> -> vector<8x16xf32>
    %319 = vector.broadcast %3 : vector<8x1xf32> to vector<8x16xf32>
    %320 = arith.addf %318, %319 : vector<8x16xf32>
    %c0_144 = arith.constant 0 : index
    %c0_145 = arith.constant 0 : index
    %c7 = arith.constant 7 : index
    %c0_146 = arith.constant 0 : index
    %321 = vector.load %arg5[%c0_144, %c0_145, %c7, %c0_146] : memref<1x8x16x16xf32, #tpu.memory_space<vmem>>, vector<1x8x1x16xf32>
    %322 = vector.shape_cast %321 : vector<1x8x1x16xf32> to vector<8x16xf32>
    %323 = vector.shape_cast %320 : vector<8x16xf32> to vector<1x8x1x16xf32>
    tpu.vector_store %arg5[%c0_144, %c0_145, %c7, %c0_146], %323 {strides = array<i32>} : memref<1x8x16x16xf32, #tpu.memory_space<vmem>>, vector<1x8x1x16xf32>,
    %c8_i32 = arith.constant 8 : i32
    %324 = arith.addi %1, %c8_i32 : i32
    %c0_i32_147 = arith.constant 0 : i32
    %325 = arith.addi %324, %c0_i32_147 : i32
    %c0_148 = arith.constant 0 : index
    %c0_149 = arith.constant 0 : index
    %326 = arith.index_cast %325 : i32 to index
    %c0_150 = arith.constant 0 : index
    %327 = vector.load %arg2[%c0_148, %c0_149, %326, %c0_150] : memref<1x4x18x18xf32, #tpu.memory_space<vmem>>, vector<1x4x1x18xf32>
    %328 = vector.shape_cast %327 : vector<1x4x1x18xf32> to vector<4x1x18xf32>
    %c8_i32_151 = arith.constant 8 : i32
    %329 = arith.addi %1, %c8_i32_151 : i32
    %c1_i32_152 = arith.constant 1 : i32
    %330 = arith.addi %329, %c1_i32_152 : i32
    %c0_153 = arith.constant 0 : index
    %c0_154 = arith.constant 0 : index
    %331 = arith.index_cast %330 : i32 to index
    %c0_155 = arith.constant 0 : index
    %332 = vector.load %arg2[%c0_153, %c0_154, %331, %c0_155] : memref<1x4x18x18xf32, #tpu.memory_space<vmem>>, vector<1x4x1x18xf32>
    %333 = vector.shape_cast %332 : vector<1x4x1x18xf32> to vector<4x1x18xf32>
    %c8_i32_156 = arith.constant 8 : i32
    %334 = arith.addi %1, %c8_i32_156 : i32
    %c2_i32_157 = arith.constant 2 : i32
    %335 = arith.addi %334, %c2_i32_157 : i32
    %c0_158 = arith.constant 0 : index
    %c0_159 = arith.constant 0 : index
    %336 = arith.index_cast %335 : i32 to index
    %c0_160 = arith.constant 0 : index
    %337 = vector.load %arg2[%c0_158, %c0_159, %336, %c0_160] : memref<1x4x18x18xf32, #tpu.memory_space<vmem>>, vector<1x4x1x18xf32>
    %338 = vector.shape_cast %337 : vector<1x4x1x18xf32> to vector<4x1x18xf32>
    %339 = vector.extract_strided_slice %328 {offsets = [0, 0, 0], sizes = [4, 1, 16], strides = [1, 1, 1]} : vector<4x1x18xf32> to vector<4x1x16xf32>
    %340 = vector.shape_cast %339 : vector<4x1x16xf32> to vector<4x16xf32>
    %341 = vector.extract_strided_slice %328 {offsets = [0, 0, 1], sizes = [4, 1, 16], strides = [1, 1, 1]} : vector<4x1x18xf32> to vector<4x1x16xf32>
    %342 = vector.shape_cast %341 : vector<4x1x16xf32> to vector<4x16xf32>
    %343 = vector.extract_strided_slice %328 {offsets = [0, 0, 2], sizes = [4, 1, 16], strides = [1, 1, 1]} : vector<4x1x18xf32> to vector<4x1x16xf32>
    %344 = vector.shape_cast %343 : vector<4x1x16xf32> to vector<4x16xf32>
    %345 = vector.extract_strided_slice %333 {offsets = [0, 0, 0], sizes = [4, 1, 16], strides = [1, 1, 1]} : vector<4x1x18xf32> to vector<4x1x16xf32>
    %346 = vector.shape_cast %345 : vector<4x1x16xf32> to vector<4x16xf32>
    %347 = vector.extract_strided_slice %333 {offsets = [0, 0, 1], sizes = [4, 1, 16], strides = [1, 1, 1]} : vector<4x1x18xf32> to vector<4x1x16xf32>
    %348 = vector.shape_cast %347 : vector<4x1x16xf32> to vector<4x16xf32>
    %349 = vector.extract_strided_slice %333 {offsets = [0, 0, 2], sizes = [4, 1, 16], strides = [1, 1, 1]} : vector<4x1x18xf32> to vector<4x1x16xf32>
    %350 = vector.shape_cast %349 : vector<4x1x16xf32> to vector<4x16xf32>
    %351 = vector.extract_strided_slice %338 {offsets = [0, 0, 0], sizes = [4, 1, 16], strides = [1, 1, 1]} : vector<4x1x18xf32> to vector<4x1x16xf32>
    %352 = vector.shape_cast %351 : vector<4x1x16xf32> to vector<4x16xf32>
    %353 = vector.extract_strided_slice %338 {offsets = [0, 0, 1], sizes = [4, 1, 16], strides = [1, 1, 1]} : vector<4x1x18xf32> to vector<4x1x16xf32>
    %354 = vector.shape_cast %353 : vector<4x1x16xf32> to vector<4x16xf32>
    %355 = vector.extract_strided_slice %338 {offsets = [0, 0, 2], sizes = [4, 1, 16], strides = [1, 1, 1]} : vector<4x1x18xf32> to vector<4x1x16xf32>
    %356 = vector.shape_cast %355 : vector<4x1x16xf32> to vector<4x16xf32>
    %357 = tpu.concatenate %340, %342, %344, %346, %348, %350, %352, %354, %356 in 0 : vector<4x16xf32>, vector<4x16xf32>, vector<4x16xf32>, vector<4x16xf32>, vector<4x16xf32>, vector<4x16xf32>, vector<4x16xf32>, vector<4x16xf32>, vector<4x16xf32> -> vector<36x16xf32>
    %cst_161 = arith.constant dense<0.000000e+00> : vector<8x16xf32>
    %358 = tpu.matmul %2, %357, %cst_161 {dimension_numbers = #tpu.dot_dimension_numbers<[1], [0], [0], [1], [0, 0, 1, 1], [], []>} : vector<8x36xf32>, vector<36x16xf32>, vector<8x16xf32> -> vector<8x16xf32>
    %359 = vector.broadcast %3 : vector<8x1xf32> to vector<8x16xf32>
    %360 = arith.addf %358, %359 : vector<8x16xf32>
    %c0_162 = arith.constant 0 : index
    %c0_163 = arith.constant 0 : index
    %c8 = arith.constant 8 : index
    %c0_164 = arith.constant 0 : index
    %361 = vector.load %arg5[%c0_162, %c0_163, %c8, %c0_164] : memref<1x8x16x16xf32, #tpu.memory_space<vmem>>, vector<1x8x1x16xf32>
    %362 = vector.shape_cast %361 : vector<1x8x1x16xf32> to vector<8x16xf32>
    %363 = vector.shape_cast %360 : vector<8x16xf32> to vector<1x8x1x16xf32>
    tpu.vector_store %arg5[%c0_162, %c0_163, %c8, %c0_164], %363 {strides = array<i32>} : memref<1x8x16x16xf32, #tpu.memory_space<vmem>>, vector<1x8x1x16xf32>,
    %c9_i32 = arith.constant 9 : i32
    %364 = arith.addi %1, %c9_i32 : i32
    %c0_i32_165 = arith.constant 0 : i32
    %365 = arith.addi %364, %c0_i32_165 : i32
    %c0_166 = arith.constant 0 : index
    %c0_167 = arith.constant 0 : index
    %366 = arith.index_cast %365 : i32 to index
    %c0_168 = arith.constant 0 : index
    %367 = vector.load %arg2[%c0_166, %c0_167, %366, %c0_168] : memref<1x4x18x18xf32, #tpu.memory_space<vmem>>, vector<1x4x1x18xf32>
    %368 = vector.shape_cast %367 : vector<1x4x1x18xf32> to vector<4x1x18xf32>
    %c9_i32_169 = arith.constant 9 : i32
    %369 = arith.addi %1, %c9_i32_169 : i32
    %c1_i32_170 = arith.constant 1 : i32
    %370 = arith.addi %369, %c1_i32_170 : i32
    %c0_171 = arith.constant 0 : index
    %c0_172 = arith.constant 0 : index
    %371 = arith.index_cast %370 : i32 to index
    %c0_173 = arith.constant 0 : index
    %372 = vector.load %arg2[%c0_171, %c0_172, %371, %c0_173] : memref<1x4x18x18xf32, #tpu.memory_space<vmem>>, vector<1x4x1x18xf32>
    %373 = vector.shape_cast %372 : vector<1x4x1x18xf32> to vector<4x1x18xf32>
    %c9_i32_174 = arith.constant 9 : i32
    %374 = arith.addi %1, %c9_i32_174 : i32
    %c2_i32_175 = arith.constant 2 : i32
    %375 = arith.addi %374, %c2_i32_175 : i32
    %c0_176 = arith.constant 0 : index
    %c0_177 = arith.constant 0 : index
    %376 = arith.index_cast %375 : i32 to index
    %c0_178 = arith.constant 0 : index
    %377 = vector.load %arg2[%c0_176, %c0_177, %376, %c0_178] : memref<1x4x18x18xf32, #tpu.memory_space<vmem>>, vector<1x4x1x18xf32>
    %378 = vector.shape_cast %377 : vector<1x4x1x18xf32> to vector<4x1x18xf32>
    %379 = vector.extract_strided_slice %368 {offsets = [0, 0, 0], sizes = [4, 1, 16], strides = [1, 1, 1]} : vector<4x1x18xf32> to vector<4x1x16xf32>
    %380 = vector.shape_cast %379 : vector<4x1x16xf32> to vector<4x16xf32>
    %381 = vector.extract_strided_slice %368 {offsets = [0, 0, 1], sizes = [4, 1, 16], strides = [1, 1, 1]} : vector<4x1x18xf32> to vector<4x1x16xf32>
    %382 = vector.shape_cast %381 : vector<4x1x16xf32> to vector<4x16xf32>
    %383 = vector.extract_strided_slice %368 {offsets = [0, 0, 2], sizes = [4, 1, 16], strides = [1, 1, 1]} : vector<4x1x18xf32> to vector<4x1x16xf32>
    %384 = vector.shape_cast %383 : vector<4x1x16xf32> to vector<4x16xf32>
    %385 = vector.extract_strided_slice %373 {offsets = [0, 0, 0], sizes = [4, 1, 16], strides = [1, 1, 1]} : vector<4x1x18xf32> to vector<4x1x16xf32>
    %386 = vector.shape_cast %385 : vector<4x1x16xf32> to vector<4x16xf32>
    %387 = vector.extract_strided_slice %373 {offsets = [0, 0, 1], sizes = [4, 1, 16], strides = [1, 1, 1]} : vector<4x1x18xf32> to vector<4x1x16xf32>
    %388 = vector.shape_cast %387 : vector<4x1x16xf32> to vector<4x16xf32>
    %389 = vector.extract_strided_slice %373 {offsets = [0, 0, 2], sizes = [4, 1, 16], strides = [1, 1, 1]} : vector<4x1x18xf32> to vector<4x1x16xf32>
    %390 = vector.shape_cast %389 : vector<4x1x16xf32> to vector<4x16xf32>
    %391 = vector.extract_strided_slice %378 {offsets = [0, 0, 0], sizes = [4, 1, 16], strides = [1, 1, 1]} : vector<4x1x18xf32> to vector<4x1x16xf32>
    %392 = vector.shape_cast %391 : vector<4x1x16xf32> to vector<4x16xf32>
    %393 = vector.extract_strided_slice %378 {offsets = [0, 0, 1], sizes = [4, 1, 16], strides = [1, 1, 1]} : vector<4x1x18xf32> to vector<4x1x16xf32>
    %394 = vector.shape_cast %393 : vector<4x1x16xf32> to vector<4x16xf32>
    %395 = vector.extract_strided_slice %378 {offsets = [0, 0, 2], sizes = [4, 1, 16], strides = [1, 1, 1]} : vector<4x1x18xf32> to vector<4x1x16xf32>
    %396 = vector.shape_cast %395 : vector<4x1x16xf32> to vector<4x16xf32>
    %397 = tpu.concatenate %380, %382, %384, %386, %388, %390, %392, %394, %396 in 0 : vector<4x16xf32>, vector<4x16xf32>, vector<4x16xf32>, vector<4x16xf32>, vector<4x16xf32>, vector<4x16xf32>, vector<4x16xf32>, vector<4x16xf32>, vector<4x16xf32> -> vector<36x16xf32>
    %cst_179 = arith.constant dense<0.000000e+00> : vector<8x16xf32>
    %398 = tpu.matmul %2, %397, %cst_179 {dimension_numbers = #tpu.dot_dimension_numbers<[1], [0], [0], [1], [0, 0, 1, 1], [], []>} : vector<8x36xf32>, vector<36x16xf32>, vector<8x16xf32> -> vector<8x16xf32>
    %399 = vector.broadcast %3 : vector<8x1xf32> to vector<8x16xf32>
    %400 = arith.addf %398, %399 : vector<8x16xf32>
    %c0_180 = arith.constant 0 : index
    %c0_181 = arith.constant 0 : index
    %c9 = arith.constant 9 : index
    %c0_182 = arith.constant 0 : index
    %401 = vector.load %arg5[%c0_180, %c0_181, %c9, %c0_182] : memref<1x8x16x16xf32, #tpu.memory_space<vmem>>, vector<1x8x1x16xf32>
    %402 = vector.shape_cast %401 : vector<1x8x1x16xf32> to vector<8x16xf32>
    %403 = vector.shape_cast %400 : vector<8x16xf32> to vector<1x8x1x16xf32>
    tpu.vector_store %arg5[%c0_180, %c0_181, %c9, %c0_182], %403 {strides = array<i32>} : memref<1x8x16x16xf32, #tpu.memory_space<vmem>>, vector<1x8x1x16xf32>,
    %c10_i32 = arith.constant 10 : i32
    %404 = arith.addi %1, %c10_i32 : i32
    %c0_i32_183 = arith.constant 0 : i32
    %405 = arith.addi %404, %c0_i32_183 : i32
    %c0_184 = arith.constant 0 : index
    %c0_185 = arith.constant 0 : index
    %406 = arith.index_cast %405 : i32 to index
    %c0_186 = arith.constant 0 : index
    %407 = vector.load %arg2[%c0_184, %c0_185, %406, %c0_186] : memref<1x4x18x18xf32, #tpu.memory_space<vmem>>, vector<1x4x1x18xf32>
    %408 = vector.shape_cast %407 : vector<1x4x1x18xf32> to vector<4x1x18xf32>
    %c10_i32_187 = arith.constant 10 : i32
    %409 = arith.addi %1, %c10_i32_187 : i32
    %c1_i32_188 = arith.constant 1 : i32
    %410 = arith.addi %409, %c1_i32_188 : i32
    %c0_189 = arith.constant 0 : index
    %c0_190 = arith.constant 0 : index
    %411 = arith.index_cast %410 : i32 to index
    %c0_191 = arith.constant 0 : index
    %412 = vector.load %arg2[%c0_189, %c0_190, %411, %c0_191] : memref<1x4x18x18xf32, #tpu.memory_space<vmem>>, vector<1x4x1x18xf32>
    %413 = vector.shape_cast %412 : vector<1x4x1x18xf32> to vector<4x1x18xf32>
    %c10_i32_192 = arith.constant 10 : i32
    %414 = arith.addi %1, %c10_i32_192 : i32
    %c2_i32_193 = arith.constant 2 : i32
    %415 = arith.addi %414, %c2_i32_193 : i32
    %c0_194 = arith.constant 0 : index
    %c0_195 = arith.constant 0 : index
    %416 = arith.index_cast %415 : i32 to index
    %c0_196 = arith.constant 0 : index
    %417 = vector.load %arg2[%c0_194, %c0_195, %416, %c0_196] : memref<1x4x18x18xf32, #tpu.memory_space<vmem>>, vector<1x4x1x18xf32>
    %418 = vector.shape_cast %417 : vector<1x4x1x18xf32> to vector<4x1x18xf32>
    %419 = vector.extract_strided_slice %408 {offsets = [0, 0, 0], sizes = [4, 1, 16], strides = [1, 1, 1]} : vector<4x1x18xf32> to vector<4x1x16xf32>
    %420 = vector.shape_cast %419 : vector<4x1x16xf32> to vector<4x16xf32>
    %421 = vector.extract_strided_slice %408 {offsets = [0, 0, 1], sizes = [4, 1, 16], strides = [1, 1, 1]} : vector<4x1x18xf32> to vector<4x1x16xf32>
    %422 = vector.shape_cast %421 : vector<4x1x16xf32> to vector<4x16xf32>
    %423 = vector.extract_strided_slice %408 {offsets = [0, 0, 2], sizes = [4, 1, 16], strides = [1, 1, 1]} : vector<4x1x18xf32> to vector<4x1x16xf32>
    %424 = vector.shape_cast %423 : vector<4x1x16xf32> to vector<4x16xf32>
    %425 = vector.extract_strided_slice %413 {offsets = [0, 0, 0], sizes = [4, 1, 16], strides = [1, 1, 1]} : vector<4x1x18xf32> to vector<4x1x16xf32>
    %426 = vector.shape_cast %425 : vector<4x1x16xf32> to vector<4x16xf32>
    %427 = vector.extract_strided_slice %413 {offsets = [0, 0, 1], sizes = [4, 1, 16], strides = [1, 1, 1]} : vector<4x1x18xf32> to vector<4x1x16xf32>
    %428 = vector.shape_cast %427 : vector<4x1x16xf32> to vector<4x16xf32>
    %429 = vector.extract_strided_slice %413 {offsets = [0, 0, 2], sizes = [4, 1, 16], strides = [1, 1, 1]} : vector<4x1x18xf32> to vector<4x1x16xf32>
    %430 = vector.shape_cast %429 : vector<4x1x16xf32> to vector<4x16xf32>
    %431 = vector.extract_strided_slice %418 {offsets = [0, 0, 0], sizes = [4, 1, 16], strides = [1, 1, 1]} : vector<4x1x18xf32> to vector<4x1x16xf32>
    %432 = vector.shape_cast %431 : vector<4x1x16xf32> to vector<4x16xf32>
    %433 = vector.extract_strided_slice %418 {offsets = [0, 0, 1], sizes = [4, 1, 16], strides = [1, 1, 1]} : vector<4x1x18xf32> to vector<4x1x16xf32>
    %434 = vector.shape_cast %433 : vector<4x1x16xf32> to vector<4x16xf32>
    %435 = vector.extract_strided_slice %418 {offsets = [0, 0, 2], sizes = [4, 1, 16], strides = [1, 1, 1]} : vector<4x1x18xf32> to vector<4x1x16xf32>
    %436 = vector.shape_cast %435 : vector<4x1x16xf32> to vector<4x16xf32>
    %437 = tpu.concatenate %420, %422, %424, %426, %428, %430, %432, %434, %436 in 0 : vector<4x16xf32>, vector<4x16xf32>, vector<4x16xf32>, vector<4x16xf32>, vector<4x16xf32>, vector<4x16xf32>, vector<4x16xf32>, vector<4x16xf32>, vector<4x16xf32> -> vector<36x16xf32>
    %cst_197 = arith.constant dense<0.000000e+00> : vector<8x16xf32>
    %438 = tpu.matmul %2, %437, %cst_197 {dimension_numbers = #tpu.dot_dimension_numbers<[1], [0], [0], [1], [0, 0, 1, 1], [], []>} : vector<8x36xf32>, vector<36x16xf32>, vector<8x16xf32> -> vector<8x16xf32>
    %439 = vector.broadcast %3 : vector<8x1xf32> to vector<8x16xf32>
    %440 = arith.addf %438, %439 : vector<8x16xf32>
    %c0_198 = arith.constant 0 : index
    %c0_199 = arith.constant 0 : index
    %c10 = arith.constant 10 : index
    %c0_200 = arith.constant 0 : index
    %441 = vector.load %arg5[%c0_198, %c0_199, %c10, %c0_200] : memref<1x8x16x16xf32, #tpu.memory_space<vmem>>, vector<1x8x1x16xf32>
    %442 = vector.shape_cast %441 : vector<1x8x1x16xf32> to vector<8x16xf32>
    %443 = vector.shape_cast %440 : vector<8x16xf32> to vector<1x8x1x16xf32>
    tpu.vector_store %arg5[%c0_198, %c0_199, %c10, %c0_200], %443 {strides = array<i32>} : memref<1x8x16x16xf32, #tpu.memory_space<vmem>>, vector<1x8x1x16xf32>,
    %c11_i32 = arith.constant 11 : i32
    %444 = arith.addi %1, %c11_i32 : i32
    %c0_i32_201 = arith.constant 0 : i32
    %445 = arith.addi %444, %c0_i32_201 : i32
    %c0_202 = arith.constant 0 : index
    %c0_203 = arith.constant 0 : index
    %446 = arith.index_cast %445 : i32 to index
    %c0_204 = arith.constant 0 : index
    %447 = vector.load %arg2[%c0_202, %c0_203, %446, %c0_204] : memref<1x4x18x18xf32, #tpu.memory_space<vmem>>, vector<1x4x1x18xf32>
    %448 = vector.shape_cast %447 : vector<1x4x1x18xf32> to vector<4x1x18xf32>
    %c11_i32_205 = arith.constant 11 : i32
    %449 = arith.addi %1, %c11_i32_205 : i32
    %c1_i32_206 = arith.constant 1 : i32
    %450 = arith.addi %449, %c1_i32_206 : i32
    %c0_207 = arith.constant 0 : index
    %c0_208 = arith.constant 0 : index
    %451 = arith.index_cast %450 : i32 to index
    %c0_209 = arith.constant 0 : index
    %452 = vector.load %arg2[%c0_207, %c0_208, %451, %c0_209] : memref<1x4x18x18xf32, #tpu.memory_space<vmem>>, vector<1x4x1x18xf32>
    %453 = vector.shape_cast %452 : vector<1x4x1x18xf32> to vector<4x1x18xf32>
    %c11_i32_210 = arith.constant 11 : i32
    %454 = arith.addi %1, %c11_i32_210 : i32
    %c2_i32_211 = arith.constant 2 : i32
    %455 = arith.addi %454, %c2_i32_211 : i32
    %c0_212 = arith.constant 0 : index
    %c0_213 = arith.constant 0 : index
    %456 = arith.index_cast %455 : i32 to index
    %c0_214 = arith.constant 0 : index
    %457 = vector.load %arg2[%c0_212, %c0_213, %456, %c0_214] : memref<1x4x18x18xf32, #tpu.memory_space<vmem>>, vector<1x4x1x18xf32>
    %458 = vector.shape_cast %457 : vector<1x4x1x18xf32> to vector<4x1x18xf32>
    %459 = vector.extract_strided_slice %448 {offsets = [0, 0, 0], sizes = [4, 1, 16], strides = [1, 1, 1]} : vector<4x1x18xf32> to vector<4x1x16xf32>
    %460 = vector.shape_cast %459 : vector<4x1x16xf32> to vector<4x16xf32>
    %461 = vector.extract_strided_slice %448 {offsets = [0, 0, 1], sizes = [4, 1, 16], strides = [1, 1, 1]} : vector<4x1x18xf32> to vector<4x1x16xf32>
    %462 = vector.shape_cast %461 : vector<4x1x16xf32> to vector<4x16xf32>
    %463 = vector.extract_strided_slice %448 {offsets = [0, 0, 2], sizes = [4, 1, 16], strides = [1, 1, 1]} : vector<4x1x18xf32> to vector<4x1x16xf32>
    %464 = vector.shape_cast %463 : vector<4x1x16xf32> to vector<4x16xf32>
    %465 = vector.extract_strided_slice %453 {offsets = [0, 0, 0], sizes = [4, 1, 16], strides = [1, 1, 1]} : vector<4x1x18xf32> to vector<4x1x16xf32>
    %466 = vector.shape_cast %465 : vector<4x1x16xf32> to vector<4x16xf32>
    %467 = vector.extract_strided_slice %453 {offsets = [0, 0, 1], sizes = [4, 1, 16], strides = [1, 1, 1]} : vector<4x1x18xf32> to vector<4x1x16xf32>
    %468 = vector.shape_cast %467 : vector<4x1x16xf32> to vector<4x16xf32>
    %469 = vector.extract_strided_slice %453 {offsets = [0, 0, 2], sizes = [4, 1, 16], strides = [1, 1, 1]} : vector<4x1x18xf32> to vector<4x1x16xf32>
    %470 = vector.shape_cast %469 : vector<4x1x16xf32> to vector<4x16xf32>
    %471 = vector.extract_strided_slice %458 {offsets = [0, 0, 0], sizes = [4, 1, 16], strides = [1, 1, 1]} : vector<4x1x18xf32> to vector<4x1x16xf32>
    %472 = vector.shape_cast %471 : vector<4x1x16xf32> to vector<4x16xf32>
    %473 = vector.extract_strided_slice %458 {offsets = [0, 0, 1], sizes = [4, 1, 16], strides = [1, 1, 1]} : vector<4x1x18xf32> to vector<4x1x16xf32>
    %474 = vector.shape_cast %473 : vector<4x1x16xf32> to vector<4x16xf32>
    %475 = vector.extract_strided_slice %458 {offsets = [0, 0, 2], sizes = [4, 1, 16], strides = [1, 1, 1]} : vector<4x1x18xf32> to vector<4x1x16xf32>
    %476 = vector.shape_cast %475 : vector<4x1x16xf32> to vector<4x16xf32>
    %477 = tpu.concatenate %460, %462, %464, %466, %468, %470, %472, %474, %476 in 0 : vector<4x16xf32>, vector<4x16xf32>, vector<4x16xf32>, vector<4x16xf32>, vector<4x16xf32>, vector<4x16xf32>, vector<4x16xf32>, vector<4x16xf32>, vector<4x16xf32> -> vector<36x16xf32>
    %cst_215 = arith.constant dense<0.000000e+00> : vector<8x16xf32>
    %478 = tpu.matmul %2, %477, %cst_215 {dimension_numbers = #tpu.dot_dimension_numbers<[1], [0], [0], [1], [0, 0, 1, 1], [], []>} : vector<8x36xf32>, vector<36x16xf32>, vector<8x16xf32> -> vector<8x16xf32>
    %479 = vector.broadcast %3 : vector<8x1xf32> to vector<8x16xf32>
    %480 = arith.addf %478, %479 : vector<8x16xf32>
    %c0_216 = arith.constant 0 : index
    %c0_217 = arith.constant 0 : index
    %c11 = arith.constant 11 : index
    %c0_218 = arith.constant 0 : index
    %481 = vector.load %arg5[%c0_216, %c0_217, %c11, %c0_218] : memref<1x8x16x16xf32, #tpu.memory_space<vmem>>, vector<1x8x1x16xf32>
    %482 = vector.shape_cast %481 : vector<1x8x1x16xf32> to vector<8x16xf32>
    %483 = vector.shape_cast %480 : vector<8x16xf32> to vector<1x8x1x16xf32>
    tpu.vector_store %arg5[%c0_216, %c0_217, %c11, %c0_218], %483 {strides = array<i32>} : memref<1x8x16x16xf32, #tpu.memory_space<vmem>>, vector<1x8x1x16xf32>,
    %c12_i32 = arith.constant 12 : i32
    %484 = arith.addi %1, %c12_i32 : i32
    %c0_i32_219 = arith.constant 0 : i32
    %485 = arith.addi %484, %c0_i32_219 : i32
    %c0_220 = arith.constant 0 : index
    %c0_221 = arith.constant 0 : index
    %486 = arith.index_cast %485 : i32 to index
    %c0_222 = arith.constant 0 : index
    %487 = vector.load %arg2[%c0_220, %c0_221, %486, %c0_222] : memref<1x4x18x18xf32, #tpu.memory_space<vmem>>, vector<1x4x1x18xf32>
    %488 = vector.shape_cast %487 : vector<1x4x1x18xf32> to vector<4x1x18xf32>
    %c12_i32_223 = arith.constant 12 : i32
    %489 = arith.addi %1, %c12_i32_223 : i32
    %c1_i32_224 = arith.constant 1 : i32
    %490 = arith.addi %489, %c1_i32_224 : i32
    %c0_225 = arith.constant 0 : index
    %c0_226 = arith.constant 0 : index
    %491 = arith.index_cast %490 : i32 to index
    %c0_227 = arith.constant 0 : index
    %492 = vector.load %arg2[%c0_225, %c0_226, %491, %c0_227] : memref<1x4x18x18xf32, #tpu.memory_space<vmem>>, vector<1x4x1x18xf32>
    %493 = vector.shape_cast %492 : vector<1x4x1x18xf32> to vector<4x1x18xf32>
    %c12_i32_228 = arith.constant 12 : i32
    %494 = arith.addi %1, %c12_i32_228 : i32
    %c2_i32_229 = arith.constant 2 : i32
    %495 = arith.addi %494, %c2_i32_229 : i32
    %c0_230 = arith.constant 0 : index
    %c0_231 = arith.constant 0 : index
    %496 = arith.index_cast %495 : i32 to index
    %c0_232 = arith.constant 0 : index
    %497 = vector.load %arg2[%c0_230, %c0_231, %496, %c0_232] : memref<1x4x18x18xf32, #tpu.memory_space<vmem>>, vector<1x4x1x18xf32>
    %498 = vector.shape_cast %497 : vector<1x4x1x18xf32> to vector<4x1x18xf32>
    %499 = vector.extract_strided_slice %488 {offsets = [0, 0, 0], sizes = [4, 1, 16], strides = [1, 1, 1]} : vector<4x1x18xf32> to vector<4x1x16xf32>
    %500 = vector.shape_cast %499 : vector<4x1x16xf32> to vector<4x16xf32>
    %501 = vector.extract_strided_slice %488 {offsets = [0, 0, 1], sizes = [4, 1, 16], strides = [1, 1, 1]} : vector<4x1x18xf32> to vector<4x1x16xf32>
    %502 = vector.shape_cast %501 : vector<4x1x16xf32> to vector<4x16xf32>
    %503 = vector.extract_strided_slice %488 {offsets = [0, 0, 2], sizes = [4, 1, 16], strides = [1, 1, 1]} : vector<4x1x18xf32> to vector<4x1x16xf32>
    %504 = vector.shape_cast %503 : vector<4x1x16xf32> to vector<4x16xf32>
    %505 = vector.extract_strided_slice %493 {offsets = [0, 0, 0], sizes = [4, 1, 16], strides = [1, 1, 1]} : vector<4x1x18xf32> to vector<4x1x16xf32>
    %506 = vector.shape_cast %505 : vector<4x1x16xf32> to vector<4x16xf32>
    %507 = vector.extract_strided_slice %493 {offsets = [0, 0, 1], sizes = [4, 1, 16], strides = [1, 1, 1]} : vector<4x1x18xf32> to vector<4x1x16xf32>
    %508 = vector.shape_cast %507 : vector<4x1x16xf32> to vector<4x16xf32>
    %509 = vector.extract_strided_slice %493 {offsets = [0, 0, 2], sizes = [4, 1, 16], strides = [1, 1, 1]} : vector<4x1x18xf32> to vector<4x1x16xf32>
    %510 = vector.shape_cast %509 : vector<4x1x16xf32> to vector<4x16xf32>
    %511 = vector.extract_strided_slice %498 {offsets = [0, 0, 0], sizes = [4, 1, 16], strides = [1, 1, 1]} : vector<4x1x18xf32> to vector<4x1x16xf32>
    %512 = vector.shape_cast %511 : vector<4x1x16xf32> to vector<4x16xf32>
    %513 = vector.extract_strided_slice %498 {offsets = [0, 0, 1], sizes = [4, 1, 16], strides = [1, 1, 1]} : vector<4x1x18xf32> to vector<4x1x16xf32>
    %514 = vector.shape_cast %513 : vector<4x1x16xf32> to vector<4x16xf32>
    %515 = vector.extract_strided_slice %498 {offsets = [0, 0, 2], sizes = [4, 1, 16], strides = [1, 1, 1]} : vector<4x1x18xf32> to vector<4x1x16xf32>
    %516 = vector.shape_cast %515 : vector<4x1x16xf32> to vector<4x16xf32>
    %517 = tpu.concatenate %500, %502, %504, %506, %508, %510, %512, %514, %516 in 0 : vector<4x16xf32>, vector<4x16xf32>, vector<4x16xf32>, vector<4x16xf32>, vector<4x16xf32>, vector<4x16xf32>, vector<4x16xf32>, vector<4x16xf32>, vector<4x16xf32> -> vector<36x16xf32>
    %cst_233 = arith.constant dense<0.000000e+00> : vector<8x16xf32>
    %518 = tpu.matmul %2, %517, %cst_233 {dimension_numbers = #tpu.dot_dimension_numbers<[1], [0], [0], [1], [0, 0, 1, 1], [], []>} : vector<8x36xf32>, vector<36x16xf32>, vector<8x16xf32> -> vector<8x16xf32>
    %519 = vector.broadcast %3 : vector<8x1xf32> to vector<8x16xf32>
    %520 = arith.addf %518, %519 : vector<8x16xf32>
    %c0_234 = arith.constant 0 : index
    %c0_235 = arith.constant 0 : index
    %c12 = arith.constant 12 : index
    %c0_236 = arith.constant 0 : index
    %521 = vector.load %arg5[%c0_234, %c0_235, %c12, %c0_236] : memref<1x8x16x16xf32, #tpu.memory_space<vmem>>, vector<1x8x1x16xf32>
    %522 = vector.shape_cast %521 : vector<1x8x1x16xf32> to vector<8x16xf32>
    %523 = vector.shape_cast %520 : vector<8x16xf32> to vector<1x8x1x16xf32>
    tpu.vector_store %arg5[%c0_234, %c0_235, %c12, %c0_236], %523 {strides = array<i32>} : memref<1x8x16x16xf32, #tpu.memory_space<vmem>>, vector<1x8x1x16xf32>,
    %c13_i32 = arith.constant 13 : i32
    %524 = arith.addi %1, %c13_i32 : i32
    %c0_i32_237 = arith.constant 0 : i32
    %525 = arith.addi %524, %c0_i32_237 : i32
    %c0_238 = arith.constant 0 : index
    %c0_239 = arith.constant 0 : index
    %526 = arith.index_cast %525 : i32 to index
    %c0_240 = arith.constant 0 : index
    %527 = vector.load %arg2[%c0_238, %c0_239, %526, %c0_240] : memref<1x4x18x18xf32, #tpu.memory_space<vmem>>, vector<1x4x1x18xf32>
    %528 = vector.shape_cast %527 : vector<1x4x1x18xf32> to vector<4x1x18xf32>
    %c13_i32_241 = arith.constant 13 : i32
    %529 = arith.addi %1, %c13_i32_241 : i32
    %c1_i32_242 = arith.constant 1 : i32
    %530 = arith.addi %529, %c1_i32_242 : i32
    %c0_243 = arith.constant 0 : index
    %c0_244 = arith.constant 0 : index
    %531 = arith.index_cast %530 : i32 to index
    %c0_245 = arith.constant 0 : index
    %532 = vector.load %arg2[%c0_243, %c0_244, %531, %c0_245] : memref<1x4x18x18xf32, #tpu.memory_space<vmem>>, vector<1x4x1x18xf32>
    %533 = vector.shape_cast %532 : vector<1x4x1x18xf32> to vector<4x1x18xf32>
    %c13_i32_246 = arith.constant 13 : i32
    %534 = arith.addi %1, %c13_i32_246 : i32
    %c2_i32_247 = arith.constant 2 : i32
    %535 = arith.addi %534, %c2_i32_247 : i32
    %c0_248 = arith.constant 0 : index
    %c0_249 = arith.constant 0 : index
    %536 = arith.index_cast %535 : i32 to index
    %c0_250 = arith.constant 0 : index
    %537 = vector.load %arg2[%c0_248, %c0_249, %536, %c0_250] : memref<1x4x18x18xf32, #tpu.memory_space<vmem>>, vector<1x4x1x18xf32>
    %538 = vector.shape_cast %537 : vector<1x4x1x18xf32> to vector<4x1x18xf32>
    %539 = vector.extract_strided_slice %528 {offsets = [0, 0, 0], sizes = [4, 1, 16], strides = [1, 1, 1]} : vector<4x1x18xf32> to vector<4x1x16xf32>
    %540 = vector.shape_cast %539 : vector<4x1x16xf32> to vector<4x16xf32>
    %541 = vector.extract_strided_slice %528 {offsets = [0, 0, 1], sizes = [4, 1, 16], strides = [1, 1, 1]} : vector<4x1x18xf32> to vector<4x1x16xf32>
    %542 = vector.shape_cast %541 : vector<4x1x16xf32> to vector<4x16xf32>
    %543 = vector.extract_strided_slice %528 {offsets = [0, 0, 2], sizes = [4, 1, 16], strides = [1, 1, 1]} : vector<4x1x18xf32> to vector<4x1x16xf32>
    %544 = vector.shape_cast %543 : vector<4x1x16xf32> to vector<4x16xf32>
    %545 = vector.extract_strided_slice %533 {offsets = [0, 0, 0], sizes = [4, 1, 16], strides = [1, 1, 1]} : vector<4x1x18xf32> to vector<4x1x16xf32>
    %546 = vector.shape_cast %545 : vector<4x1x16xf32> to vector<4x16xf32>
    %547 = vector.extract_strided_slice %533 {offsets = [0, 0, 1], sizes = [4, 1, 16], strides = [1, 1, 1]} : vector<4x1x18xf32> to vector<4x1x16xf32>
    %548 = vector.shape_cast %547 : vector<4x1x16xf32> to vector<4x16xf32>
    %549 = vector.extract_strided_slice %533 {offsets = [0, 0, 2], sizes = [4, 1, 16], strides = [1, 1, 1]} : vector<4x1x18xf32> to vector<4x1x16xf32>
    %550 = vector.shape_cast %549 : vector<4x1x16xf32> to vector<4x16xf32>
    %551 = vector.extract_strided_slice %538 {offsets = [0, 0, 0], sizes = [4, 1, 16], strides = [1, 1, 1]} : vector<4x1x18xf32> to vector<4x1x16xf32>
    %552 = vector.shape_cast %551 : vector<4x1x16xf32> to vector<4x16xf32>
    %553 = vector.extract_strided_slice %538 {offsets = [0, 0, 1], sizes = [4, 1, 16], strides = [1, 1, 1]} : vector<4x1x18xf32> to vector<4x1x16xf32>
    %554 = vector.shape_cast %553 : vector<4x1x16xf32> to vector<4x16xf32>
    %555 = vector.extract_strided_slice %538 {offsets = [0, 0, 2], sizes = [4, 1, 16], strides = [1, 1, 1]} : vector<4x1x18xf32> to vector<4x1x16xf32>
    %556 = vector.shape_cast %555 : vector<4x1x16xf32> to vector<4x16xf32>
    %557 = tpu.concatenate %540, %542, %544, %546, %548, %550, %552, %554, %556 in 0 : vector<4x16xf32>, vector<4x16xf32>, vector<4x16xf32>, vector<4x16xf32>, vector<4x16xf32>, vector<4x16xf32>, vector<4x16xf32>, vector<4x16xf32>, vector<4x16xf32> -> vector<36x16xf32>
    %cst_251 = arith.constant dense<0.000000e+00> : vector<8x16xf32>
    %558 = tpu.matmul %2, %557, %cst_251 {dimension_numbers = #tpu.dot_dimension_numbers<[1], [0], [0], [1], [0, 0, 1, 1], [], []>} : vector<8x36xf32>, vector<36x16xf32>, vector<8x16xf32> -> vector<8x16xf32>
    %559 = vector.broadcast %3 : vector<8x1xf32> to vector<8x16xf32>
    %560 = arith.addf %558, %559 : vector<8x16xf32>
    %c0_252 = arith.constant 0 : index
    %c0_253 = arith.constant 0 : index
    %c13 = arith.constant 13 : index
    %c0_254 = arith.constant 0 : index
    %561 = vector.load %arg5[%c0_252, %c0_253, %c13, %c0_254] : memref<1x8x16x16xf32, #tpu.memory_space<vmem>>, vector<1x8x1x16xf32>
    %562 = vector.shape_cast %561 : vector<1x8x1x16xf32> to vector<8x16xf32>
    %563 = vector.shape_cast %560 : vector<8x16xf32> to vector<1x8x1x16xf32>
    tpu.vector_store %arg5[%c0_252, %c0_253, %c13, %c0_254], %563 {strides = array<i32>} : memref<1x8x16x16xf32, #tpu.memory_space<vmem>>, vector<1x8x1x16xf32>,
    %c14_i32 = arith.constant 14 : i32
    %564 = arith.addi %1, %c14_i32 : i32
    %c0_i32_255 = arith.constant 0 : i32
    %565 = arith.addi %564, %c0_i32_255 : i32
    %c0_256 = arith.constant 0 : index
    %c0_257 = arith.constant 0 : index
    %566 = arith.index_cast %565 : i32 to index
    %c0_258 = arith.constant 0 : index
    %567 = vector.load %arg2[%c0_256, %c0_257, %566, %c0_258] : memref<1x4x18x18xf32, #tpu.memory_space<vmem>>, vector<1x4x1x18xf32>
    %568 = vector.shape_cast %567 : vector<1x4x1x18xf32> to vector<4x1x18xf32>
    %c14_i32_259 = arith.constant 14 : i32
    %569 = arith.addi %1, %c14_i32_259 : i32
    %c1_i32_260 = arith.constant 1 : i32
    %570 = arith.addi %569, %c1_i32_260 : i32
    %c0_261 = arith.constant 0 : index
    %c0_262 = arith.constant 0 : index
    %571 = arith.index_cast %570 : i32 to index
    %c0_263 = arith.constant 0 : index
    %572 = vector.load %arg2[%c0_261, %c0_262, %571, %c0_263] : memref<1x4x18x18xf32, #tpu.memory_space<vmem>>, vector<1x4x1x18xf32>
    %573 = vector.shape_cast %572 : vector<1x4x1x18xf32> to vector<4x1x18xf32>
    %c14_i32_264 = arith.constant 14 : i32
    %574 = arith.addi %1, %c14_i32_264 : i32
    %c2_i32_265 = arith.constant 2 : i32
    %575 = arith.addi %574, %c2_i32_265 : i32
    %c0_266 = arith.constant 0 : index
    %c0_267 = arith.constant 0 : index
    %576 = arith.index_cast %575 : i32 to index
    %c0_268 = arith.constant 0 : index
    %577 = vector.load %arg2[%c0_266, %c0_267, %576, %c0_268] : memref<1x4x18x18xf32, #tpu.memory_space<vmem>>, vector<1x4x1x18xf32>
    %578 = vector.shape_cast %577 : vector<1x4x1x18xf32> to vector<4x1x18xf32>
    %579 = vector.extract_strided_slice %568 {offsets = [0, 0, 0], sizes = [4, 1, 16], strides = [1, 1, 1]} : vector<4x1x18xf32> to vector<4x1x16xf32>
    %580 = vector.shape_cast %579 : vector<4x1x16xf32> to vector<4x16xf32>
    %581 = vector.extract_strided_slice %568 {offsets = [0, 0, 1], sizes = [4, 1, 16], strides = [1, 1, 1]} : vector<4x1x18xf32> to vector<4x1x16xf32>
    %582 = vector.shape_cast %581 : vector<4x1x16xf32> to vector<4x16xf32>
    %583 = vector.extract_strided_slice %568 {offsets = [0, 0, 2], sizes = [4, 1, 16], strides = [1, 1, 1]} : vector<4x1x18xf32> to vector<4x1x16xf32>
    %584 = vector.shape_cast %583 : vector<4x1x16xf32> to vector<4x16xf32>
    %585 = vector.extract_strided_slice %573 {offsets = [0, 0, 0], sizes = [4, 1, 16], strides = [1, 1, 1]} : vector<4x1x18xf32> to vector<4x1x16xf32>
    %586 = vector.shape_cast %585 : vector<4x1x16xf32> to vector<4x16xf32>
    %587 = vector.extract_strided_slice %573 {offsets = [0, 0, 1], sizes = [4, 1, 16], strides = [1, 1, 1]} : vector<4x1x18xf32> to vector<4x1x16xf32>
    %588 = vector.shape_cast %587 : vector<4x1x16xf32> to vector<4x16xf32>
    %589 = vector.extract_strided_slice %573 {offsets = [0, 0, 2], sizes = [4, 1, 16], strides = [1, 1, 1]} : vector<4x1x18xf32> to vector<4x1x16xf32>
    %590 = vector.shape_cast %589 : vector<4x1x16xf32> to vector<4x16xf32>
    %591 = vector.extract_strided_slice %578 {offsets = [0, 0, 0], sizes = [4, 1, 16], strides = [1, 1, 1]} : vector<4x1x18xf32> to vector<4x1x16xf32>
    %592 = vector.shape_cast %591 : vector<4x1x16xf32> to vector<4x16xf32>
    %593 = vector.extract_strided_slice %578 {offsets = [0, 0, 1], sizes = [4, 1, 16], strides = [1, 1, 1]} : vector<4x1x18xf32> to vector<4x1x16xf32>
    %594 = vector.shape_cast %593 : vector<4x1x16xf32> to vector<4x16xf32>
    %595 = vector.extract_strided_slice %578 {offsets = [0, 0, 2], sizes = [4, 1, 16], strides = [1, 1, 1]} : vector<4x1x18xf32> to vector<4x1x16xf32>
    %596 = vector.shape_cast %595 : vector<4x1x16xf32> to vector<4x16xf32>
    %597 = tpu.concatenate %580, %582, %584, %586, %588, %590, %592, %594, %596 in 0 : vector<4x16xf32>, vector<4x16xf32>, vector<4x16xf32>, vector<4x16xf32>, vector<4x16xf32>, vector<4x16xf32>, vector<4x16xf32>, vector<4x16xf32>, vector<4x16xf32> -> vector<36x16xf32>
    %cst_269 = arith.constant dense<0.000000e+00> : vector<8x16xf32>
    %598 = tpu.matmul %2, %597, %cst_269 {dimension_numbers = #tpu.dot_dimension_numbers<[1], [0], [0], [1], [0, 0, 1, 1], [], []>} : vector<8x36xf32>, vector<36x16xf32>, vector<8x16xf32> -> vector<8x16xf32>
    %599 = vector.broadcast %3 : vector<8x1xf32> to vector<8x16xf32>
    %600 = arith.addf %598, %599 : vector<8x16xf32>
    %c0_270 = arith.constant 0 : index
    %c0_271 = arith.constant 0 : index
    %c14 = arith.constant 14 : index
    %c0_272 = arith.constant 0 : index
    %601 = vector.load %arg5[%c0_270, %c0_271, %c14, %c0_272] : memref<1x8x16x16xf32, #tpu.memory_space<vmem>>, vector<1x8x1x16xf32>
    %602 = vector.shape_cast %601 : vector<1x8x1x16xf32> to vector<8x16xf32>
    %603 = vector.shape_cast %600 : vector<8x16xf32> to vector<1x8x1x16xf32>
    tpu.vector_store %arg5[%c0_270, %c0_271, %c14, %c0_272], %603 {strides = array<i32>} : memref<1x8x16x16xf32, #tpu.memory_space<vmem>>, vector<1x8x1x16xf32>,
    %c15_i32 = arith.constant 15 : i32
    %604 = arith.addi %1, %c15_i32 : i32
    %c0_i32_273 = arith.constant 0 : i32
    %605 = arith.addi %604, %c0_i32_273 : i32
    %c0_274 = arith.constant 0 : index
    %c0_275 = arith.constant 0 : index
    %606 = arith.index_cast %605 : i32 to index
    %c0_276 = arith.constant 0 : index
    %607 = vector.load %arg2[%c0_274, %c0_275, %606, %c0_276] : memref<1x4x18x18xf32, #tpu.memory_space<vmem>>, vector<1x4x1x18xf32>
    %608 = vector.shape_cast %607 : vector<1x4x1x18xf32> to vector<4x1x18xf32>
    %c15_i32_277 = arith.constant 15 : i32
    %609 = arith.addi %1, %c15_i32_277 : i32
    %c1_i32_278 = arith.constant 1 : i32
    %610 = arith.addi %609, %c1_i32_278 : i32
    %c0_279 = arith.constant 0 : index
    %c0_280 = arith.constant 0 : index
    %611 = arith.index_cast %610 : i32 to index
    %c0_281 = arith.constant 0 : index
    %612 = vector.load %arg2[%c0_279, %c0_280, %611, %c0_281] : memref<1x4x18x18xf32, #tpu.memory_space<vmem>>, vector<1x4x1x18xf32>
    %613 = vector.shape_cast %612 : vector<1x4x1x18xf32> to vector<4x1x18xf32>
    %c15_i32_282 = arith.constant 15 : i32
    %614 = arith.addi %1, %c15_i32_282 : i32
    %c2_i32_283 = arith.constant 2 : i32
    %615 = arith.addi %614, %c2_i32_283 : i32
    %c0_284 = arith.constant 0 : index
    %c0_285 = arith.constant 0 : index
    %616 = arith.index_cast %615 : i32 to index
    %c0_286 = arith.constant 0 : index
    %617 = vector.load %arg2[%c0_284, %c0_285, %616, %c0_286] : memref<1x4x18x18xf32, #tpu.memory_space<vmem>>, vector<1x4x1x18xf32>
    %618 = vector.shape_cast %617 : vector<1x4x1x18xf32> to vector<4x1x18xf32>
    %619 = vector.extract_strided_slice %608 {offsets = [0, 0, 0], sizes = [4, 1, 16], strides = [1, 1, 1]} : vector<4x1x18xf32> to vector<4x1x16xf32>
    %620 = vector.shape_cast %619 : vector<4x1x16xf32> to vector<4x16xf32>
    %621 = vector.extract_strided_slice %608 {offsets = [0, 0, 1], sizes = [4, 1, 16], strides = [1, 1, 1]} : vector<4x1x18xf32> to vector<4x1x16xf32>
    %622 = vector.shape_cast %621 : vector<4x1x16xf32> to vector<4x16xf32>
    %623 = vector.extract_strided_slice %608 {offsets = [0, 0, 2], sizes = [4, 1, 16], strides = [1, 1, 1]} : vector<4x1x18xf32> to vector<4x1x16xf32>
    %624 = vector.shape_cast %623 : vector<4x1x16xf32> to vector<4x16xf32>
    %625 = vector.extract_strided_slice %613 {offsets = [0, 0, 0], sizes = [4, 1, 16], strides = [1, 1, 1]} : vector<4x1x18xf32> to vector<4x1x16xf32>
    %626 = vector.shape_cast %625 : vector<4x1x16xf32> to vector<4x16xf32>
    %627 = vector.extract_strided_slice %613 {offsets = [0, 0, 1], sizes = [4, 1, 16], strides = [1, 1, 1]} : vector<4x1x18xf32> to vector<4x1x16xf32>
    %628 = vector.shape_cast %627 : vector<4x1x16xf32> to vector<4x16xf32>
    %629 = vector.extract_strided_slice %613 {offsets = [0, 0, 2], sizes = [4, 1, 16], strides = [1, 1, 1]} : vector<4x1x18xf32> to vector<4x1x16xf32>
    %630 = vector.shape_cast %629 : vector<4x1x16xf32> to vector<4x16xf32>
    %631 = vector.extract_strided_slice %618 {offsets = [0, 0, 0], sizes = [4, 1, 16], strides = [1, 1, 1]} : vector<4x1x18xf32> to vector<4x1x16xf32>
    %632 = vector.shape_cast %631 : vector<4x1x16xf32> to vector<4x16xf32>
    %633 = vector.extract_strided_slice %618 {offsets = [0, 0, 1], sizes = [4, 1, 16], strides = [1, 1, 1]} : vector<4x1x18xf32> to vector<4x1x16xf32>
    %634 = vector.shape_cast %633 : vector<4x1x16xf32> to vector<4x16xf32>
    %635 = vector.extract_strided_slice %618 {offsets = [0, 0, 2], sizes = [4, 1, 16], strides = [1, 1, 1]} : vector<4x1x18xf32> to vector<4x1x16xf32>
    %636 = vector.shape_cast %635 : vector<4x1x16xf32> to vector<4x16xf32>
    %637 = tpu.concatenate %620, %622, %624, %626, %628, %630, %632, %634, %636 in 0 : vector<4x16xf32>, vector<4x16xf32>, vector<4x16xf32>, vector<4x16xf32>, vector<4x16xf32>, vector<4x16xf32>, vector<4x16xf32>, vector<4x16xf32>, vector<4x16xf32> -> vector<36x16xf32>
    %cst_287 = arith.constant dense<0.000000e+00> : vector<8x16xf32>
    %638 = tpu.matmul %2, %637, %cst_287 {dimension_numbers = #tpu.dot_dimension_numbers<[1], [0], [0], [1], [0, 0, 1, 1], [], []>} : vector<8x36xf32>, vector<36x16xf32>, vector<8x16xf32> -> vector<8x16xf32>
    %639 = vector.broadcast %3 : vector<8x1xf32> to vector<8x16xf32>
    %640 = arith.addf %638, %639 : vector<8x16xf32>
    %c0_288 = arith.constant 0 : index
    %c0_289 = arith.constant 0 : index
    %c15 = arith.constant 15 : index
    %c0_290 = arith.constant 0 : index
    %641 = vector.load %arg5[%c0_288, %c0_289, %c15, %c0_290] : memref<1x8x16x16xf32, #tpu.memory_space<vmem>>, vector<1x8x1x16xf32>
    %642 = vector.shape_cast %641 : vector<1x8x1x16xf32> to vector<8x16xf32>
    %643 = vector.shape_cast %640 : vector<8x16xf32> to vector<1x8x1x16xf32>
    tpu.vector_store %arg5[%c0_288, %c0_289, %c15, %c0_290], %643 {strides = array<i32>} : memref<1x8x16x16xf32, #tpu.memory_space<vmem>>, vector<1x8x1x16xf32>,
    return
  }
  func.func @transform_0(%arg0: i32, %arg1: i32) -> (i32, i32, i32, i32) {
    %c0_i32 = arith.constant 0 : i32
    %c0_i32_0 = arith.constant 0 : i32
    %c0_i32_1 = arith.constant 0 : i32
    %c0_i32_2 = arith.constant 0 : i32
    return %arg0, %c0_i32, %c0_i32_0, %c0_i32_1 : i32, i32, i32, i32
  }
  func.func @transform_1(%arg0: i32, %arg1: i32) -> (i32, i32) {
    %c0_i32 = arith.constant 0 : i32
    %c0_i32_0 = arith.constant 0 : i32
    %c0_i32_1 = arith.constant 0 : i32
    return %c0_i32, %c0_i32_0 : i32, i32
  }
  func.func @transform_2(%arg0: i32, %arg1: i32) -> (i32, i32) {
    %c0_i32 = arith.constant 0 : i32
    %c0_i32_0 = arith.constant 0 : i32
    %c0_i32_1 = arith.constant 0 : i32
    return %c0_i32, %c0_i32_0 : i32, i32
  }
  func.func @transform_3(%arg0: i32, %arg1: i32) -> (i32, i32, i32, i32) {
    %c0_i32 = arith.constant 0 : i32
    %c0_i32_0 = arith.constant 0 : i32
    %c0_i32_1 = arith.constant 0 : i32
    return %arg0, %c0_i32, %arg1, %c0_i32_0 : i32, i32, i32, i32
  }
}

</mosaic_0001>

<llo_original>
// kernel: dconv_forward.1
$region0: #{dconv_forward.1}
  #allocation0 [shape = 'u32[]', space=smem, size = 0x4, offset = 0x4, fixed_abs, tag = 'smem constant byte address 0x4 - core index']
  #allocation1 [shape = 'u32[144,128]{1,0:T(1,128)}', space=vmem, size = 0x12000, scoped, tag = 'internal scratch']
  %s0 = inlined_call_operand.vmem [shape: f32[2,4,18,18], index: 0, kind: input, shape index: {}]
  %s1 = inlined_call_operand.vmem [shape: f32[8,36], index: 1, kind: input, shape index: {}]
  %s2 = inlined_call_operand.vmem [shape: f32[8,1], index: 2, kind: input, shape index: {}]
  %s3 = inlined_call_operand.hbm [shape: f32[2,8,16,16], index: 3, kind: output, shape index: {}]
  %s4 = sld [smem:[#allocation0]]
  $region45: #{dconv_forward.1} parent=0
    _
  %s6 = ssub.s32 1, %s4
  %s7 = scalar_select 0, %s6, %s4
  $region1: #{dconv_forward.1} parent=0
    #allocation2 [shape = 'u8[131072]{0}', space=vmem, size = 0x20000, scoped, tag = 'output window, operand 0']
    #allocation3 [shape = 's32[2]{0}', space=sflag, size = 0x8, scoped, tag = 'scoped memory for dconv_forward.1']
    %8 = vsyncpa [#allocation3], 0
    %s9 = scalar_lea.sflag [#allocation3], 1
    %10 = vsyncpa %s9, 0
    loop: start=0, step=1, limit=4
    $region2: #{dconv_forward.1} parent=1 // loop_pre_header
      _
    $region3: #{dconv_forward.1} parent=1 // loop_header
      %s12 = sphi 0, %s16
      %p13 = scmp.ge.s32.totalorder %s12, 4
      %s19 = sphi 0, %s31
      %s20 = sphi 0, %s27
      %s21 = sphi 0, %s19
      %s22 = sphi 0, %s20
      %s23 = sphi 0, %s21
      %s24 = sphi 0, %s22
      %s34 = sphi 0, %s36
      %s37 = sphi 0, %s34
      %s38 = sphi 0, %s37
      %s54 = sphi 0, %s38
      %s58 = sphi 0, %s58
      %s60 = sphi 0, %s58
      %s61 = sphi 0, %s60
      %s75 = sphi 0, %s61
      %s79 = sphi 0, %s79
      %s81 = sphi 0, %s79
      %s82 = sphi 0, %s81
      %s96 = sphi 0, %s82
      %s104 = sphi 0, %s106
      %s107 = sphi 0, %s104
      %s108 = sphi 0, %s107
      %s124 = sphi 0, %s108
    $region4: #{dconv_forward.1} parent=1 // loop_header_branch
      %15 = sbr.rel (%p13) target = $region8
    $region5: #{dconv_forward.1} parent=1 // loop_body
      %s17 = ssub.s32 %s12, 1
      %s18 = ssub.s32 %s12, 2
      %s25 = sadd.s32 1, %s20
      %p26 = scmp.ge.s32.totalorder %s25, 1
      %s27 = scalar_select %p26, 0, %s25
      %s28 = sadd.s32 1, %s19
      %s29 = scalar_select %p26, %s28, %s19
      %p30 = scmp.ge.s32.totalorder %s29, 2
      %s31 = scalar_select %p30, 0, %s29
      %s32 = ssub.s32 %s19, %s31
      %p33 = scmp.eq.s32.totalorder %s32, 0
      %s35 = sadd.s32 %s34, 1
      %s36 = scalar_select %p33, %s34, %s35
      %p39 = pneg %p33
      %p40 = scmp.eq.s32.totalorder %s12, 1
      %p41 = por %p39, %p40
      %p42 = scmp.ne.s32.totalorder %s34, %s37
      %p43 = scmp.eq.s32.totalorder %s12, 0
      %p44 = por %p42, %p43
      %p45 = scmp.ne.s32.totalorder %s34, %s37
      %p46 = scmp.eq.s32.totalorder %s17, 1
      %p47 = por %p45, %p46
      %p48 = scmp.ne.s32.totalorder %s37, %s38
      %p49 = scmp.eq.s32.totalorder %s17, 0
      %p50 = por %p48, %p49
      %p51 = scmp.ne.s32.totalorder %s37, %s38
      %p52 = scmp.eq.s32.totalorder %s18, 1
      %p53 = por %p51, %p52
      %p55 = scmp.ne.s32.totalorder %s38, %s54
      %p56 = scmp.eq.s32.totalorder %s18, 0
      %p57 = por %p55, %p56
      %s59 = sadd.s32 %s58, 1
      %p62 = scmp.eq.s32.totalorder %s12, 1
      %p63 = scmp.ne.s32.totalorder %s58, %s60
      %p64 = scmp.eq.s32.totalorder %s12, 0
      %p65 = por %p63, %p64
      %p66 = scmp.ne.s32.totalorder %s58, %s60
      %p67 = scmp.eq.s32.totalorder %s17, 1
      %p68 = por %p66, %p67
      %p69 = scmp.ne.s32.totalorder %s60, %s61
      %p70 = scmp.eq.s32.totalorder %s17, 0
      %p71 = por %p69, %p70
      %p72 = scmp.ne.s32.totalorder %s60, %s61
      %p73 = scmp.eq.s32.totalorder %s18, 1
      %p74 = por %p72, %p73
      %p76 = scmp.ne.s32.totalorder %s61, %s75
      %p77 = scmp.eq.s32.totalorder %s18, 0
      %p78 = por %p76, %p77
      %s80 = sadd.s32 %s79, 1
      %p83 = scmp.eq.s32.totalorder %s12, 1
      %p84 = scmp.ne.s32.totalorder %s79, %s81
      %p85 = scmp.eq.s32.totalorder %s12, 0
      %p86 = por %p84, %p85
      %p87 = scmp.ne.s32.totalorder %s79, %s81
      %p88 = scmp.eq.s32.totalorder %s17, 1
      %p89 = por %p87, %p88
      %p90 = scmp.ne.s32.totalorder %s81, %s82
      %p91 = scmp.eq.s32.totalorder %s17, 0
      %p92 = por %p90, %p91
      %p93 = scmp.ne.s32.totalorder %s81, %s82
      %p94 = scmp.eq.s32.totalorder %s18, 1
      %p95 = por %p93, %p94
      %p97 = scmp.ne.s32.totalorder %s82, %s96
      %p98 = scmp.eq.s32.totalorder %s18, 0
      %p99 = por %p97, %p98
      %s100 = ssub.s32 %s19, %s31
      %s101 = ssub.s32 %s20, %s27
      %s102 = sor.u32 %s100, %s101
      %p103 = scmp.eq.s32.totalorder %s102, 0
      %s105 = sadd.s32 %s104, 1
      %s106 = scalar_select %p103, %s104, %s105
      %p109 = pneg %p103
      %p110 = scmp.eq.s32.totalorder %s12, 1
      %p111 = por %p109, %p110
      %p112 = scmp.ne.s32.totalorder %s104, %s107
      %p113 = scmp.eq.s32.totalorder %s12, 0
      %p114 = por %p112, %p113
      %p115 = scmp.ne.s32.totalorder %s104, %s107
      %p116 = scmp.eq.s32.totalorder %s17, 1
      %p117 = por %p115, %p116
      %p118 = scmp.ne.s32.totalorder %s107, %s108
      %p119 = scmp.eq.s32.totalorder %s17, 0
      %p120 = por %p118, %p119
      %p121 = scmp.ne.s32.totalorder %s107, %s108
      %p122 = scmp.eq.s32.totalorder %s18, 1
      %p123 = por %p121, %p122
      %p125 = scmp.ne.s32.totalorder %s108, %s124
      %p126 = scmp.eq.s32.totalorder %s18, 0
      %p127 = por %p125, %p126
      %p128 = scmp.le.s32.totalorder 1, %s12
      %p129 = scmp.lt.s32.totalorder %s12, 3
      %p130 = pnand %p128, %p129
      %p131 = pneg %p130
      // Predicated region
      $region9: #{dconv_forward.1} parent=5 // pred_check
        _
      $region10: #{dconv_forward.1} parent=5 // pred_check_branch
        %133 = sbr.rel (%p130) target = $region12
      $region11: #{dconv_forward.1} parent=5 // pred_region
        %s134 = ssub.s32 %s12, 1
        // Predicated region
        $region13: #{dconv_forward.1} parent=11 // pred_check
          %p135 = pneg %p71
        $region14: #{dconv_forward.1} parent=11 // pred_check_branch
          %137 = sbr.rel (%p135) target = $region16
        $region15: #{dconv_forward.1} parent=11 // pred_region
          _
        $region16: #{dconv_forward.1} parent=11 // pred_fallthru
          _
        // Predicated region
        $region17: #{dconv_forward.1} parent=11 // pred_check
          %p138 = pneg %p92
        $region18: #{dconv_forward.1} parent=11 // pred_check_branch
          %140 = sbr.rel (%p138) target = $region20
        $region19: #{dconv_forward.1} parent=11 // pred_region
          _
        $region20: #{dconv_forward.1} parent=11 // pred_fallthru
          _
      $region12: #{dconv_forward.1} parent=5 // pred_fallthru
        _
      %p141 = scmp.lt.s32.totalorder %s12, 2
      // Predicated region
      $region21: #{dconv_forward.1} parent=5 // pred_check
        %p142 = pneg %p141
      $region22: #{dconv_forward.1} parent=5 // pred_check_branch
        %144 = sbr.rel (%p142) target = $region24
      $region23: #{dconv_forward.1} parent=5 // pred_region
        // Predicated region
        $region25: #{dconv_forward.1} parent=23 // pred_check
          %p145 = pneg %p44
        $region26: #{dconv_forward.1} parent=23 // pred_check_branch
          %147 = sbr.rel (%p145) target = $region28
        $region27: #{dconv_forward.1} parent=23 // pred_region
          %p148 = scmp.lt.s32.totalorder %s19, 1
          %s149 = scalar_select %p148, %s19, 1
          %s150 = smul.addr %s149, 12
          %s151 = smul.addr %s150, 8
          %s152 = scalar_lea.vmem %s0, %s151
        $region28: #{dconv_forward.1} parent=23 // pred_fallthru
          _
      $region24: #{dconv_forward.1} parent=5 // pred_fallthru
        _
      %p153 = scmp.le.s32.totalorder 1, %s12
      %p154 = scmp.lt.s32.totalorder %s12, 3
      %p155 = pnand %p153, %p154
      %p156 = pneg %p155
      // Predicated region
      $region29: #{dconv_forward.1} parent=5 // pred_check
        _
      $region30: #{dconv_forward.1} parent=5 // pred_check_branch
        %158 = sbr.rel (%p155) target = $region32
      $region31: #{dconv_forward.1} parent=5 // pred_region
        %s159 = ssub.s32 %s12, 1
        %p160 = scmp.lt.s32.totalorder %s21, 1
        %s161 = scalar_select %p160, %s21, 1
        %s162 = smul.addr %s161, 12
        %s163 = smul.addr %s162, 8
        %s164 = scalar_lea.vmem %s0, %s163
        %p165 = pneg %p50
        %p166 = pneg %p47
        %p167 = pneg %p71
        %p168 = pneg %p68
        %p169 = pneg %p92
        %p170 = pneg %p89
        %p171 = pneg %p120
        %p172 = pneg %p117
        %s173 = sand.u32 %s107, 1
        %s174 = scalar_lea.sflag [#allocation3], %s173
        %s175 = sand.u32 %s107, 1
        %s176 = smul.addr %s175, 128
        %s177 = scalar_lea.vmem [#allocation2], %s176
        %p178 = scmp.lt.s32.totalorder %s21, 1
        %s179 = scalar_select %p178, %s21, 1
        %s180 = smul.addr %s179, 12
        %s181 = smul.addr %s180, 8
        %s182 = scalar_lea.vmem %s0, %s181
        %s183 = smul.u32 2, %s22
        %s184 = smul.u32 %s22, 16
        %v185 = vld [vmem:[%s1] sm:$0xff]
        %v186 = vld [vmem:[%s2] sm:$0xff]
        %s187 = scalar_lea.vmem %s182, %s184
        %v188 = vld [vmem:[%s187] sm:$0x1]
        %v189 = vld [vmem:[%s187 + $0x18] sm:$0x1]
        %v190 = vld [vmem:[%s187 + $0x30] sm:$0x1]
        %v191 = vld [vmem:[%s187 + $0x48] sm:$0x1]
        %s192 = sadd.s32 %s184, 1
        %s193 = scalar_lea.vmem %s182, %s192
        %v194 = vld [vmem:[%s193] sm:$0x1]
        %v195 = vld [vmem:[%s193 + $0x18] sm:$0x1]
        %v196 = vld [vmem:[%s193 + $0x30] sm:$0x1]
        %v197 = vld [vmem:[%s193 + $0x48] sm:$0x1]
        %s198 = sadd.s32 %s184, 2
        %s199 = scalar_lea.vmem %s182, %s198
        %v200 = vld [vmem:[%s199] sm:$0x1]
        %v201 = vld [vmem:[%s199 + $0x18] sm:$0x1]
        %v202 = vld [vmem:[%s199 + $0x30] sm:$0x1]
        %v203 = vld [vmem:[%s199 + $0x48] sm:$0x1]
        %v208 = vrot.slane %v189, 7
        %vm209 = vcmask 1041409
        %v210 = vsel %vm209, %v208, %v188
        %v211 = vrot.slane %v190, 6
        %vm212 = vcmask 1042434
        %v213 = vsel %vm212, %v211, %v210
        %v214 = vrot.slane %v191, 5
        %vm215 = vcmask 1043459
        %v216 = vsel %vm215, %v214, %v213
        %v218 = vrot.slane %v188, 4
        %v219 = vrot.slane %v189, 3
        %vm220 = vcmask 1045509
        %v221 = vsel %vm220, %v219, %v218
        %v222 = vrot.slane %v190, 2
        %vm223 = vcmask 1046534
        %v224 = vsel %vm223, %v222, %v221
        %v225 = vrot.slane %v191, 1
        %vm226 = vcmask 1047559
        %v227 = vsel %vm226, %v225, %v224
        %228 = vrot.lane.b32.xlu0 %v227, 127
        %v229 = vpop.permute.xlu0 %228
        %231 = vrot.lane.b32.xlu0 %v216, 126
        %v232 = vpop.permute.xlu0 %231
        %v238 = vrot.slane %v194, 4
        %v239 = vrot.slane %v195, 3
        %v240 = vsel %vm220, %v239, %v238
        %v241 = vrot.slane %v196, 2
        %v242 = vsel %vm223, %v241, %v240
        %v243 = vrot.slane %v197, 1
        %v244 = vsel %vm226, %v243, %v242
        %v246 = vrot.slane %v195, 7
        %v247 = vsel %vm209, %v246, %v194
        %v248 = vrot.slane %v196, 6
        %v249 = vsel %vm212, %v248, %v247
        %v250 = vrot.slane %v197, 5
        %v251 = vsel %vm215, %v250, %v249
        %252 = vrot.lane.b32.xlu0 %v251, 127
        %v253 = vpop.permute.xlu0 %252
        %255 = vrot.lane.b32.xlu0 %v244, 126
        %v256 = vpop.permute.xlu0 %255
        %v262 = vrot.slane %v201, 7
        %v263 = vsel %vm209, %v262, %v200
        %v264 = vrot.slane %v202, 6
        %v265 = vsel %vm212, %v264, %v263
        %v266 = vrot.slane %v203, 5
        %v267 = vsel %vm215, %v266, %v265
        %v269 = vrot.slane %v200, 4
        %v270 = vrot.slane %v201, 3
        %v271 = vsel %vm220, %v270, %v269
        %v272 = vrot.slane %v202, 2
        %v273 = vsel %vm223, %v272, %v271
        %v274 = vrot.slane %v203, 1
        %v275 = vsel %vm226, %v274, %v273
        %276 = vrot.lane.b32.xlu0 %v275, 127
        %v277 = vpop.permute.xlu0 %276
        %279 = vrot.lane.b32.xlu0 %v267, 126
        %v280 = vpop.permute.xlu0 %279
        %vm281 = vcmask 1043456
        %v282 = vsel %vm281, %v216, %v229
        %v283 = vsel %vm281, %v232, %v244
        %v284 = vsel %vm281, %v253, %v256
        %v285 = vsel %vm281, %v267, %v277
        %287 = vset.pattern.permute.xlu0 0
        %288 = vperm.xlu0 %287, %v186
        %v289 = vpop.permute.xlu0 %288
        %vm291 = vcmask 293888
        %v293 = vsel %vm291, %v185, 0
        %v295 = vsel %vm281, %v280, 0
        %297 = vmatprep.subr.mxu0 0.0
        %298 = vmatpush1.msra.mxu0 0.0
        %299 = vmatprep.subr.mxu0 0.0
        %300 = vmatpush1.msra.mxu0 0.0
        %301 = vmatprep.subr.mxu0 0.0
        %302 = vmatpush1.msra.mxu0 0.0
        %303 = vmatprep.subr.mxu0 0.0
        %304 = vmatpush1.msra.mxu0 0.0
        %305 = vmatprep.subr.mxu0 0.0
        %306 = vmatpush1.msra.mxu0 0.0
        %307 = vmatprep.subr.mxu0 0.0
        %308 = vmatpush1.msra.mxu0 0.0
        %309 = vmatprep.subr.mxu0 0.0
        %310 = vmatpush1.msra.mxu0 0.0
        %311 = vmatprep.subr.mxu0 0.0
        %312 = vmatpush1.msra.mxu0 0.0
        %313 = vmatprep.subr.mxu0 0.0
        %314 = vmatpush1.msra.mxu0 0.0
        %315 = vmatprep.subr.mxu0 0.0
        %316 = vmatpush1.msra.mxu0 0.0
        %317 = vmatprep.subr.mxu0 0.0
        %318 = vmatpush1.msra.mxu0 0.0
        %319 = vmatprep.subr.mxu0 0.0
        %320 = vmatpush1.msra.mxu0 %v295
        %321 = vmatprep.subr.mxu0 0.0
        %322 = vmatpush1.msra.mxu0 %v285
        %323 = vmatprep.subr.mxu0 0.0
        %324 = vmatpush1.msra.mxu0 %v284
        %325 = vmatprep.subr.mxu0 0.0
        %326 = vmatpush1.msra.mxu0 %v283
        %327 = vmatprep.subr.mxu0 0.0
        %328 = vmatpush1.msra.mxu0 %v282
        %329 = vmatprep.subr.mxu0 0.0
        %330 = vmatpush2.msra.mxu0 0.0
        %331 = vmatprep.subr.mxu0 0.0
        %332 = vmatpush2.msra.mxu0 0.0
        %333 = vmatprep.subr.mxu0 0.0
        %334 = vmatpush2.msra.mxu0 0.0
        %335 = vmatprep.subr.mxu0 0.0
        %336 = vmatpush2.msra.mxu0 0.0
        %337 = vmatprep.subr.mxu0 0.0
        %338 = vmatpush2.msra.mxu0 0.0
        %339 = vmatprep.subr.mxu0 0.0
        %340 = vmatpush2.msra.mxu0 0.0
        %341 = vmatprep.subr.mxu0 0.0
        %342 = vmatpush2.msra.mxu0 0.0
        %343 = vmatprep.subr.mxu0 0.0
        %344 = vmatpush2.msra.mxu0 0.0
        %345 = vmatprep.subr.mxu0 0.0
        %346 = vmatpush2.msra.mxu0 0.0
        %347 = vmatprep.subr.mxu0 0.0
        %348 = vmatpush2.msra.mxu0 0.0
        %349 = vmatprep.subr.mxu0 0.0
        %350 = vmatpush2.msra.mxu0 0.0
        %351 = vmatprep.subr.mxu0 0.0
        %352 = vmatpush2.msra.mxu0 0.0
        %353 = vmatprep.subr.mxu0 0.0
        %354 = vmatpush2.msra.mxu0 0.0
        %355 = vmatprep.subr.mxu0 0.0
        %356 = vmatpush2.msra.mxu0 0.0
        %357 = vmatprep.subr.mxu0 0.0
        %358 = vmatpush2.msra.mxu0 0.0
        %359 = vmatprep.subr.mxu0 0.0
        %360 = vmatpush2.msra.mxu0 0.0
        %361 = vmatprep.mubr.f32.mxu0 0.0
        %362 = vmatmul.mubr.f32.gmra.mxu0 %v293
        %v363 = vpop.f32.mrf.mxu0
        %v364 = vadd.f32 %v289, %v363
        %v365 = vpop.f32.mrf.mxu0
        %366 = vdwg.mxu0
        %v368 = vcombine.high %v364, %v364
        %v370 = vunpack.c.l.s4 1966171168
        %v371 = vunpack.c.0.s8 %v370
        %v372 = vlaneseq
        %v373 = vshrl.u32 %v372, 7
        %v374 = vsub.s32 %v371, %v373
        %v375 = vrot.slane %v364, %v374
        %v377 = vunpack.c.l.s4 1966171168
        %v378 = vunpack.c.0.s8 %v377
        %v379 = vlaneseq
        %v380 = vshrl.u32 %v379, 7
        %v381 = vsub.s32 %v378, %v380
        %v382 = vrot.slane %v368, %v381
        %v383 = vcombine.high %v375, %v375
        %v384 = vcombine.high %v382, %v382
        %v386 = vunpack.c.l.s4 1966171168
        %v387 = vunpack.c.0.s8 %v386
        %v388 = vlaneseq
        %v389 = vshrl.u32 %v388, 7
        %v390 = vsub.s32 %v387, %v389
        %v391 = vrot.slane %v375, %v390
        %v393 = vunpack.c.l.s4 1966171168
        %v394 = vunpack.c.0.s8 %v393
        %v395 = vlaneseq
        %v396 = vshrl.u32 %v395, 7
        %v397 = vsub.s32 %v394, %v396
        %v398 = vrot.slane %v382, %v397
        %v400 = vunpack.c.l.s4 1966171168
        %v401 = vunpack.c.0.s8 %v400
        %v402 = vlaneseq
        %v403 = vshrl.u32 %v402, 7
        %v404 = vsub.s32 %v401, %v403
        %v405 = vrot.slane %v383, %v404
        %v407 = vunpack.c.l.s4 1966171168
        %v408 = vunpack.c.0.s8 %v407
        %v409 = vlaneseq
        %v410 = vshrl.u32 %v409, 7
        %v411 = vsub.s32 %v408, %v410
        %v412 = vrot.slane %v384, %v411
        %v413 = vcombine.high %v391, %v391
        %v414 = vcombine.high %v398, %v398
        %v415 = vcombine.high %v405, %v405
        %v416 = vcombine.high %v412, %v412
        %vm425 = vcmask 122880
        %426 = vst.msk [vmem:[%s177] sm:$0x1] %vm425, %v391
        %427 = vst.msk [vmem:[%s177 + $0x10] sm:$0x1] %vm425, %v405
        %428 = vst.msk [vmem:[%s177 + $0x20] sm:$0x1] %vm425, %v413
        %429 = vst.msk [vmem:[%s177 + $0x30] sm:$0x1] %vm425, %v415
        %430 = vst.msk [vmem:[%s177 + $0x40] sm:$0x1] %vm425, %v398
        %431 = vst.msk [vmem:[%s177 + $0x50] sm:$0x1] %vm425, %v412
        %432 = vst.msk [vmem:[%s177 + $0x60] sm:$0x1] %vm425, %v414
        %433 = vst.msk [vmem:[%s177 + $0x70] sm:$0x1] %vm425, %v416
        %v434 = vld [vmem:[%s193] sm:$0x1]
        %v435 = vld [vmem:[%s193 + $0x18] sm:$0x1]
        %v436 = vld [vmem:[%s193 + $0x30] sm:$0x1]
        %v437 = vld [vmem:[%s193 + $0x48] sm:$0x1]
        %v438 = vld [vmem:[%s199] sm:$0x1]
        %v439 = vld [vmem:[%s199 + $0x18] sm:$0x1]
        %v440 = vld [vmem:[%s199 + $0x30] sm:$0x1]
        %v441 = vld [vmem:[%s199 + $0x48] sm:$0x1]
        %s442 = sadd.s32 %s184, 3
        %s443 = scalar_lea.vmem %s182, %s442
        %v444 = vld [vmem:[%s443] sm:$0x1]
        %v445 = vld [vmem:[%s443 + $0x18] sm:$0x1]
        %v446 = vld [vmem:[%s443 + $0x30] sm:$0x1]
        %v447 = vld [vmem:[%s443 + $0x48] sm:$0x1]
        %v452 = vrot.slane %v435, 7
        %v453 = vsel %vm209, %v452, %v434
        %v454 = vrot.slane %v436, 6
        %v455 = vsel %vm212, %v454, %v453
        %v456 = vrot.slane %v437, 5
        %v457 = vsel %vm215, %v456, %v455
        %v459 = vrot.slane %v434, 4
        %v460 = vrot.slane %v435, 3
        %v461 = vsel %vm220, %v460, %v459
        %v462 = vrot.slane %v436, 2
        %v463 = vsel %vm223, %v462, %v461
        %v464 = vrot.slane %v437, 1
        %v465 = vsel %vm226, %v464, %v463
        %466 = vrot.lane.b32.xlu0 %v465, 127
        %v467 = vpop.permute.xlu0 %466
        %469 = vrot.lane.b32.xlu0 %v457, 126
        %v470 = vpop.permute.xlu0 %469
        %v476 = vrot.slane %v438, 4
        %v477 = vrot.slane %v439, 3
        %v478 = vsel %vm220, %v477, %v476
        %v479 = vrot.slane %v440, 2
        %v480 = vsel %vm223, %v479, %v478
        %v481 = vrot.slane %v441, 1
        %v482 = vsel %vm226, %v481, %v480
        %v484 = vrot.slane %v439, 7
        %v485 = vsel %vm209, %v484, %v438
        %v486 = vrot.slane %v440, 6
        %v487 = vsel %vm212, %v486, %v485
        %v488 = vrot.slane %v441, 5
        %v489 = vsel %vm215, %v488, %v487
        %490 = vrot.lane.b32.xlu0 %v489, 127
        %v491 = vpop.permute.xlu0 %490
        %493 = vrot.lane.b32.xlu0 %v482, 126
        %v494 = vpop.permute.xlu0 %493
        %v500 = vrot.slane %v445, 7
        %v501 = vsel %vm209, %v500, %v444
        %v502 = vrot.slane %v446, 6
        %v503 = vsel %vm212, %v502, %v501
        %v504 = vrot.slane %v447, 5
        %v505 = vsel %vm215, %v504, %v503
        %v507 = vrot.slane %v444, 4
        %v508 = vrot.slane %v445, 3
        %v509 = vsel %vm220, %v508, %v507
        %v510 = vrot.slane %v446, 2
        %v511 = vsel %vm223, %v510, %v509
        %v512 = vrot.slane %v447, 1
        %v513 = vsel %vm226, %v512, %v511
        %514 = vrot.lane.b32.xlu0 %v513, 127
        %v515 = vpop.permute.xlu0 %514
        %517 = vrot.lane.b32.xlu0 %v505, 126
        %v518 = vpop.permute.xlu0 %517
        %v519 = vsel %vm281, %v457, %v467
        %v520 = vsel %vm281, %v470, %v482
        %v521 = vsel %vm281, %v491, %v494
        %v522 = vsel %vm281, %v505, %v515
        %v523 = vsel %vm281, %v518, 0
        %525 = vmatprep.subr.mxu0 0.0
        %526 = vmatpush1.msra.mxu0 0.0
        %527 = vmatprep.subr.mxu0 0.0
        %528 = vmatpush1.msra.mxu0 0.0
        %529 = vmatprep.subr.mxu0 0.0
        %530 = vmatpush1.msra.mxu0 0.0
        %531 = vmatprep.subr.mxu0 0.0
        %532 = vmatpush1.msra.mxu0 0.0
        %533 = vmatprep.subr.mxu0 0.0
        %534 = vmatpush1.msra.mxu0 0.0
        %535 = vmatprep.subr.mxu0 0.0
        %536 = vmatpush1.msra.mxu0 0.0
        %537 = vmatprep.subr.mxu0 0.0
        %538 = vmatpush1.msra.mxu0 0.0
        %539 = vmatprep.subr.mxu0 0.0
        %540 = vmatpush1.msra.mxu0 0.0
        %541 = vmatprep.subr.mxu0 0.0
        %542 = vmatpush1.msra.mxu0 0.0
        %543 = vmatprep.subr.mxu0 0.0
        %544 = vmatpush1.msra.mxu0 0.0
        %545 = vmatprep.subr.mxu0 0.0
        %546 = vmatpush1.msra.mxu0 0.0
        %547 = vmatprep.subr.mxu0 0.0
        %548 = vmatpush1.msra.mxu0 %v523
        %549 = vmatprep.subr.mxu0 0.0
        %550 = vmatpush1.msra.mxu0 %v522
        %551 = vmatprep.subr.mxu0 0.0
        %552 = vmatpush1.msra.mxu0 %v521
        %553 = vmatprep.subr.mxu0 0.0
        %554 = vmatpush1.msra.mxu0 %v520
        %555 = vmatprep.subr.mxu0 0.0
        %556 = vmatpush1.msra.mxu0 %v519
        %557 = vmatprep.subr.mxu0 0.0
        %558 = vmatpush2.msra.mxu0 0.0
        %559 = vmatprep.subr.mxu0 0.0
        %560 = vmatpush2.msra.mxu0 0.0
        %561 = vmatprep.subr.mxu0 0.0
        %562 = vmatpush2.msra.mxu0 0.0
        %563 = vmatprep.subr.mxu0 0.0
        %564 = vmatpush2.msra.mxu0 0.0
        %565 = vmatprep.subr.mxu0 0.0
        %566 = vmatpush2.msra.mxu0 0.0
        %567 = vmatprep.subr.mxu0 0.0
        %568 = vmatpush2.msra.mxu0 0.0
        %569 = vmatprep.subr.mxu0 0.0
        %570 = vmatpush2.msra.mxu0 0.0
        %571 = vmatprep.subr.mxu0 0.0
        %572 = vmatpush2.msra.mxu0 0.0
        %573 = vmatprep.subr.mxu0 0.0
        %574 = vmatpush2.msra.mxu0 0.0
        %575 = vmatprep.subr.mxu0 0.0
        %576 = vmatpush2.msra.mxu0 0.0
        %577 = vmatprep.subr.mxu0 0.0
        %578 = vmatpush2.msra.mxu0 0.0
        %579 = vmatprep.subr.mxu0 0.0
        %580 = vmatpush2.msra.mxu0 0.0
        %581 = vmatprep.subr.mxu0 0.0
        %582 = vmatpush2.msra.mxu0 0.0
        %583 = vmatprep.subr.mxu0 0.0
        %584 = vmatpush2.msra.mxu0 0.0
        %585 = vmatprep.subr.mxu0 0.0
        %586 = vmatpush2.msra.mxu0 0.0
        %587 = vmatprep.subr.mxu0 0.0
        %588 = vmatpush2.msra.mxu0 0.0
        %589 = vmatprep.mubr.f32.mxu0 0.0
        %590 = vmatmul.mubr.f32.gmra.mxu0 %v293
        %v591 = vpop.f32.mrf.mxu0
        %v592 = vadd.f32 %v289, %v591
        %v593 = vpop.f32.mrf.mxu0
        %594 = vdwg.mxu0
        %v596 = vcombine.high %v592, %v592
        %v598 = vunpack.c.l.s4 1966171168
        %v599 = vunpack.c.0.s8 %v598
        %v600 = vlaneseq
        %v601 = vshrl.u32 %v600, 7
        %v602 = vsub.s32 %v599, %v601
        %v603 = vrot.slane %v592, %v602
        %v605 = vunpack.c.l.s4 1966171168
        %v606 = vunpack.c.0.s8 %v605
        %v607 = vlaneseq
        %v608 = vshrl.u32 %v607, 7
        %v609 = vsub.s32 %v606, %v608
        %v610 = vrot.slane %v596, %v609
        %v611 = vcombine.high %v603, %v603
        %v612 = vcombine.high %v610, %v610
        %v614 = vunpack.c.l.s4 1966171168
        %v615 = vunpack.c.0.s8 %v614
        %v616 = vlaneseq
        %v617 = vshrl.u32 %v616, 7
        %v618 = vsub.s32 %v615, %v617
        %v619 = vrot.slane %v603, %v618
        %v621 = vunpack.c.l.s4 1966171168
        %v622 = vunpack.c.0.s8 %v621
        %v623 = vlaneseq
        %v624 = vshrl.u32 %v623, 7
        %v625 = vsub.s32 %v622, %v624
        %v626 = vrot.slane %v610, %v625
        %v628 = vunpack.c.l.s4 1966171168
        %v629 = vunpack.c.0.s8 %v628
        %v630 = vlaneseq
        %v631 = vshrl.u32 %v630, 7
        %v632 = vsub.s32 %v629, %v631
        %v633 = vrot.slane %v611, %v632
        %v635 = vunpack.c.l.s4 1966171168
        %v636 = vunpack.c.0.s8 %v635
        %v637 = vlaneseq
        %v638 = vshrl.u32 %v637, 7
        %v639 = vsub.s32 %v636, %v638
        %v640 = vrot.slane %v612, %v639
        %v641 = vcombine.high %v619, %v619
        %v642 = vcombine.high %v626, %v626
        %v643 = vcombine.high %v633, %v633
        %v644 = vcombine.high %v640, %v640
        %653 = vst.msk [vmem:[%s177 + $0x1] sm:$0x1] %vm425, %v619
        %654 = vst.msk [vmem:[%s177 + $0x11] sm:$0x1] %vm425, %v633
        %655 = vst.msk [vmem:[%s177 + $0x21] sm:$0x1] %vm425, %v641
        %656 = vst.msk [vmem:[%s177 + $0x31] sm:$0x1] %vm425, %v643
        %657 = vst.msk [vmem:[%s177 + $0x41] sm:$0x1] %vm425, %v626
        %658 = vst.msk [vmem:[%s177 + $0x51] sm:$0x1] %vm425, %v640
        %659 = vst.msk [vmem:[%s177 + $0x61] sm:$0x1] %vm425, %v642
        %660 = vst.msk [vmem:[%s177 + $0x71] sm:$0x1] %vm425, %v644
        %v661 = vld [vmem:[%s199] sm:$0x1]
        %v662 = vld [vmem:[%s199 + $0x18] sm:$0x1]
        %v663 = vld [vmem:[%s199 + $0x30] sm:$0x1]
        %v664 = vld [vmem:[%s199 + $0x48] sm:$0x1]
        %v665 = vld [vmem:[%s443] sm:$0x1]
        %v666 = vld [vmem:[%s443 + $0x18] sm:$0x1]
        %v667 = vld [vmem:[%s443 + $0x30] sm:$0x1]
        %v668 = vld [vmem:[%s443 + $0x48] sm:$0x1]
        %s669 = sadd.s32 %s184, 4
        %s670 = scalar_lea.vmem %s182, %s669
        %v671 = vld [vmem:[%s670] sm:$0x1]
        %v672 = vld [vmem:[%s670 + $0x18] sm:$0x1]
        %v673 = vld [vmem:[%s670 + $0x30] sm:$0x1]
        %v674 = vld [vmem:[%s670 + $0x48] sm:$0x1]
        %v679 = vrot.slane %v662, 7
        %v680 = vsel %vm209, %v679, %v661
        %v681 = vrot.slane %v663, 6
        %v682 = vsel %vm212, %v681, %v680
        %v683 = vrot.slane %v664, 5
        %v684 = vsel %vm215, %v683, %v682
        %v686 = vrot.slane %v661, 4
        %v687 = vrot.slane %v662, 3
        %v688 = vsel %vm220, %v687, %v686
        %v689 = vrot.slane %v663, 2
        %v690 = vsel %vm223, %v689, %v688
        %v691 = vrot.slane %v664, 1
        %v692 = vsel %vm226, %v691, %v690
        %693 = vrot.lane.b32.xlu0 %v692, 127
        %v694 = vpop.permute.xlu0 %693
        %696 = vrot.lane.b32.xlu0 %v684, 126
        %v697 = vpop.permute.xlu0 %696
        %v703 = vrot.slane %v665, 4
        %v704 = vrot.slane %v666, 3
        %v705 = vsel %vm220, %v704, %v703
        %v706 = vrot.slane %v667, 2
        %v707 = vsel %vm223, %v706, %v705
        %v708 = vrot.slane %v668, 1
        %v709 = vsel %vm226, %v708, %v707
        %v711 = vrot.slane %v666, 7
        %v712 = vsel %vm209, %v711, %v665
        %v713 = vrot.slane %v667, 6
        %v714 = vsel %vm212, %v713, %v712
        %v715 = vrot.slane %v668, 5
        %v716 = vsel %vm215, %v715, %v714
        %717 = vrot.lane.b32.xlu0 %v716, 127
        %v718 = vpop.permute.xlu0 %717
        %720 = vrot.lane.b32.xlu0 %v709, 126
        %v721 = vpop.permute.xlu0 %720
        %v727 = vrot.slane %v672, 7
        %v728 = vsel %vm209, %v727, %v671
        %v729 = vrot.slane %v673, 6
        %v730 = vsel %vm212, %v729, %v728
        %v731 = vrot.slane %v674, 5
        %v732 = vsel %vm215, %v731, %v730
        %v734 = vrot.slane %v671, 4
        %v735 = vrot.slane %v672, 3
        %v736 = vsel %vm220, %v735, %v734
        %v737 = vrot.slane %v673, 2
        %v738 = vsel %vm223, %v737, %v736
        %v739 = vrot.slane %v674, 1
        %v740 = vsel %vm226, %v739, %v738
        %741 = vrot.lane.b32.xlu0 %v740, 127
        %v742 = vpop.permute.xlu0 %741
        %744 = vrot.lane.b32.xlu0 %v732, 126
        %v745 = vpop.permute.xlu0 %744
        %v746 = vsel %vm281, %v684, %v694
        %v747 = vsel %vm281, %v697, %v709
        %v748 = vsel %vm281, %v718, %v721
        %v749 = vsel %vm281, %v732, %v742
        %v750 = vsel %vm281, %v745, 0
        %752 = vmatprep.subr.mxu0 0.0
        %753 = vmatpush1.msra.mxu0 0.0
        %754 = vmatprep.subr.mxu0 0.0
        %755 = vmatpush1.msra.mxu0 0.0
        %756 = vmatprep.subr.mxu0 0.0
        %757 = vmatpush1.msra.mxu0 0.0
        %758 = vmatprep.subr.mxu0 0.0
        %759 = vmatpush1.msra.mxu0 0.0
        %760 = vmatprep.subr.mxu0 0.0
        %761 = vmatpush1.msra.mxu0 0.0
        %762 = vmatprep.subr.mxu0 0.0
        %763 = vmatpush1.msra.mxu0 0.0
        %764 = vmatprep.subr.mxu0 0.0
        %765 = vmatpush1.msra.mxu0 0.0
        %766 = vmatprep.subr.mxu0 0.0
        %767 = vmatpush1.msra.mxu0 0.0
        %768 = vmatprep.subr.mxu0 0.0
        %769 = vmatpush1.msra.mxu0 0.0
        %770 = vmatprep.subr.mxu0 0.0
        %771 = vmatpush1.msra.mxu0 0.0
        %772 = vmatprep.subr.mxu0 0.0
        %773 = vmatpush1.msra.mxu0 0.0
        %774 = vmatprep.subr.mxu0 0.0
        %775 = vmatpush1.msra.mxu0 %v750
        %776 = vmatprep.subr.mxu0 0.0
        %777 = vmatpush1.msra.mxu0 %v749
        %778 = vmatprep.subr.mxu0 0.0
        %779 = vmatpush1.msra.mxu0 %v748
        %780 = vmatprep.subr.mxu0 0.0
        %781 = vmatpush1.msra.mxu0 %v747
        %782 = vmatprep.subr.mxu0 0.0
        %783 = vmatpush1.msra.mxu0 %v746
        %784 = vmatprep.subr.mxu0 0.0
        %785 = vmatpush2.msra.mxu0 0.0
        %786 = vmatprep.subr.mxu0 0.0
        %787 = vmatpush2.msra.mxu0 0.0
        %788 = vmatprep.subr.mxu0 0.0
        %789 = vmatpush2.msra.mxu0 0.0
        %790 = vmatprep.subr.mxu0 0.0
        %791 = vmatpush2.msra.mxu0 0.0
        %792 = vmatprep.subr.mxu0 0.0
        %793 = vmatpush2.msra.mxu0 0.0
        %794 = vmatprep.subr.mxu0 0.0
        %795 = vmatpush2.msra.mxu0 0.0
        %796 = vmatprep.subr.mxu0 0.0
        %797 = vmatpush2.msra.mxu0 0.0
        %798 = vmatprep.subr.mxu0 0.0
        %799 = vmatpush2.msra.mxu0 0.0
        %800 = vmatprep.subr.mxu0 0.0
        %801 = vmatpush2.msra.mxu0 0.0
        %802 = vmatprep.subr.mxu0 0.0
        %803 = vmatpush2.msra.mxu0 0.0
        %804 = vmatprep.subr.mxu0 0.0
        %805 = vmatpush2.msra.mxu0 0.0
        %806 = vmatprep.subr.mxu0 0.0
        %807 = vmatpush2.msra.mxu0 0.0
        %808 = vmatprep.subr.mxu0 0.0
        %809 = vmatpush2.msra.mxu0 0.0
        %810 = vmatprep.subr.mxu0 0.0
        %811 = vmatpush2.msra.mxu0 0.0
        %812 = vmatprep.subr.mxu0 0.0
        %813 = vmatpush2.msra.mxu0 0.0
        %814 = vmatprep.subr.mxu0 0.0
        %815 = vmatpush2.msra.mxu0 0.0
        %816 = vmatprep.mubr.f32.mxu0 0.0
        %817 = vmatmul.mubr.f32.gmra.mxu0 %v293
        %v818 = vpop.f32.mrf.mxu0
        %v819 = vadd.f32 %v289, %v818
        %v820 = vpop.f32.mrf.mxu0
        %821 = vdwg.mxu0
        %v823 = vcombine.high %v819, %v819
        %v825 = vunpack.c.l.s4 1966171168
        %v826 = vunpack.c.0.s8 %v825
        %v827 = vlaneseq
        %v828 = vshrl.u32 %v827, 7
        %v829 = vsub.s32 %v826, %v828
        %v830 = vrot.slane %v819, %v829
        %v832 = vunpack.c.l.s4 1966171168
        %v833 = vunpack.c.0.s8 %v832
        %v834 = vlaneseq
        %v835 = vshrl.u32 %v834, 7
        %v836 = vsub.s32 %v833, %v835
        %v837 = vrot.slane %v823, %v836
        %v838 = vcombine.high %v830, %v830
        %v839 = vcombine.high %v837, %v837
        %v841 = vunpack.c.l.s4 1966171168
        %v842 = vunpack.c.0.s8 %v841
        %v843 = vlaneseq
        %v844 = vshrl.u32 %v843, 7
        %v845 = vsub.s32 %v842, %v844
        %v846 = vrot.slane %v830, %v845
        %v848 = vunpack.c.l.s4 1966171168
        %v849 = vunpack.c.0.s8 %v848
        %v850 = vlaneseq
        %v851 = vshrl.u32 %v850, 7
        %v852 = vsub.s32 %v849, %v851
        %v853 = vrot.slane %v837, %v852
        %v855 = vunpack.c.l.s4 1966171168
        %v856 = vunpack.c.0.s8 %v855
        %v857 = vlaneseq
        %v858 = vshrl.u32 %v857, 7
        %v859 = vsub.s32 %v856, %v858
        %v860 = vrot.slane %v838, %v859
        %v862 = vunpack.c.l.s4 1966171168
        %v863 = vunpack.c.0.s8 %v862
        %v864 = vlaneseq
        %v865 = vshrl.u32 %v864, 7
        %v866 = vsub.s32 %v863, %v865
        %v867 = vrot.slane %v839, %v866
        %v868 = vcombine.high %v846, %v846
        %v869 = vcombine.high %v853, %v853
        %v870 = vcombine.high %v860, %v860
        %v871 = vcombine.high %v867, %v867
        %880 = vst.msk [vmem:[%s177 + $0x2] sm:$0x1] %vm425, %v846
        %881 = vst.msk [vmem:[%s177 + $0x12] sm:$0x1] %vm425, %v860
        %882 = vst.msk [vmem:[%s177 + $0x22] sm:$0x1] %vm425, %v868
        %883 = vst.msk [vmem:[%s177 + $0x32] sm:$0x1] %vm425, %v870
        %884 = vst.msk [vmem:[%s177 + $0x42] sm:$0x1] %vm425, %v853
        %885 = vst.msk [vmem:[%s177 + $0x52] sm:$0x1] %vm425, %v867
        %886 = vst.msk [vmem:[%s177 + $0x62] sm:$0x1] %vm425, %v869
        %887 = vst.msk [vmem:[%s177 + $0x72] sm:$0x1] %vm425, %v871
        %v888 = vld [vmem:[%s443] sm:$0x1]
        %v889 = vld [vmem:[%s443 + $0x18] sm:$0x1]
        %v890 = vld [vmem:[%s443 + $0x30] sm:$0x1]
        %v891 = vld [vmem:[%s443 + $0x48] sm:$0x1]
        %v892 = vld [vmem:[%s670] sm:$0x1]
        %v893 = vld [vmem:[%s670 + $0x18] sm:$0x1]
        %v894 = vld [vmem:[%s670 + $0x30] sm:$0x1]
        %v895 = vld [vmem:[%s670 + $0x48] sm:$0x1]
        %s896 = sadd.s32 %s184, 5
        %s897 = scalar_lea.vmem %s182, %s896
        %v898 = vld [vmem:[%s897] sm:$0x1]
        %v899 = vld [vmem:[%s897 + $0x18] sm:$0x1]
        %v900 = vld [vmem:[%s897 + $0x30] sm:$0x1]
        %v901 = vld [vmem:[%s897 + $0x48] sm:$0x1]
        %v906 = vrot.slane %v889, 7
        %v907 = vsel %vm209, %v906, %v888
        %v908 = vrot.slane %v890, 6
        %v909 = vsel %vm212, %v908, %v907
        %v910 = vrot.slane %v891, 5
        %v911 = vsel %vm215, %v910, %v909
        %v913 = vrot.slane %v888, 4
        %v914 = vrot.slane %v889, 3
        %v915 = vsel %vm220, %v914, %v913
        %v916 = vrot.slane %v890, 2
        %v917 = vsel %vm223, %v916, %v915
        %v918 = vrot.slane %v891, 1
        %v919 = vsel %vm226, %v918, %v917
        %920 = vrot.lane.b32.xlu0 %v919, 127
        %v921 = vpop.permute.xlu0 %920
        %923 = vrot.lane.b32.xlu0 %v911, 126
        %v924 = vpop.permute.xlu0 %923
        %v930 = vrot.slane %v892, 4
        %v931 = vrot.slane %v893, 3
        %v932 = vsel %vm220, %v931, %v930
        %v933 = vrot.slane %v894, 2
        %v934 = vsel %vm223, %v933, %v932
        %v935 = vrot.slane %v895, 1
        %v936 = vsel %vm226, %v935, %v934
        %v938 = vrot.slane %v893, 7
        %v939 = vsel %vm209, %v938, %v892
        %v940 = vrot.slane %v894, 6
        %v941 = vsel %vm212, %v940, %v939
        %v942 = vrot.slane %v895, 5
        %v943 = vsel %vm215, %v942, %v941
        %944 = vrot.lane.b32.xlu0 %v943, 127
        %v945 = vpop.permute.xlu0 %944
        %947 = vrot.lane.b32.xlu0 %v936, 126
        %v948 = vpop.permute.xlu0 %947
        %v954 = vrot.slane %v899, 7
        %v955 = vsel %vm209, %v954, %v898
        %v956 = vrot.slane %v900, 6
        %v957 = vsel %vm212, %v956, %v955
        %v958 = vrot.slane %v901, 5
        %v959 = vsel %vm215, %v958, %v957
        %v961 = vrot.slane %v898, 4
        %v962 = vrot.slane %v899, 3
        %v963 = vsel %vm220, %v962, %v961
        %v964 = vrot.slane %v900, 2
        %v965 = vsel %vm223, %v964, %v963
        %v966 = vrot.slane %v901, 1
        %v967 = vsel %vm226, %v966, %v965
        %968 = vrot.lane.b32.xlu0 %v967, 127
        %v969 = vpop.permute.xlu0 %968
        %971 = vrot.lane.b32.xlu0 %v959, 126
        %v972 = vpop.permute.xlu0 %971
        %v973 = vsel %vm281, %v911, %v921
        %v974 = vsel %vm281, %v924, %v936
        %v975 = vsel %vm281, %v945, %v948
        %v976 = vsel %vm281, %v959, %v969
        %v977 = vsel %vm281, %v972, 0
        %979 = vmatprep.subr.mxu0 0.0
        %980 = vmatpush1.msra.mxu0 0.0
        %981 = vmatprep.subr.mxu0 0.0
        %982 = vmatpush1.msra.mxu0 0.0
        %983 = vmatprep.subr.mxu0 0.0
        %984 = vmatpush1.msra.mxu0 0.0
        %985 = vmatprep.subr.mxu0 0.0
        %986 = vmatpush1.msra.mxu0 0.0
        %987 = vmatprep.subr.mxu0 0.0
        %988 = vmatpush1.msra.mxu0 0.0
        %989 = vmatprep.subr.mxu0 0.0
        %990 = vmatpush1.msra.mxu0 0.0
        %991 = vmatprep.subr.mxu0 0.0
        %992 = vmatpush1.msra.mxu0 0.0
        %993 = vmatprep.subr.mxu0 0.0
        %994 = vmatpush1.msra.mxu0 0.0
        %995 = vmatprep.subr.mxu0 0.0
        %996 = vmatpush1.msra.mxu0 0.0
        %997 = vmatprep.subr.mxu0 0.0
        %998 = vmatpush1.msra.mxu0 0.0
        %999 = vmatprep.subr.mxu0 0.0
        %1000 = vmatpush1.msra.mxu0 0.0
        %1001 = vmatprep.subr.mxu0 0.0
        %1002 = vmatpush1.msra.mxu0 %v977
        %1003 = vmatprep.subr.mxu0 0.0
        %1004 = vmatpush1.msra.mxu0 %v976
        %1005 = vmatprep.subr.mxu0 0.0
        %1006 = vmatpush1.msra.mxu0 %v975
        %1007 = vmatprep.subr.mxu0 0.0
        %1008 = vmatpush1.msra.mxu0 %v974
        %1009 = vmatprep.subr.mxu0 0.0
        %1010 = vmatpush1.msra.mxu0 %v973
        %1011 = vmatprep.subr.mxu0 0.0
        %1012 = vmatpush2.msra.mxu0 0.0
        %1013 = vmatprep.subr.mxu0 0.0
        %1014 = vmatpush2.msra.mxu0 0.0
        %1015 = vmatprep.subr.mxu0 0.0
        %1016 = vmatpush2.msra.mxu0 0.0
        %1017 = vmatprep.subr.mxu0 0.0
        %1018 = vmatpush2.msra.mxu0 0.0
        %1019 = vmatprep.subr.mxu0 0.0
        %1020 = vmatpush2.msra.mxu0 0.0
        %1021 = vmatprep.subr.mxu0 0.0
        %1022 = vmatpush2.msra.mxu0 0.0
        %1023 = vmatprep.subr.mxu0 0.0
        %1024 = vmatpush2.msra.mxu0 0.0
        %1025 = vmatprep.subr.mxu0 0.0
        %1026 = vmatpush2.msra.mxu0 0.0
        %1027 = vmatprep.subr.mxu0 0.0
        %1028 = vmatpush2.msra.mxu0 0.0
        %1029 = vmatprep.subr.mxu0 0.0
        %1030 = vmatpush2.msra.mxu0 0.0
        %1031 = vmatprep.subr.mxu0 0.0
        %1032 = vmatpush2.msra.mxu0 0.0
        %1033 = vmatprep.subr.mxu0 0.0
        %1034 = vmatpush2.msra.mxu0 0.0
        %1035 = vmatprep.subr.mxu0 0.0
        %1036 = vmatpush2.msra.mxu0 0.0
        %1037 = vmatprep.subr.mxu0 0.0
        %1038 = vmatpush2.msra.mxu0 0.0
        %1039 = vmatprep.subr.mxu0 0.0
        %1040 = vmatpush2.msra.mxu0 0.0
        %1041 = vmatprep.subr.mxu0 0.0
        %1042 = vmatpush2.msra.mxu0 0.0
        %1043 = vmatprep.mubr.f32.mxu0 0.0
        %1044 = vmatmul.mubr.f32.gmra.mxu0 %v293
        %v1045 = vpop.f32.mrf.mxu0
        %v1046 = vadd.f32 %v289, %v1045
        %v1047 = vpop.f32.mrf.mxu0
        %1048 = vdwg.mxu0
        %v1050 = vcombine.high %v1046, %v1046
        %v1052 = vunpack.c.l.s4 1966171168
        %v1053 = vunpack.c.0.s8 %v1052
        %v1054 = vlaneseq
        %v1055 = vshrl.u32 %v1054, 7
        %v1056 = vsub.s32 %v1053, %v1055
        %v1057 = vrot.slane %v1046, %v1056
        %v1059 = vunpack.c.l.s4 1966171168
        %v1060 = vunpack.c.0.s8 %v1059
        %v1061 = vlaneseq
        %v1062 = vshrl.u32 %v1061, 7
        %v1063 = vsub.s32 %v1060, %v1062
        %v1064 = vrot.slane %v1050, %v1063
        %v1065 = vcombine.high %v1057, %v1057
        %v1066 = vcombine.high %v1064, %v1064
        %v1068 = vunpack.c.l.s4 1966171168
        %v1069 = vunpack.c.0.s8 %v1068
        %v1070 = vlaneseq
        %v1071 = vshrl.u32 %v1070, 7
        %v1072 = vsub.s32 %v1069, %v1071
        %v1073 = vrot.slane %v1057, %v1072
        %v1075 = vunpack.c.l.s4 1966171168
        %v1076 = vunpack.c.0.s8 %v1075
        %v1077 = vlaneseq
        %v1078 = vshrl.u32 %v1077, 7
        %v1079 = vsub.s32 %v1076, %v1078
        %v1080 = vrot.slane %v1064, %v1079
        %v1082 = vunpack.c.l.s4 1966171168
        %v1083 = vunpack.c.0.s8 %v1082
        %v1084 = vlaneseq
        %v1085 = vshrl.u32 %v1084, 7
        %v1086 = vsub.s32 %v1083, %v1085
        %v1087 = vrot.slane %v1065, %v1086
        %v1089 = vunpack.c.l.s4 1966171168
        %v1090 = vunpack.c.0.s8 %v1089
        %v1091 = vlaneseq
        %v1092 = vshrl.u32 %v1091, 7
        %v1093 = vsub.s32 %v1090, %v1092
        %v1094 = vrot.slane %v1066, %v1093
        %v1095 = vcombine.high %v1073, %v1073
        %v1096 = vcombine.high %v1080, %v1080
        %v1097 = vcombine.high %v1087, %v1087
        %v1098 = vcombine.high %v1094, %v1094
        %1107 = vst.msk [vmem:[%s177 + $0x3] sm:$0x1] %vm425, %v1073
        %1108 = vst.msk [vmem:[%s177 + $0x13] sm:$0x1] %vm425, %v1087
        %1109 = vst.msk [vmem:[%s177 + $0x23] sm:$0x1] %vm425, %v1095
        %1110 = vst.msk [vmem:[%s177 + $0x33] sm:$0x1] %vm425, %v1097
        %1111 = vst.msk [vmem:[%s177 + $0x43] sm:$0x1] %vm425, %v1080
        %1112 = vst.msk [vmem:[%s177 + $0x53] sm:$0x1] %vm425, %v1094
        %1113 = vst.msk [vmem:[%s177 + $0x63] sm:$0x1] %vm425, %v1096
        %1114 = vst.msk [vmem:[%s177 + $0x73] sm:$0x1] %vm425, %v1098
        %v1115 = vld [vmem:[%s670] sm:$0x1]
        %v1116 = vld [vmem:[%s670 + $0x18] sm:$0x1]
        %v1117 = vld [vmem:[%s670 + $0x30] sm:$0x1]
        %v1118 = vld [vmem:[%s670 + $0x48] sm:$0x1]
        %v1119 = vld [vmem:[%s897] sm:$0x1]
        %v1120 = vld [vmem:[%s897 + $0x18] sm:$0x1]
        %v1121 = vld [vmem:[%s897 + $0x30] sm:$0x1]
        %v1122 = vld [vmem:[%s897 + $0x48] sm:$0x1]
        %s1123 = sadd.s32 %s184, 6
        %s1124 = scalar_lea.vmem %s182, %s1123
        %v1125 = vld [vmem:[%s1124] sm:$0x1]
        %v1126 = vld [vmem:[%s1124 + $0x18] sm:$0x1]
        %v1127 = vld [vmem:[%s1124 + $0x30] sm:$0x1]
        %v1128 = vld [vmem:[%s1124 + $0x48] sm:$0x1]
        %v1133 = vrot.slane %v1116, 7
        %v1134 = vsel %vm209, %v1133, %v1115
        %v1135 = vrot.slane %v1117, 6
        %v1136 = vsel %vm212, %v1135, %v1134
        %v1137 = vrot.slane %v1118, 5
        %v1138 = vsel %vm215, %v1137, %v1136
        %v1140 = vrot.slane %v1115, 4
        %v1141 = vrot.slane %v1116, 3
        %v1142 = vsel %vm220, %v1141, %v1140
        %v1143 = vrot.slane %v1117, 2
        %v1144 = vsel %vm223, %v1143, %v1142
        %v1145 = vrot.slane %v1118, 1
        %v1146 = vsel %vm226, %v1145, %v1144
        %1147 = vrot.lane.b32.xlu0 %v1146, 127
        %v1148 = vpop.permute.xlu0 %1147
        %1150 = vrot.lane.b32.xlu0 %v1138, 126
        %v1151 = vpop.permute.xlu0 %1150
        %v1157 = vrot.slane %v1119, 4
        %v1158 = vrot.slane %v1120, 3
        %v1159 = vsel %vm220, %v1158, %v1157
        %v1160 = vrot.slane %v1121, 2
        %v1161 = vsel %vm223, %v1160, %v1159
        %v1162 = vrot.slane %v1122, 1
        %v1163 = vsel %vm226, %v1162, %v1161
        %v1165 = vrot.slane %v1120, 7
        %v1166 = vsel %vm209, %v1165, %v1119
        %v1167 = vrot.slane %v1121, 6
        %v1168 = vsel %vm212, %v1167, %v1166
        %v1169 = vrot.slane %v1122, 5
        %v1170 = vsel %vm215, %v1169, %v1168
        %1171 = vrot.lane.b32.xlu0 %v1170, 127
        %v1172 = vpop.permute.xlu0 %1171
        %1174 = vrot.lane.b32.xlu0 %v1163, 126
        %v1175 = vpop.permute.xlu0 %1174
        %v1181 = vrot.slane %v1126, 7
        %v1182 = vsel %vm209, %v1181, %v1125
        %v1183 = vrot.slane %v1127, 6
        %v1184 = vsel %vm212, %v1183, %v1182
        %v1185 = vrot.slane %v1128, 5
        %v1186 = vsel %vm215, %v1185, %v1184
        %v1188 = vrot.slane %v1125, 4
        %v1189 = vrot.slane %v1126, 3
        %v1190 = vsel %vm220, %v1189, %v1188
        %v1191 = vrot.slane %v1127, 2
        %v1192 = vsel %vm223, %v1191, %v1190
        %v1193 = vrot.slane %v1128, 1
        %v1194 = vsel %vm226, %v1193, %v1192
        %1195 = vrot.lane.b32.xlu0 %v1194, 127
        %v1196 = vpop.permute.xlu0 %1195
        %1198 = vrot.lane.b32.xlu0 %v1186, 126
        %v1199 = vpop.permute.xlu0 %1198
        %v1200 = vsel %vm281, %v1138, %v1148
        %v1201 = vsel %vm281, %v1151, %v1163
        %v1202 = vsel %vm281, %v1172, %v1175
        %v1203 = vsel %vm281, %v1186, %v1196
        %v1204 = vsel %vm281, %v1199, 0
        %1206 = vmatprep.subr.mxu0 0.0
        %1207 = vmatpush1.msra.mxu0 0.0
        %1208 = vmatprep.subr.mxu0 0.0
        %1209 = vmatpush1.msra.mxu0 0.0
        %1210 = vmatprep.subr.mxu0 0.0
        %1211 = vmatpush1.msra.mxu0 0.0
        %1212 = vmatprep.subr.mxu0 0.0
        %1213 = vmatpush1.msra.mxu0 0.0
        %1214 = vmatprep.subr.mxu0 0.0
        %1215 = vmatpush1.msra.mxu0 0.0
        %1216 = vmatprep.subr.mxu0 0.0
        %1217 = vmatpush1.msra.mxu0 0.0
        %1218 = vmatprep.subr.mxu0 0.0
        %1219 = vmatpush1.msra.mxu0 0.0
        %1220 = vmatprep.subr.mxu0 0.0
        %1221 = vmatpush1.msra.mxu0 0.0
        %1222 = vmatprep.subr.mxu0 0.0
        %1223 = vmatpush1.msra.mxu0 0.0
        %1224 = vmatprep.subr.mxu0 0.0
        %1225 = vmatpush1.msra.mxu0 0.0
        %1226 = vmatprep.subr.mxu0 0.0
        %1227 = vmatpush1.msra.mxu0 0.0
        %1228 = vmatprep.subr.mxu0 0.0
        %1229 = vmatpush1.msra.mxu0 %v1204
        %1230 = vmatprep.subr.mxu0 0.0
        %1231 = vmatpush1.msra.mxu0 %v1203
        %1232 = vmatprep.subr.mxu0 0.0
        %1233 = vmatpush1.msra.mxu0 %v1202
        %1234 = vmatprep.subr.mxu0 0.0
        %1235 = vmatpush1.msra.mxu0 %v1201
        %1236 = vmatprep.subr.mxu0 0.0
        %1237 = vmatpush1.msra.mxu0 %v1200
        %1238 = vmatprep.subr.mxu0 0.0
        %1239 = vmatpush2.msra.mxu0 0.0
        %1240 = vmatprep.subr.mxu0 0.0
        %1241 = vmatpush2.msra.mxu0 0.0
        %1242 = vmatprep.subr.mxu0 0.0
        %1243 = vmatpush2.msra.mxu0 0.0
        %1244 = vmatprep.subr.mxu0 0.0
        %1245 = vmatpush2.msra.mxu0 0.0
        %1246 = vmatprep.subr.mxu0 0.0
        %1247 = vmatpush2.msra.mxu0 0.0
        %1248 = vmatprep.subr.mxu0 0.0
        %1249 = vmatpush2.msra.mxu0 0.0
        %1250 = vmatprep.subr.mxu0 0.0
        %1251 = vmatpush2.msra.mxu0 0.0
        %1252 = vmatprep.subr.mxu0 0.0
        %1253 = vmatpush2.msra.mxu0 0.0
        %1254 = vmatprep.subr.mxu0 0.0
        %1255 = vmatpush2.msra.mxu0 0.0
        %1256 = vmatprep.subr.mxu0 0.0
        %1257 = vmatpush2.msra.mxu0 0.0
        %1258 = vmatprep.subr.mxu0 0.0
        %1259 = vmatpush2.msra.mxu0 0.0
        %1260 = vmatprep.subr.mxu0 0.0
        %1261 = vmatpush2.msra.mxu0 0.0
        %1262 = vmatprep.subr.mxu0 0.0
        %1263 = vmatpush2.msra.mxu0 0.0
        %1264 = vmatprep.subr.mxu0 0.0
        %1265 = vmatpush2.msra.mxu0 0.0
        %1266 = vmatprep.subr.mxu0 0.0
        %1267 = vmatpush2.msra.mxu0 0.0
        %1268 = vmatprep.subr.mxu0 0.0
        %1269 = vmatpush2.msra.mxu0 0.0
        %1270 = vmatprep.mubr.f32.mxu0 0.0
        %1271 = vmatmul.mubr.f32.gmra.mxu0 %v293
        %v1272 = vpop.f32.mrf.mxu0
        %v1273 = vadd.f32 %v289, %v1272
        %v1274 = vpop.f32.mrf.mxu0
        %1275 = vdwg.mxu0
        %v1277 = vcombine.high %v1273, %v1273
        %v1279 = vunpack.c.l.s4 1966171168
        %v1280 = vunpack.c.0.s8 %v1279
        %v1281 = vlaneseq
        %v1282 = vshrl.u32 %v1281, 7
        %v1283 = vsub.s32 %v1280, %v1282
        %v1284 = vrot.slane %v1273, %v1283
        %v1286 = vunpack.c.l.s4 1966171168
        %v1287 = vunpack.c.0.s8 %v1286
        %v1288 = vlaneseq
        %v1289 = vshrl.u32 %v1288, 7
        %v1290 = vsub.s32 %v1287, %v1289
        %v1291 = vrot.slane %v1277, %v1290
        %v1292 = vcombine.high %v1284, %v1284
        %v1293 = vcombine.high %v1291, %v1291
        %v1295 = vunpack.c.l.s4 1966171168
        %v1296 = vunpack.c.0.s8 %v1295
        %v1297 = vlaneseq
        %v1298 = vshrl.u32 %v1297, 7
        %v1299 = vsub.s32 %v1296, %v1298
        %v1300 = vrot.slane %v1284, %v1299
        %v1302 = vunpack.c.l.s4 1966171168
        %v1303 = vunpack.c.0.s8 %v1302
        %v1304 = vlaneseq
        %v1305 = vshrl.u32 %v1304, 7
        %v1306 = vsub.s32 %v1303, %v1305
        %v1307 = vrot.slane %v1291, %v1306
        %v1309 = vunpack.c.l.s4 1966171168
        %v1310 = vunpack.c.0.s8 %v1309
        %v1311 = vlaneseq
        %v1312 = vshrl.u32 %v1311, 7
        %v1313 = vsub.s32 %v1310, %v1312
        %v1314 = vrot.slane %v1292, %v1313
        %v1316 = vunpack.c.l.s4 1966171168
        %v1317 = vunpack.c.0.s8 %v1316
        %v1318 = vlaneseq
        %v1319 = vshrl.u32 %v1318, 7
        %v1320 = vsub.s32 %v1317, %v1319
        %v1321 = vrot.slane %v1293, %v1320
        %v1322 = vcombine.high %v1300, %v1300
        %v1323 = vcombine.high %v1307, %v1307
        %v1324 = vcombine.high %v1314, %v1314
        %v1325 = vcombine.high %v1321, %v1321
        %1334 = vst.msk [vmem:[%s177 + $0x4] sm:$0x1] %vm425, %v1300
        %1335 = vst.msk [vmem:[%s177 + $0x14] sm:$0x1] %vm425, %v1314
        %1336 = vst.msk [vmem:[%s177 + $0x24] sm:$0x1] %vm425, %v1322
        %1337 = vst.msk [vmem:[%s177 + $0x34] sm:$0x1] %vm425, %v1324
        %1338 = vst.msk [vmem:[%s177 + $0x44] sm:$0x1] %vm425, %v1307
        %1339 = vst.msk [vmem:[%s177 + $0x54] sm:$0x1] %vm425, %v1321
        %1340 = vst.msk [vmem:[%s177 + $0x64] sm:$0x1] %vm425, %v1323
        %1341 = vst.msk [vmem:[%s177 + $0x74] sm:$0x1] %vm425, %v1325
        %v1342 = vld [vmem:[%s897] sm:$0x1]
        %v1343 = vld [vmem:[%s897 + $0x18] sm:$0x1]
        %v1344 = vld [vmem:[%s897 + $0x30] sm:$0x1]
        %v1345 = vld [vmem:[%s897 + $0x48] sm:$0x1]
        %v1346 = vld [vmem:[%s1124] sm:$0x1]
        %v1347 = vld [vmem:[%s1124 + $0x18] sm:$0x1]
        %v1348 = vld [vmem:[%s1124 + $0x30] sm:$0x1]
        %v1349 = vld [vmem:[%s1124 + $0x48] sm:$0x1]
        %s1350 = sadd.s32 %s184, 7
        %s1351 = scalar_lea.vmem %s182, %s1350
        %v1352 = vld [vmem:[%s1351] sm:$0x1]
        %v1353 = vld [vmem:[%s1351 + $0x18] sm:$0x1]
        %v1354 = vld [vmem:[%s1351 + $0x30] sm:$0x1]
        %v1355 = vld [vmem:[%s1351 + $0x48] sm:$0x1]
        %v1360 = vrot.slane %v1343, 7
        %v1361 = vsel %vm209, %v1360, %v1342
        %v1362 = vrot.slane %v1344, 6
        %v1363 = vsel %vm212, %v1362, %v1361
        %v1364 = vrot.slane %v1345, 5
        %v1365 = vsel %vm215, %v1364, %v1363
        %v1367 = vrot.slane %v1342, 4
        %v1368 = vrot.slane %v1343, 3
        %v1369 = vsel %vm220, %v1368, %v1367
        %v1370 = vrot.slane %v1344, 2
        %v1371 = vsel %vm223, %v1370, %v1369
        %v1372 = vrot.slane %v1345, 1
        %v1373 = vsel %vm226, %v1372, %v1371
        %1374 = vrot.lane.b32.xlu0 %v1373, 127
        %v1375 = vpop.permute.xlu0 %1374
        %1377 = vrot.lane.b32.xlu0 %v1365, 126
        %v1378 = vpop.permute.xlu0 %1377
        %v1384 = vrot.slane %v1346, 4
        %v1385 = vrot.slane %v1347, 3
        %v1386 = vsel %vm220, %v1385, %v1384
        %v1387 = vrot.slane %v1348, 2
        %v1388 = vsel %vm223, %v1387, %v1386
        %v1389 = vrot.slane %v1349, 1
        %v1390 = vsel %vm226, %v1389, %v1388
        %v1392 = vrot.slane %v1347, 7
        %v1393 = vsel %vm209, %v1392, %v1346
        %v1394 = vrot.slane %v1348, 6
        %v1395 = vsel %vm212, %v1394, %v1393
        %v1396 = vrot.slane %v1349, 5
        %v1397 = vsel %vm215, %v1396, %v1395
        %1398 = vrot.lane.b32.xlu0 %v1397, 127
        %v1399 = vpop.permute.xlu0 %1398
        %1401 = vrot.lane.b32.xlu0 %v1390, 126
        %v1402 = vpop.permute.xlu0 %1401
        %v1408 = vrot.slane %v1353, 7
        %v1409 = vsel %vm209, %v1408, %v1352
        %v1410 = vrot.slane %v1354, 6
        %v1411 = vsel %vm212, %v1410, %v1409
        %v1412 = vrot.slane %v1355, 5
        %v1413 = vsel %vm215, %v1412, %v1411
        %v1415 = vrot.slane %v1352, 4
        %v1416 = vrot.slane %v1353, 3
        %v1417 = vsel %vm220, %v1416, %v1415
        %v1418 = vrot.slane %v1354, 2
        %v1419 = vsel %vm223, %v1418, %v1417
        %v1420 = vrot.slane %v1355, 1
        %v1421 = vsel %vm226, %v1420, %v1419
        %1422 = vrot.lane.b32.xlu0 %v1421, 127
        %v1423 = vpop.permute.xlu0 %1422
        %1425 = vrot.lane.b32.xlu0 %v1413, 126
        %v1426 = vpop.permute.xlu0 %1425
        %v1427 = vsel %vm281, %v1365, %v1375
        %v1428 = vsel %vm281, %v1378, %v1390
        %v1429 = vsel %vm281, %v1399, %v1402
        %v1430 = vsel %vm281, %v1413, %v1423
        %v1431 = vsel %vm281, %v1426, 0
        %1433 = vmatprep.subr.mxu0 0.0
        %1434 = vmatpush1.msra.mxu0 0.0
        %1435 = vmatprep.subr.mxu0 0.0
        %1436 = vmatpush1.msra.mxu0 0.0
        %1437 = vmatprep.subr.mxu0 0.0
        %1438 = vmatpush1.msra.mxu0 0.0
        %1439 = vmatprep.subr.mxu0 0.0
        %1440 = vmatpush1.msra.mxu0 0.0
        %1441 = vmatprep.subr.mxu0 0.0
        %1442 = vmatpush1.msra.mxu0 0.0
        %1443 = vmatprep.subr.mxu0 0.0
        %1444 = vmatpush1.msra.mxu0 0.0
        %1445 = vmatprep.subr.mxu0 0.0
        %1446 = vmatpush1.msra.mxu0 0.0
        %1447 = vmatprep.subr.mxu0 0.0
        %1448 = vmatpush1.msra.mxu0 0.0
        %1449 = vmatprep.subr.mxu0 0.0
        %1450 = vmatpush1.msra.mxu0 0.0
        %1451 = vmatprep.subr.mxu0 0.0
        %1452 = vmatpush1.msra.mxu0 0.0
        %1453 = vmatprep.subr.mxu0 0.0
        %1454 = vmatpush1.msra.mxu0 0.0
        %1455 = vmatprep.subr.mxu0 0.0
        %1456 = vmatpush1.msra.mxu0 %v1431
        %1457 = vmatprep.subr.mxu0 0.0
        %1458 = vmatpush1.msra.mxu0 %v1430
        %1459 = vmatprep.subr.mxu0 0.0
        %1460 = vmatpush1.msra.mxu0 %v1429
        %1461 = vmatprep.subr.mxu0 0.0
        %1462 = vmatpush1.msra.mxu0 %v1428
        %1463 = vmatprep.subr.mxu0 0.0
        %1464 = vmatpush1.msra.mxu0 %v1427
        %1465 = vmatprep.subr.mxu0 0.0
        %1466 = vmatpush2.msra.mxu0 0.0
        %1467 = vmatprep.subr.mxu0 0.0
        %1468 = vmatpush2.msra.mxu0 0.0
        %1469 = vmatprep.subr.mxu0 0.0
        %1470 = vmatpush2.msra.mxu0 0.0
        %1471 = vmatprep.subr.mxu0 0.0
        %1472 = vmatpush2.msra.mxu0 0.0
        %1473 = vmatprep.subr.mxu0 0.0
        %1474 = vmatpush2.msra.mxu0 0.0
        %1475 = vmatprep.subr.mxu0 0.0
        %1476 = vmatpush2.msra.mxu0 0.0
        %1477 = vmatprep.subr.mxu0 0.0
        %1478 = vmatpush2.msra.mxu0 0.0
        %1479 = vmatprep.subr.mxu0 0.0
        %1480 = vmatpush2.msra.mxu0 0.0
        %1481 = vmatprep.subr.mxu0 0.0
        %1482 = vmatpush2.msra.mxu0 0.0
        %1483 = vmatprep.subr.mxu0 0.0
        %1484 = vmatpush2.msra.mxu0 0.0
        %1485 = vmatprep.subr.mxu0 0.0
        %1486 = vmatpush2.msra.mxu0 0.0
        %1487 = vmatprep.subr.mxu0 0.0
        %1488 = vmatpush2.msra.mxu0 0.0
        %1489 = vmatprep.subr.mxu0 0.0
        %1490 = vmatpush2.msra.mxu0 0.0
        %1491 = vmatprep.subr.mxu0 0.0
        %1492 = vmatpush2.msra.mxu0 0.0
        %1493 = vmatprep.subr.mxu0 0.0
        %1494 = vmatpush2.msra.mxu0 0.0
        %1495 = vmatprep.subr.mxu0 0.0
        %1496 = vmatpush2.msra.mxu0 0.0
        %1497 = vmatprep.mubr.f32.mxu0 0.0
        %1498 = vmatmul.mubr.f32.gmra.mxu0 %v293
        %v1499 = vpop.f32.mrf.mxu0
        %v1500 = vadd.f32 %v289, %v1499
        %v1501 = vpop.f32.mrf.mxu0
        %1502 = vdwg.mxu0
        %v1504 = vcombine.high %v1500, %v1500
        %v1506 = vunpack.c.l.s4 1966171168
        %v1507 = vunpack.c.0.s8 %v1506
        %v1508 = vlaneseq
        %v1509 = vshrl.u32 %v1508, 7
        %v1510 = vsub.s32 %v1507, %v1509
        %v1511 = vrot.slane %v1500, %v1510
        %v1513 = vunpack.c.l.s4 1966171168
        %v1514 = vunpack.c.0.s8 %v1513
        %v1515 = vlaneseq
        %v1516 = vshrl.u32 %v1515, 7
        %v1517 = vsub.s32 %v1514, %v1516
        %v1518 = vrot.slane %v1504, %v1517
        %v1519 = vcombine.high %v1511, %v1511
        %v1520 = vcombine.high %v1518, %v1518
        %v1522 = vunpack.c.l.s4 1966171168
        %v1523 = vunpack.c.0.s8 %v1522
        %v1524 = vlaneseq
        %v1525 = vshrl.u32 %v1524, 7
        %v1526 = vsub.s32 %v1523, %v1525
        %v1527 = vrot.slane %v1511, %v1526
        %v1529 = vunpack.c.l.s4 1966171168
        %v1530 = vunpack.c.0.s8 %v1529
        %v1531 = vlaneseq
        %v1532 = vshrl.u32 %v1531, 7
        %v1533 = vsub.s32 %v1530, %v1532
        %v1534 = vrot.slane %v1518, %v1533
        %v1536 = vunpack.c.l.s4 1966171168
        %v1537 = vunpack.c.0.s8 %v1536
        %v1538 = vlaneseq
        %v1539 = vshrl.u32 %v1538, 7
        %v1540 = vsub.s32 %v1537, %v1539
        %v1541 = vrot.slane %v1519, %v1540
        %v1543 = vunpack.c.l.s4 1966171168
        %v1544 = vunpack.c.0.s8 %v1543
        %v1545 = vlaneseq
        %v1546 = vshrl.u32 %v1545, 7
        %v1547 = vsub.s32 %v1544, %v1546
        %v1548 = vrot.slane %v1520, %v1547
        %v1549 = vcombine.high %v1527, %v1527
        %v1550 = vcombine.high %v1534, %v1534
        %v1551 = vcombine.high %v1541, %v1541
        %v1552 = vcombine.high %v1548, %v1548
        %1561 = vst.msk [vmem:[%s177 + $0x5] sm:$0x1] %vm425, %v1527
        %1562 = vst.msk [vmem:[%s177 + $0x15] sm:$0x1] %vm425, %v1541
        %1563 = vst.msk [vmem:[%s177 + $0x25] sm:$0x1] %vm425, %v1549
        %1564 = vst.msk [vmem:[%s177 + $0x35] sm:$0x1] %vm425, %v1551
        %1565 = vst.msk [vmem:[%s177 + $0x45] sm:$0x1] %vm425, %v1534
        %1566 = vst.msk [vmem:[%s177 + $0x55] sm:$0x1] %vm425, %v1548
        %1567 = vst.msk [vmem:[%s177 + $0x65] sm:$0x1] %vm425, %v1550
        %1568 = vst.msk [vmem:[%s177 + $0x75] sm:$0x1] %vm425, %v1552
        %v1569 = vld [vmem:[%s1124] sm:$0x1]
        %v1570 = vld [vmem:[%s1124 + $0x18] sm:$0x1]
        %v1571 = vld [vmem:[%s1124 + $0x30] sm:$0x1]
        %v1572 = vld [vmem:[%s1124 + $0x48] sm:$0x1]
        %v1573 = vld [vmem:[%s1351] sm:$0x1]
        %v1574 = vld [vmem:[%s1351 + $0x18] sm:$0x1]
        %v1575 = vld [vmem:[%s1351 + $0x30] sm:$0x1]
        %v1576 = vld [vmem:[%s1351 + $0x48] sm:$0x1]
        %s1577 = sadd.s32 %s184, 8
        %s1578 = scalar_lea.vmem %s182, %s1577
        %v1579 = vld [vmem:[%s1578] sm:$0x1]
        %v1580 = vld [vmem:[%s1578 + $0x18] sm:$0x1]
        %v1581 = vld [vmem:[%s1578 + $0x30] sm:$0x1]
        %v1582 = vld [vmem:[%s1578 + $0x48] sm:$0x1]
        %v1587 = vrot.slane %v1570, 7
        %v1588 = vsel %vm209, %v1587, %v1569
        %v1589 = vrot.slane %v1571, 6
        %v1590 = vsel %vm212, %v1589, %v1588
        %v1591 = vrot.slane %v1572, 5
        %v1592 = vsel %vm215, %v1591, %v1590
        %v1594 = vrot.slane %v1569, 4
        %v1595 = vrot.slane %v1570, 3
        %v1596 = vsel %vm220, %v1595, %v1594
        %v1597 = vrot.slane %v1571, 2
        %v1598 = vsel %vm223, %v1597, %v1596
        %v1599 = vrot.slane %v1572, 1
        %v1600 = vsel %vm226, %v1599, %v1598
        %1601 = vrot.lane.b32.xlu0 %v1600, 127
        %v1602 = vpop.permute.xlu0 %1601
        %1604 = vrot.lane.b32.xlu0 %v1592, 126
        %v1605 = vpop.permute.xlu0 %1604
        %v1611 = vrot.slane %v1573, 4
        %v1612 = vrot.slane %v1574, 3
        %v1613 = vsel %vm220, %v1612, %v1611
        %v1614 = vrot.slane %v1575, 2
        %v1615 = vsel %vm223, %v1614, %v1613
        %v1616 = vrot.slane %v1576, 1
        %v1617 = vsel %vm226, %v1616, %v1615
        %v1619 = vrot.slane %v1574, 7
        %v1620 = vsel %vm209, %v1619, %v1573
        %v1621 = vrot.slane %v1575, 6
        %v1622 = vsel %vm212, %v1621, %v1620
        %v1623 = vrot.slane %v1576, 5
        %v1624 = vsel %vm215, %v1623, %v1622
        %1625 = vrot.lane.b32.xlu0 %v1624, 127
        %v1626 = vpop.permute.xlu0 %1625
        %1628 = vrot.lane.b32.xlu0 %v1617, 126
        %v1629 = vpop.permute.xlu0 %1628
        %v1635 = vrot.slane %v1580, 7
        %v1636 = vsel %vm209, %v1635, %v1579
        %v1637 = vrot.slane %v1581, 6
        %v1638 = vsel %vm212, %v1637, %v1636
        %v1639 = vrot.slane %v1582, 5
        %v1640 = vsel %vm215, %v1639, %v1638
        %v1642 = vrot.slane %v1579, 4
        %v1643 = vrot.slane %v1580, 3
        %v1644 = vsel %vm220, %v1643, %v1642
        %v1645 = vrot.slane %v1581, 2
        %v1646 = vsel %vm223, %v1645, %v1644
        %v1647 = vrot.slane %v1582, 1
        %v1648 = vsel %vm226, %v1647, %v1646
        %1649 = vrot.lane.b32.xlu0 %v1648, 127
        %v1650 = vpop.permute.xlu0 %1649
        %1652 = vrot.lane.b32.xlu0 %v1640, 126
        %v1653 = vpop.permute.xlu0 %1652
        %v1654 = vsel %vm281, %v1592, %v1602
        %v1655 = vsel %vm281, %v1605, %v1617
        %v1656 = vsel %vm281, %v1626, %v1629
        %v1657 = vsel %vm281, %v1640, %v1650
        %v1658 = vsel %vm281, %v1653, 0
        %1660 = vmatprep.subr.mxu0 0.0
        %1661 = vmatpush1.msra.mxu0 0.0
        %1662 = vmatprep.subr.mxu0 0.0
        %1663 = vmatpush1.msra.mxu0 0.0
        %1664 = vmatprep.subr.mxu0 0.0
        %1665 = vmatpush1.msra.mxu0 0.0
        %1666 = vmatprep.subr.mxu0 0.0
        %1667 = vmatpush1.msra.mxu0 0.0
        %1668 = vmatprep.subr.mxu0 0.0
        %1669 = vmatpush1.msra.mxu0 0.0
        %1670 = vmatprep.subr.mxu0 0.0
        %1671 = vmatpush1.msra.mxu0 0.0
        %1672 = vmatprep.subr.mxu0 0.0
        %1673 = vmatpush1.msra.mxu0 0.0
        %1674 = vmatprep.subr.mxu0 0.0
        %1675 = vmatpush1.msra.mxu0 0.0
        %1676 = vmatprep.subr.mxu0 0.0
        %1677 = vmatpush1.msra.mxu0 0.0
        %1678 = vmatprep.subr.mxu0 0.0
        %1679 = vmatpush1.msra.mxu0 0.0
        %1680 = vmatprep.subr.mxu0 0.0
        %1681 = vmatpush1.msra.mxu0 0.0
        %1682 = vmatprep.subr.mxu0 0.0
        %1683 = vmatpush1.msra.mxu0 %v1658
        %1684 = vmatprep.subr.mxu0 0.0
        %1685 = vmatpush1.msra.mxu0 %v1657
        %1686 = vmatprep.subr.mxu0 0.0
        %1687 = vmatpush1.msra.mxu0 %v1656
        %1688 = vmatprep.subr.mxu0 0.0
        %1689 = vmatpush1.msra.mxu0 %v1655
        %1690 = vmatprep.subr.mxu0 0.0
        %1691 = vmatpush1.msra.mxu0 %v1654
        %1692 = vmatprep.subr.mxu0 0.0
        %1693 = vmatpush2.msra.mxu0 0.0
        %1694 = vmatprep.subr.mxu0 0.0
        %1695 = vmatpush2.msra.mxu0 0.0
        %1696 = vmatprep.subr.mxu0 0.0
        %1697 = vmatpush2.msra.mxu0 0.0
        %1698 = vmatprep.subr.mxu0 0.0
        %1699 = vmatpush2.msra.mxu0 0.0
        %1700 = vmatprep.subr.mxu0 0.0
        %1701 = vmatpush2.msra.mxu0 0.0
        %1702 = vmatprep.subr.mxu0 0.0
        %1703 = vmatpush2.msra.mxu0 0.0
        %1704 = vmatprep.subr.mxu0 0.0
        %1705 = vmatpush2.msra.mxu0 0.0
        %1706 = vmatprep.subr.mxu0 0.0
        %1707 = vmatpush2.msra.mxu0 0.0
        %1708 = vmatprep.subr.mxu0 0.0
        %1709 = vmatpush2.msra.mxu0 0.0
        %1710 = vmatprep.subr.mxu0 0.0
        %1711 = vmatpush2.msra.mxu0 0.0
        %1712 = vmatprep.subr.mxu0 0.0
        %1713 = vmatpush2.msra.mxu0 0.0
        %1714 = vmatprep.subr.mxu0 0.0
        %1715 = vmatpush2.msra.mxu0 0.0
        %1716 = vmatprep.subr.mxu0 0.0
        %1717 = vmatpush2.msra.mxu0 0.0
        %1718 = vmatprep.subr.mxu0 0.0
        %1719 = vmatpush2.msra.mxu0 0.0
        %1720 = vmatprep.subr.mxu0 0.0
        %1721 = vmatpush2.msra.mxu0 0.0
        %1722 = vmatprep.subr.mxu0 0.0
        %1723 = vmatpush2.msra.mxu0 0.0
        %1724 = vmatprep.mubr.f32.mxu0 0.0
        %1725 = vmatmul.mubr.f32.gmra.mxu0 %v293
        %v1726 = vpop.f32.mrf.mxu0
        %v1727 = vadd.f32 %v289, %v1726
        %v1728 = vpop.f32.mrf.mxu0
        %1729 = vdwg.mxu0
        %v1731 = vcombine.high %v1727, %v1727
        %v1733 = vunpack.c.l.s4 1966171168
        %v1734 = vunpack.c.0.s8 %v1733
        %v1735 = vlaneseq
        %v1736 = vshrl.u32 %v1735, 7
        %v1737 = vsub.s32 %v1734, %v1736
        %v1738 = vrot.slane %v1727, %v1737
        %v1740 = vunpack.c.l.s4 1966171168
        %v1741 = vunpack.c.0.s8 %v1740
        %v1742 = vlaneseq
        %v1743 = vshrl.u32 %v1742, 7
        %v1744 = vsub.s32 %v1741, %v1743
        %v1745 = vrot.slane %v1731, %v1744
        %v1746 = vcombine.high %v1738, %v1738
        %v1747 = vcombine.high %v1745, %v1745
        %v1749 = vunpack.c.l.s4 1966171168
        %v1750 = vunpack.c.0.s8 %v1749
        %v1751 = vlaneseq
        %v1752 = vshrl.u32 %v1751, 7
        %v1753 = vsub.s32 %v1750, %v1752
        %v1754 = vrot.slane %v1738, %v1753
        %v1756 = vunpack.c.l.s4 1966171168
        %v1757 = vunpack.c.0.s8 %v1756
        %v1758 = vlaneseq
        %v1759 = vshrl.u32 %v1758, 7
        %v1760 = vsub.s32 %v1757, %v1759
        %v1761 = vrot.slane %v1745, %v1760
        %v1763 = vunpack.c.l.s4 1966171168
        %v1764 = vunpack.c.0.s8 %v1763
        %v1765 = vlaneseq
        %v1766 = vshrl.u32 %v1765, 7
        %v1767 = vsub.s32 %v1764, %v1766
        %v1768 = vrot.slane %v1746, %v1767
        %v1770 = vunpack.c.l.s4 1966171168
        %v1771 = vunpack.c.0.s8 %v1770
        %v1772 = vlaneseq
        %v1773 = vshrl.u32 %v1772, 7
        %v1774 = vsub.s32 %v1771, %v1773
        %v1775 = vrot.slane %v1747, %v1774
        %v1776 = vcombine.high %v1754, %v1754
        %v1777 = vcombine.high %v1761, %v1761
        %v1778 = vcombine.high %v1768, %v1768
        %v1779 = vcombine.high %v1775, %v1775
        %1788 = vst.msk [vmem:[%s177 + $0x6] sm:$0x1] %vm425, %v1754
        %1789 = vst.msk [vmem:[%s177 + $0x16] sm:$0x1] %vm425, %v1768
        %1790 = vst.msk [vmem:[%s177 + $0x26] sm:$0x1] %vm425, %v1776
        %1791 = vst.msk [vmem:[%s177 + $0x36] sm:$0x1] %vm425, %v1778
        %1792 = vst.msk [vmem:[%s177 + $0x46] sm:$0x1] %vm425, %v1761
        %1793 = vst.msk [vmem:[%s177 + $0x56] sm:$0x1] %vm425, %v1775
        %1794 = vst.msk [vmem:[%s177 + $0x66] sm:$0x1] %vm425, %v1777
        %1795 = vst.msk [vmem:[%s177 + $0x76] sm:$0x1] %vm425, %v1779
        %v1796 = vld [vmem:[%s1351] sm:$0x1]
        %v1797 = vld [vmem:[%s1351 + $0x18] sm:$0x1]
        %v1798 = vld [vmem:[%s1351 + $0x30] sm:$0x1]
        %v1799 = vld [vmem:[%s1351 + $0x48] sm:$0x1]
        %v1800 = vld [vmem:[%s1578] sm:$0x1]
        %v1801 = vld [vmem:[%s1578 + $0x18] sm:$0x1]
        %v1802 = vld [vmem:[%s1578 + $0x30] sm:$0x1]
        %v1803 = vld [vmem:[%s1578 + $0x48] sm:$0x1]
        %s1804 = sadd.s32 %s184, 9
        %s1805 = scalar_lea.vmem %s182, %s1804
        %v1806 = vld [vmem:[%s1805] sm:$0x1]
        %v1807 = vld [vmem:[%s1805 + $0x18] sm:$0x1]
        %v1808 = vld [vmem:[%s1805 + $0x30] sm:$0x1]
        %v1809 = vld [vmem:[%s1805 + $0x48] sm:$0x1]
        %v1814 = vrot.slane %v1797, 7
        %v1815 = vsel %vm209, %v1814, %v1796
        %v1816 = vrot.slane %v1798, 6
        %v1817 = vsel %vm212, %v1816, %v1815
        %v1818 = vrot.slane %v1799, 5
        %v1819 = vsel %vm215, %v1818, %v1817
        %v1821 = vrot.slane %v1796, 4
        %v1822 = vrot.slane %v1797, 3
        %v1823 = vsel %vm220, %v1822, %v1821
        %v1824 = vrot.slane %v1798, 2
        %v1825 = vsel %vm223, %v1824, %v1823
        %v1826 = vrot.slane %v1799, 1
        %v1827 = vsel %vm226, %v1826, %v1825
        %1828 = vrot.lane.b32.xlu0 %v1827, 127
        %v1829 = vpop.permute.xlu0 %1828
        %1831 = vrot.lane.b32.xlu0 %v1819, 126
        %v1832 = vpop.permute.xlu0 %1831
        %v1838 = vrot.slane %v1800, 4
        %v1839 = vrot.slane %v1801, 3
        %v1840 = vsel %vm220, %v1839, %v1838
        %v1841 = vrot.slane %v1802, 2
        %v1842 = vsel %vm223, %v1841, %v1840
        %v1843 = vrot.slane %v1803, 1
        %v1844 = vsel %vm226, %v1843, %v1842
        %v1846 = vrot.slane %v1801, 7
        %v1847 = vsel %vm209, %v1846, %v1800
        %v1848 = vrot.slane %v1802, 6
        %v1849 = vsel %vm212, %v1848, %v1847
        %v1850 = vrot.slane %v1803, 5
        %v1851 = vsel %vm215, %v1850, %v1849
        %1852 = vrot.lane.b32.xlu0 %v1851, 127
        %v1853 = vpop.permute.xlu0 %1852
        %1855 = vrot.lane.b32.xlu0 %v1844, 126
        %v1856 = vpop.permute.xlu0 %1855
        %v1862 = vrot.slane %v1807, 7
        %v1863 = vsel %vm209, %v1862, %v1806
        %v1864 = vrot.slane %v1808, 6
        %v1865 = vsel %vm212, %v1864, %v1863
        %v1866 = vrot.slane %v1809, 5
        %v1867 = vsel %vm215, %v1866, %v1865
        %v1869 = vrot.slane %v1806, 4
        %v1870 = vrot.slane %v1807, 3
        %v1871 = vsel %vm220, %v1870, %v1869
        %v1872 = vrot.slane %v1808, 2
        %v1873 = vsel %vm223, %v1872, %v1871
        %v1874 = vrot.slane %v1809, 1
        %v1875 = vsel %vm226, %v1874, %v1873
        %1876 = vrot.lane.b32.xlu0 %v1875, 127
        %v1877 = vpop.permute.xlu0 %1876
        %1879 = vrot.lane.b32.xlu0 %v1867, 126
        %v1880 = vpop.permute.xlu0 %1879
        %v1881 = vsel %vm281, %v1819, %v1829
        %v1882 = vsel %vm281, %v1832, %v1844
        %v1883 = vsel %vm281, %v1853, %v1856
        %v1884 = vsel %vm281, %v1867, %v1877
        %v1885 = vsel %vm281, %v1880, 0
        %1887 = vmatprep.subr.mxu0 0.0
        %1888 = vmatpush1.msra.mxu0 0.0
        %1889 = vmatprep.subr.mxu0 0.0
        %1890 = vmatpush1.msra.mxu0 0.0
        %1891 = vmatprep.subr.mxu0 0.0
        %1892 = vmatpush1.msra.mxu0 0.0
        %1893 = vmatprep.subr.mxu0 0.0
        %1894 = vmatpush1.msra.mxu0 0.0
        %1895 = vmatprep.subr.mxu0 0.0
        %1896 = vmatpush1.msra.mxu0 0.0
        %1897 = vmatprep.subr.mxu0 0.0
        %1898 = vmatpush1.msra.mxu0 0.0
        %1899 = vmatprep.subr.mxu0 0.0
        %1900 = vmatpush1.msra.mxu0 0.0
        %1901 = vmatprep.subr.mxu0 0.0
        %1902 = vmatpush1.msra.mxu0 0.0
        %1903 = vmatprep.subr.mxu0 0.0
        %1904 = vmatpush1.msra.mxu0 0.0
        %1905 = vmatprep.subr.mxu0 0.0
        %1906 = vmatpush1.msra.mxu0 0.0
        %1907 = vmatprep.subr.mxu0 0.0
        %1908 = vmatpush1.msra.mxu0 0.0
        %1909 = vmatprep.subr.mxu0 0.0
        %1910 = vmatpush1.msra.mxu0 %v1885
        %1911 = vmatprep.subr.mxu0 0.0
        %1912 = vmatpush1.msra.mxu0 %v1884
        %1913 = vmatprep.subr.mxu0 0.0
        %1914 = vmatpush1.msra.mxu0 %v1883
        %1915 = vmatprep.subr.mxu0 0.0
        %1916 = vmatpush1.msra.mxu0 %v1882
        %1917 = vmatprep.subr.mxu0 0.0
        %1918 = vmatpush1.msra.mxu0 %v1881
        %1919 = vmatprep.subr.mxu0 0.0
        %1920 = vmatpush2.msra.mxu0 0.0
        %1921 = vmatprep.subr.mxu0 0.0
        %1922 = vmatpush2.msra.mxu0 0.0
        %1923 = vmatprep.subr.mxu0 0.0
        %1924 = vmatpush2.msra.mxu0 0.0
        %1925 = vmatprep.subr.mxu0 0.0
        %1926 = vmatpush2.msra.mxu0 0.0
        %1927 = vmatprep.subr.mxu0 0.0
        %1928 = vmatpush2.msra.mxu0 0.0
        %1929 = vmatprep.subr.mxu0 0.0
        %1930 = vmatpush2.msra.mxu0 0.0
        %1931 = vmatprep.subr.mxu0 0.0
        %1932 = vmatpush2.msra.mxu0 0.0
        %1933 = vmatprep.subr.mxu0 0.0
        %1934 = vmatpush2.msra.mxu0 0.0
        %1935 = vmatprep.subr.mxu0 0.0
        %1936 = vmatpush2.msra.mxu0 0.0
        %1937 = vmatprep.subr.mxu0 0.0
        %1938 = vmatpush2.msra.mxu0 0.0
        %1939 = vmatprep.subr.mxu0 0.0
        %1940 = vmatpush2.msra.mxu0 0.0
        %1941 = vmatprep.subr.mxu0 0.0
        %1942 = vmatpush2.msra.mxu0 0.0
        %1943 = vmatprep.subr.mxu0 0.0
        %1944 = vmatpush2.msra.mxu0 0.0
        %1945 = vmatprep.subr.mxu0 0.0
        %1946 = vmatpush2.msra.mxu0 0.0
        %1947 = vmatprep.subr.mxu0 0.0
        %1948 = vmatpush2.msra.mxu0 0.0
        %1949 = vmatprep.subr.mxu0 0.0
        %1950 = vmatpush2.msra.mxu0 0.0
        %1951 = vmatprep.mubr.f32.mxu0 0.0
        %1952 = vmatmul.mubr.f32.gmra.mxu0 %v293
        %v1953 = vpop.f32.mrf.mxu0
        %v1954 = vadd.f32 %v289, %v1953
        %v1955 = vpop.f32.mrf.mxu0
        %1956 = vdwg.mxu0
        %v1958 = vcombine.high %v1954, %v1954
        %v1960 = vunpack.c.l.s4 1966171168
        %v1961 = vunpack.c.0.s8 %v1960
        %v1962 = vlaneseq
        %v1963 = vshrl.u32 %v1962, 7
        %v1964 = vsub.s32 %v1961, %v1963
        %v1965 = vrot.slane %v1954, %v1964
        %v1967 = vunpack.c.l.s4 1966171168
        %v1968 = vunpack.c.0.s8 %v1967
        %v1969 = vlaneseq
        %v1970 = vshrl.u32 %v1969, 7
        %v1971 = vsub.s32 %v1968, %v1970
        %v1972 = vrot.slane %v1958, %v1971
        %v1973 = vcombine.high %v1965, %v1965
        %v1974 = vcombine.high %v1972, %v1972
        %v1976 = vunpack.c.l.s4 1966171168
        %v1977 = vunpack.c.0.s8 %v1976
        %v1978 = vlaneseq
        %v1979 = vshrl.u32 %v1978, 7
        %v1980 = vsub.s32 %v1977, %v1979
        %v1981 = vrot.slane %v1965, %v1980
        %v1983 = vunpack.c.l.s4 1966171168
        %v1984 = vunpack.c.0.s8 %v1983
        %v1985 = vlaneseq
        %v1986 = vshrl.u32 %v1985, 7
        %v1987 = vsub.s32 %v1984, %v1986
        %v1988 = vrot.slane %v1972, %v1987
        %v1990 = vunpack.c.l.s4 1966171168
        %v1991 = vunpack.c.0.s8 %v1990
        %v1992 = vlaneseq
        %v1993 = vshrl.u32 %v1992, 7
        %v1994 = vsub.s32 %v1991, %v1993
        %v1995 = vrot.slane %v1973, %v1994
        %v1997 = vunpack.c.l.s4 1966171168
        %v1998 = vunpack.c.0.s8 %v1997
        %v1999 = vlaneseq
        %v2000 = vshrl.u32 %v1999, 7
        %v2001 = vsub.s32 %v1998, %v2000
        %v2002 = vrot.slane %v1974, %v2001
        %v2003 = vcombine.high %v1981, %v1981
        %v2004 = vcombine.high %v1988, %v1988
        %v2005 = vcombine.high %v1995, %v1995
        %v2006 = vcombine.high %v2002, %v2002
        %2015 = vst.msk [vmem:[%s177 + $0x7] sm:$0x1] %vm425, %v1981
        %2016 = vst.msk [vmem:[%s177 + $0x17] sm:$0x1] %vm425, %v1995
        %2017 = vst.msk [vmem:[%s177 + $0x27] sm:$0x1] %vm425, %v2003
        %2018 = vst.msk [vmem:[%s177 + $0x37] sm:$0x1] %vm425, %v2005
        %2019 = vst.msk [vmem:[%s177 + $0x47] sm:$0x1] %vm425, %v1988
        %2020 = vst.msk [vmem:[%s177 + $0x57] sm:$0x1] %vm425, %v2002
        %2021 = vst.msk [vmem:[%s177 + $0x67] sm:$0x1] %vm425, %v2004
        %2022 = vst.msk [vmem:[%s177 + $0x77] sm:$0x1] %vm425, %v2006
        %v2023 = vld [vmem:[%s1578] sm:$0x1]
        %v2024 = vld [vmem:[%s1578 + $0x18] sm:$0x1]
        %v2025 = vld [vmem:[%s1578 + $0x30] sm:$0x1]
        %v2026 = vld [vmem:[%s1578 + $0x48] sm:$0x1]
        %v2027 = vld [vmem:[%s1805] sm:$0x1]
        %v2028 = vld [vmem:[%s1805 + $0x18] sm:$0x1]
        %v2029 = vld [vmem:[%s1805 + $0x30] sm:$0x1]
        %v2030 = vld [vmem:[%s1805 + $0x48] sm:$0x1]
        %s2031 = sadd.s32 %s184, 10
        %s2032 = scalar_lea.vmem %s182, %s2031
        %v2033 = vld [vmem:[%s2032] sm:$0x1]
        %v2034 = vld [vmem:[%s2032 + $0x18] sm:$0x1]
        %v2035 = vld [vmem:[%s2032 + $0x30] sm:$0x1]
        %v2036 = vld [vmem:[%s2032 + $0x48] sm:$0x1]
        %v2041 = vrot.slane %v2024, 7
        %v2042 = vsel %vm209, %v2041, %v2023
        %v2043 = vrot.slane %v2025, 6
        %v2044 = vsel %vm212, %v2043, %v2042
        %v2045 = vrot.slane %v2026, 5
        %v2046 = vsel %vm215, %v2045, %v2044
        %v2048 = vrot.slane %v2023, 4
        %v2049 = vrot.slane %v2024, 3
        %v2050 = vsel %vm220, %v2049, %v2048
        %v2051 = vrot.slane %v2025, 2
        %v2052 = vsel %vm223, %v2051, %v2050
        %v2053 = vrot.slane %v2026, 1
        %v2054 = vsel %vm226, %v2053, %v2052
        %2055 = vrot.lane.b32.xlu0 %v2054, 127
        %v2056 = vpop.permute.xlu0 %2055
        %2058 = vrot.lane.b32.xlu0 %v2046, 126
        %v2059 = vpop.permute.xlu0 %2058
        %v2065 = vrot.slane %v2027, 4
        %v2066 = vrot.slane %v2028, 3
        %v2067 = vsel %vm220, %v2066, %v2065
        %v2068 = vrot.slane %v2029, 2
        %v2069 = vsel %vm223, %v2068, %v2067
        %v2070 = vrot.slane %v2030, 1
        %v2071 = vsel %vm226, %v2070, %v2069
        %v2073 = vrot.slane %v2028, 7
        %v2074 = vsel %vm209, %v2073, %v2027
        %v2075 = vrot.slane %v2029, 6
        %v2076 = vsel %vm212, %v2075, %v2074
        %v2077 = vrot.slane %v2030, 5
        %v2078 = vsel %vm215, %v2077, %v2076
        %2079 = vrot.lane.b32.xlu0 %v2078, 127
        %v2080 = vpop.permute.xlu0 %2079
        %2082 = vrot.lane.b32.xlu0 %v2071, 126
        %v2083 = vpop.permute.xlu0 %2082
        %v2089 = vrot.slane %v2034, 7
        %v2090 = vsel %vm209, %v2089, %v2033
        %v2091 = vrot.slane %v2035, 6
        %v2092 = vsel %vm212, %v2091, %v2090
        %v2093 = vrot.slane %v2036, 5
        %v2094 = vsel %vm215, %v2093, %v2092
        %v2096 = vrot.slane %v2033, 4
        %v2097 = vrot.slane %v2034, 3
        %v2098 = vsel %vm220, %v2097, %v2096
        %v2099 = vrot.slane %v2035, 2
        %v2100 = vsel %vm223, %v2099, %v2098
        %v2101 = vrot.slane %v2036, 1
        %v2102 = vsel %vm226, %v2101, %v2100
        %2103 = vrot.lane.b32.xlu0 %v2102, 127
        %v2104 = vpop.permute.xlu0 %2103
        %2106 = vrot.lane.b32.xlu0 %v2094, 126
        %v2107 = vpop.permute.xlu0 %2106
        %v2108 = vsel %vm281, %v2046, %v2056
        %v2109 = vsel %vm281, %v2059, %v2071
        %v2110 = vsel %vm281, %v2080, %v2083
        %v2111 = vsel %vm281, %v2094, %v2104
        %v2112 = vsel %vm281, %v2107, 0
        %2114 = vmatprep.subr.mxu0 0.0
        %2115 = vmatpush1.msra.mxu0 0.0
        %2116 = vmatprep.subr.mxu0 0.0
        %2117 = vmatpush1.msra.mxu0 0.0
        %2118 = vmatprep.subr.mxu0 0.0
        %2119 = vmatpush1.msra.mxu0 0.0
        %2120 = vmatprep.subr.mxu0 0.0
        %2121 = vmatpush1.msra.mxu0 0.0
        %2122 = vmatprep.subr.mxu0 0.0
        %2123 = vmatpush1.msra.mxu0 0.0
        %2124 = vmatprep.subr.mxu0 0.0
        %2125 = vmatpush1.msra.mxu0 0.0
        %2126 = vmatprep.subr.mxu0 0.0
        %2127 = vmatpush1.msra.mxu0 0.0
        %2128 = vmatprep.subr.mxu0 0.0
        %2129 = vmatpush1.msra.mxu0 0.0
        %2130 = vmatprep.subr.mxu0 0.0
        %2131 = vmatpush1.msra.mxu0 0.0
        %2132 = vmatprep.subr.mxu0 0.0
        %2133 = vmatpush1.msra.mxu0 0.0
        %2134 = vmatprep.subr.mxu0 0.0
        %2135 = vmatpush1.msra.mxu0 0.0
        %2136 = vmatprep.subr.mxu0 0.0
        %2137 = vmatpush1.msra.mxu0 %v2112
        %2138 = vmatprep.subr.mxu0 0.0
        %2139 = vmatpush1.msra.mxu0 %v2111
        %2140 = vmatprep.subr.mxu0 0.0
        %2141 = vmatpush1.msra.mxu0 %v2110
        %2142 = vmatprep.subr.mxu0 0.0
        %2143 = vmatpush1.msra.mxu0 %v2109
        %2144 = vmatprep.subr.mxu0 0.0
        %2145 = vmatpush1.msra.mxu0 %v2108
        %2146 = vmatprep.subr.mxu0 0.0
        %2147 = vmatpush2.msra.mxu0 0.0
        %2148 = vmatprep.subr.mxu0 0.0
        %2149 = vmatpush2.msra.mxu0 0.0
        %2150 = vmatprep.subr.mxu0 0.0
        %2151 = vmatpush2.msra.mxu0 0.0
        %2152 = vmatprep.subr.mxu0 0.0
        %2153 = vmatpush2.msra.mxu0 0.0
        %2154 = vmatprep.subr.mxu0 0.0
        %2155 = vmatpush2.msra.mxu0 0.0
        %2156 = vmatprep.subr.mxu0 0.0
        %2157 = vmatpush2.msra.mxu0 0.0
        %2158 = vmatprep.subr.mxu0 0.0
        %2159 = vmatpush2.msra.mxu0 0.0
        %2160 = vmatprep.subr.mxu0 0.0
        %2161 = vmatpush2.msra.mxu0 0.0
        %2162 = vmatprep.subr.mxu0 0.0
        %2163 = vmatpush2.msra.mxu0 0.0
        %2164 = vmatprep.subr.mxu0 0.0
        %2165 = vmatpush2.msra.mxu0 0.0
        %2166 = vmatprep.subr.mxu0 0.0
        %2167 = vmatpush2.msra.mxu0 0.0
        %2168 = vmatprep.subr.mxu0 0.0
        %2169 = vmatpush2.msra.mxu0 0.0
        %2170 = vmatprep.subr.mxu0 0.0
        %2171 = vmatpush2.msra.mxu0 0.0
        %2172 = vmatprep.subr.mxu0 0.0
        %2173 = vmatpush2.msra.mxu0 0.0
        %2174 = vmatprep.subr.mxu0 0.0
        %2175 = vmatpush2.msra.mxu0 0.0
        %2176 = vmatprep.subr.mxu0 0.0
        %2177 = vmatpush2.msra.mxu0 0.0
        %2178 = vmatprep.mubr.f32.mxu0 0.0
        %2179 = vmatmul.mubr.f32.gmra.mxu0 %v293
        %v2180 = vpop.f32.mrf.mxu0
        %v2181 = vadd.f32 %v289, %v2180
        %v2182 = vpop.f32.mrf.mxu0
        %2183 = vdwg.mxu0
        %v2185 = vcombine.high %v2181, %v2181
        %v2187 = vunpack.c.l.s4 1966171168
        %v2188 = vunpack.c.0.s8 %v2187
        %v2189 = vlaneseq
        %v2190 = vshrl.u32 %v2189, 7
        %v2191 = vsub.s32 %v2188, %v2190
        %v2192 = vrot.slane %v2181, %v2191
        %v2194 = vunpack.c.l.s4 1966171168
        %v2195 = vunpack.c.0.s8 %v2194
        %v2196 = vlaneseq
        %v2197 = vshrl.u32 %v2196, 7
        %v2198 = vsub.s32 %v2195, %v2197
        %v2199 = vrot.slane %v2185, %v2198
        %v2200 = vcombine.high %v2192, %v2192
        %v2201 = vcombine.high %v2199, %v2199
        %v2203 = vunpack.c.l.s4 1966171168
        %v2204 = vunpack.c.0.s8 %v2203
        %v2205 = vlaneseq
        %v2206 = vshrl.u32 %v2205, 7
        %v2207 = vsub.s32 %v2204, %v2206
        %v2208 = vrot.slane %v2192, %v2207
        %v2210 = vunpack.c.l.s4 1966171168
        %v2211 = vunpack.c.0.s8 %v2210
        %v2212 = vlaneseq
        %v2213 = vshrl.u32 %v2212, 7
        %v2214 = vsub.s32 %v2211, %v2213
        %v2215 = vrot.slane %v2199, %v2214
        %v2217 = vunpack.c.l.s4 1966171168
        %v2218 = vunpack.c.0.s8 %v2217
        %v2219 = vlaneseq
        %v2220 = vshrl.u32 %v2219, 7
        %v2221 = vsub.s32 %v2218, %v2220
        %v2222 = vrot.slane %v2200, %v2221
        %v2224 = vunpack.c.l.s4 1966171168
        %v2225 = vunpack.c.0.s8 %v2224
        %v2226 = vlaneseq
        %v2227 = vshrl.u32 %v2226, 7
        %v2228 = vsub.s32 %v2225, %v2227
        %v2229 = vrot.slane %v2201, %v2228
        %v2230 = vcombine.high %v2208, %v2208
        %v2231 = vcombine.high %v2215, %v2215
        %v2232 = vcombine.high %v2222, %v2222
        %v2233 = vcombine.high %v2229, %v2229
        %2242 = vst.msk [vmem:[%s177 + $0x8] sm:$0x1] %vm425, %v2208
        %2243 = vst.msk [vmem:[%s177 + $0x18] sm:$0x1] %vm425, %v2222
        %2244 = vst.msk [vmem:[%s177 + $0x28] sm:$0x1] %vm425, %v2230
        %2245 = vst.msk [vmem:[%s177 + $0x38] sm:$0x1] %vm425, %v2232
        %2246 = vst.msk [vmem:[%s177 + $0x48] sm:$0x1] %vm425, %v2215
        %2247 = vst.msk [vmem:[%s177 + $0x58] sm:$0x1] %vm425, %v2229
        %2248 = vst.msk [vmem:[%s177 + $0x68] sm:$0x1] %vm425, %v2231
        %2249 = vst.msk [vmem:[%s177 + $0x78] sm:$0x1] %vm425, %v2233
        %v2250 = vld [vmem:[%s1805] sm:$0x1]
        %v2251 = vld [vmem:[%s1805 + $0x18] sm:$0x1]
        %v2252 = vld [vmem:[%s1805 + $0x30] sm:$0x1]
        %v2253 = vld [vmem:[%s1805 + $0x48] sm:$0x1]
        %v2254 = vld [vmem:[%s2032] sm:$0x1]
        %v2255 = vld [vmem:[%s2032 + $0x18] sm:$0x1]
        %v2256 = vld [vmem:[%s2032 + $0x30] sm:$0x1]
        %v2257 = vld [vmem:[%s2032 + $0x48] sm:$0x1]
        %s2258 = sadd.s32 %s184, 11
        %s2259 = scalar_lea.vmem %s182, %s2258
        %v2260 = vld [vmem:[%s2259] sm:$0x1]
        %v2261 = vld [vmem:[%s2259 + $0x18] sm:$0x1]
        %v2262 = vld [vmem:[%s2259 + $0x30] sm:$0x1]
        %v2263 = vld [vmem:[%s2259 + $0x48] sm:$0x1]
        %v2268 = vrot.slane %v2251, 7
        %v2269 = vsel %vm209, %v2268, %v2250
        %v2270 = vrot.slane %v2252, 6
        %v2271 = vsel %vm212, %v2270, %v2269
        %v2272 = vrot.slane %v2253, 5
        %v2273 = vsel %vm215, %v2272, %v2271
        %v2275 = vrot.slane %v2250, 4
        %v2276 = vrot.slane %v2251, 3
        %v2277 = vsel %vm220, %v2276, %v2275
        %v2278 = vrot.slane %v2252, 2
        %v2279 = vsel %vm223, %v2278, %v2277
        %v2280 = vrot.slane %v2253, 1
        %v2281 = vsel %vm226, %v2280, %v2279
        %2282 = vrot.lane.b32.xlu0 %v2281, 127
        %v2283 = vpop.permute.xlu0 %2282
        %2285 = vrot.lane.b32.xlu0 %v2273, 126
        %v2286 = vpop.permute.xlu0 %2285
        %v2292 = vrot.slane %v2254, 4
        %v2293 = vrot.slane %v2255, 3
        %v2294 = vsel %vm220, %v2293, %v2292
        %v2295 = vrot.slane %v2256, 2
        %v2296 = vsel %vm223, %v2295, %v2294
        %v2297 = vrot.slane %v2257, 1
        %v2298 = vsel %vm226, %v2297, %v2296
        %v2300 = vrot.slane %v2255, 7
        %v2301 = vsel %vm209, %v2300, %v2254
        %v2302 = vrot.slane %v2256, 6
        %v2303 = vsel %vm212, %v2302, %v2301
        %v2304 = vrot.slane %v2257, 5
        %v2305 = vsel %vm215, %v2304, %v2303
        %2306 = vrot.lane.b32.xlu0 %v2305, 127
        %v2307 = vpop.permute.xlu0 %2306
        %2309 = vrot.lane.b32.xlu0 %v2298, 126
        %v2310 = vpop.permute.xlu0 %2309
        %v2316 = vrot.slane %v2261, 7
        %v2317 = vsel %vm209, %v2316, %v2260
        %v2318 = vrot.slane %v2262, 6
        %v2319 = vsel %vm212, %v2318, %v2317
        %v2320 = vrot.slane %v2263, 5
        %v2321 = vsel %vm215, %v2320, %v2319
        %v2323 = vrot.slane %v2260, 4
        %v2324 = vrot.slane %v2261, 3
        %v2325 = vsel %vm220, %v2324, %v2323
        %v2326 = vrot.slane %v2262, 2
        %v2327 = vsel %vm223, %v2326, %v2325
        %v2328 = vrot.slane %v2263, 1
        %v2329 = vsel %vm226, %v2328, %v2327
        %2330 = vrot.lane.b32.xlu0 %v2329, 127
        %v2331 = vpop.permute.xlu0 %2330
        %2333 = vrot.lane.b32.xlu0 %v2321, 126
        %v2334 = vpop.permute.xlu0 %2333
        %v2335 = vsel %vm281, %v2273, %v2283
        %v2336 = vsel %vm281, %v2286, %v2298
        %v2337 = vsel %vm281, %v2307, %v2310
        %v2338 = vsel %vm281, %v2321, %v2331
        %v2339 = vsel %vm281, %v2334, 0
        %2341 = vmatprep.subr.mxu0 0.0
        %2342 = vmatpush1.msra.mxu0 0.0
        %2343 = vmatprep.subr.mxu0 0.0
        %2344 = vmatpush1.msra.mxu0 0.0
        %2345 = vmatprep.subr.mxu0 0.0
        %2346 = vmatpush1.msra.mxu0 0.0
        %2347 = vmatprep.subr.mxu0 0.0
        %2348 = vmatpush1.msra.mxu0 0.0
        %2349 = vmatprep.subr.mxu0 0.0
        %2350 = vmatpush1.msra.mxu0 0.0
        %2351 = vmatprep.subr.mxu0 0.0
        %2352 = vmatpush1.msra.mxu0 0.0
        %2353 = vmatprep.subr.mxu0 0.0
        %2354 = vmatpush1.msra.mxu0 0.0
        %2355 = vmatprep.subr.mxu0 0.0
        %2356 = vmatpush1.msra.mxu0 0.0
        %2357 = vmatprep.subr.mxu0 0.0
        %2358 = vmatpush1.msra.mxu0 0.0
        %2359 = vmatprep.subr.mxu0 0.0
        %2360 = vmatpush1.msra.mxu0 0.0
        %2361 = vmatprep.subr.mxu0 0.0
        %2362 = vmatpush1.msra.mxu0 0.0
        %2363 = vmatprep.subr.mxu0 0.0
        %2364 = vmatpush1.msra.mxu0 %v2339
        %2365 = vmatprep.subr.mxu0 0.0
        %2366 = vmatpush1.msra.mxu0 %v2338
        %2367 = vmatprep.subr.mxu0 0.0
        %2368 = vmatpush1.msra.mxu0 %v2337
        %2369 = vmatprep.subr.mxu0 0.0
        %2370 = vmatpush1.msra.mxu0 %v2336
        %2371 = vmatprep.subr.mxu0 0.0
        %2372 = vmatpush1.msra.mxu0 %v2335
        %2373 = vmatprep.subr.mxu0 0.0
        %2374 = vmatpush2.msra.mxu0 0.0
        %2375 = vmatprep.subr.mxu0 0.0
        %2376 = vmatpush2.msra.mxu0 0.0
        %2377 = vmatprep.subr.mxu0 0.0
        %2378 = vmatpush2.msra.mxu0 0.0
        %2379 = vmatprep.subr.mxu0 0.0
        %2380 = vmatpush2.msra.mxu0 0.0
        %2381 = vmatprep.subr.mxu0 0.0
        %2382 = vmatpush2.msra.mxu0 0.0
        %2383 = vmatprep.subr.mxu0 0.0
        %2384 = vmatpush2.msra.mxu0 0.0
        %2385 = vmatprep.subr.mxu0 0.0
        %2386 = vmatpush2.msra.mxu0 0.0
        %2387 = vmatprep.subr.mxu0 0.0
        %2388 = vmatpush2.msra.mxu0 0.0
        %2389 = vmatprep.subr.mxu0 0.0
        %2390 = vmatpush2.msra.mxu0 0.0
        %2391 = vmatprep.subr.mxu0 0.0
        %2392 = vmatpush2.msra.mxu0 0.0
        %2393 = vmatprep.subr.mxu0 0.0
        %2394 = vmatpush2.msra.mxu0 0.0
        %2395 = vmatprep.subr.mxu0 0.0
        %2396 = vmatpush2.msra.mxu0 0.0
        %2397 = vmatprep.subr.mxu0 0.0
        %2398 = vmatpush2.msra.mxu0 0.0
        %2399 = vmatprep.subr.mxu0 0.0
        %2400 = vmatpush2.msra.mxu0 0.0
        %2401 = vmatprep.subr.mxu0 0.0
        %2402 = vmatpush2.msra.mxu0 0.0
        %2403 = vmatprep.subr.mxu0 0.0
        %2404 = vmatpush2.msra.mxu0 0.0
        %2405 = vmatprep.mubr.f32.mxu0 0.0
        %2406 = vmatmul.mubr.f32.gmra.mxu0 %v293
        %v2407 = vpop.f32.mrf.mxu0
        %v2408 = vadd.f32 %v289, %v2407
        %v2409 = vpop.f32.mrf.mxu0
        %2410 = vdwg.mxu0
        %v2412 = vcombine.high %v2408, %v2408
        %v2414 = vunpack.c.l.s4 1966171168
        %v2415 = vunpack.c.0.s8 %v2414
        %v2416 = vlaneseq
        %v2417 = vshrl.u32 %v2416, 7
        %v2418 = vsub.s32 %v2415, %v2417
        %v2419 = vrot.slane %v2408, %v2418
        %v2421 = vunpack.c.l.s4 1966171168
        %v2422 = vunpack.c.0.s8 %v2421
        %v2423 = vlaneseq
        %v2424 = vshrl.u32 %v2423, 7
        %v2425 = vsub.s32 %v2422, %v2424
        %v2426 = vrot.slane %v2412, %v2425
        %v2427 = vcombine.high %v2419, %v2419
        %v2428 = vcombine.high %v2426, %v2426
        %v2430 = vunpack.c.l.s4 1966171168
        %v2431 = vunpack.c.0.s8 %v2430
        %v2432 = vlaneseq
        %v2433 = vshrl.u32 %v2432, 7
        %v2434 = vsub.s32 %v2431, %v2433
        %v2435 = vrot.slane %v2419, %v2434
        %v2437 = vunpack.c.l.s4 1966171168
        %v2438 = vunpack.c.0.s8 %v2437
        %v2439 = vlaneseq
        %v2440 = vshrl.u32 %v2439, 7
        %v2441 = vsub.s32 %v2438, %v2440
        %v2442 = vrot.slane %v2426, %v2441
        %v2444 = vunpack.c.l.s4 1966171168
        %v2445 = vunpack.c.0.s8 %v2444
        %v2446 = vlaneseq
        %v2447 = vshrl.u32 %v2446, 7
        %v2448 = vsub.s32 %v2445, %v2447
        %v2449 = vrot.slane %v2427, %v2448
        %v2451 = vunpack.c.l.s4 1966171168
        %v2452 = vunpack.c.0.s8 %v2451
        %v2453 = vlaneseq
        %v2454 = vshrl.u32 %v2453, 7
        %v2455 = vsub.s32 %v2452, %v2454
        %v2456 = vrot.slane %v2428, %v2455
        %v2457 = vcombine.high %v2435, %v2435
        %v2458 = vcombine.high %v2442, %v2442
        %v2459 = vcombine.high %v2449, %v2449
        %v2460 = vcombine.high %v2456, %v2456
        %2469 = vst.msk [vmem:[%s177 + $0x9] sm:$0x1] %vm425, %v2435
        %2470 = vst.msk [vmem:[%s177 + $0x19] sm:$0x1] %vm425, %v2449
        %2471 = vst.msk [vmem:[%s177 + $0x29] sm:$0x1] %vm425, %v2457
        %2472 = vst.msk [vmem:[%s177 + $0x39] sm:$0x1] %vm425, %v2459
        %2473 = vst.msk [vmem:[%s177 + $0x49] sm:$0x1] %vm425, %v2442
        %2474 = vst.msk [vmem:[%s177 + $0x59] sm:$0x1] %vm425, %v2456
        %2475 = vst.msk [vmem:[%s177 + $0x69] sm:$0x1] %vm425, %v2458
        %2476 = vst.msk [vmem:[%s177 + $0x79] sm:$0x1] %vm425, %v2460
        %v2477 = vld [vmem:[%s2032] sm:$0x1]
        %v2478 = vld [vmem:[%s2032 + $0x18] sm:$0x1]
        %v2479 = vld [vmem:[%s2032 + $0x30] sm:$0x1]
        %v2480 = vld [vmem:[%s2032 + $0x48] sm:$0x1]
        %v2481 = vld [vmem:[%s2259] sm:$0x1]
        %v2482 = vld [vmem:[%s2259 + $0x18] sm:$0x1]
        %v2483 = vld [vmem:[%s2259 + $0x30] sm:$0x1]
        %v2484 = vld [vmem:[%s2259 + $0x48] sm:$0x1]
        %s2485 = sadd.s32 %s184, 12
        %s2486 = scalar_lea.vmem %s182, %s2485
        %v2487 = vld [vmem:[%s2486] sm:$0x1]
        %v2488 = vld [vmem:[%s2486 + $0x18] sm:$0x1]
        %v2489 = vld [vmem:[%s2486 + $0x30] sm:$0x1]
        %v2490 = vld [vmem:[%s2486 + $0x48] sm:$0x1]
        %v2495 = vrot.slane %v2478, 7
        %v2496 = vsel %vm209, %v2495, %v2477
        %v2497 = vrot.slane %v2479, 6
        %v2498 = vsel %vm212, %v2497, %v2496
        %v2499 = vrot.slane %v2480, 5
        %v2500 = vsel %vm215, %v2499, %v2498
        %v2502 = vrot.slane %v2477, 4
        %v2503 = vrot.slane %v2478, 3
        %v2504 = vsel %vm220, %v2503, %v2502
        %v2505 = vrot.slane %v2479, 2
        %v2506 = vsel %vm223, %v2505, %v2504
        %v2507 = vrot.slane %v2480, 1
        %v2508 = vsel %vm226, %v2507, %v2506
        %2509 = vrot.lane.b32.xlu0 %v2508, 127
        %v2510 = vpop.permute.xlu0 %2509
        %2512 = vrot.lane.b32.xlu0 %v2500, 126
        %v2513 = vpop.permute.xlu0 %2512
        %v2519 = vrot.slane %v2481, 4
        %v2520 = vrot.slane %v2482, 3
        %v2521 = vsel %vm220, %v2520, %v2519
        %v2522 = vrot.slane %v2483, 2
        %v2523 = vsel %vm223, %v2522, %v2521
        %v2524 = vrot.slane %v2484, 1
        %v2525 = vsel %vm226, %v2524, %v2523
        %v2527 = vrot.slane %v2482, 7
        %v2528 = vsel %vm209, %v2527, %v2481
        %v2529 = vrot.slane %v2483, 6
        %v2530 = vsel %vm212, %v2529, %v2528
        %v2531 = vrot.slane %v2484, 5
        %v2532 = vsel %vm215, %v2531, %v2530
        %2533 = vrot.lane.b32.xlu0 %v2532, 127
        %v2534 = vpop.permute.xlu0 %2533
        %2536 = vrot.lane.b32.xlu0 %v2525, 126
        %v2537 = vpop.permute.xlu0 %2536
        %v2543 = vrot.slane %v2488, 7
        %v2544 = vsel %vm209, %v2543, %v2487
        %v2545 = vrot.slane %v2489, 6
        %v2546 = vsel %vm212, %v2545, %v2544
        %v2547 = vrot.slane %v2490, 5
        %v2548 = vsel %vm215, %v2547, %v2546
        %v2550 = vrot.slane %v2487, 4
        %v2551 = vrot.slane %v2488, 3
        %v2552 = vsel %vm220, %v2551, %v2550
        %v2553 = vrot.slane %v2489, 2
        %v2554 = vsel %vm223, %v2553, %v2552
        %v2555 = vrot.slane %v2490, 1
        %v2556 = vsel %vm226, %v2555, %v2554
        %2557 = vrot.lane.b32.xlu0 %v2556, 127
        %v2558 = vpop.permute.xlu0 %2557
        %2560 = vrot.lane.b32.xlu0 %v2548, 126
        %v2561 = vpop.permute.xlu0 %2560
        %v2562 = vsel %vm281, %v2500, %v2510
        %v2563 = vsel %vm281, %v2513, %v2525
        %v2564 = vsel %vm281, %v2534, %v2537
        %v2565 = vsel %vm281, %v2548, %v2558
        %v2566 = vsel %vm281, %v2561, 0
        %2568 = vmatprep.subr.mxu0 0.0
        %2569 = vmatpush1.msra.mxu0 0.0
        %2570 = vmatprep.subr.mxu0 0.0
        %2571 = vmatpush1.msra.mxu0 0.0
        %2572 = vmatprep.subr.mxu0 0.0
        %2573 = vmatpush1.msra.mxu0 0.0
        %2574 = vmatprep.subr.mxu0 0.0
        %2575 = vmatpush1.msra.mxu0 0.0
        %2576 = vmatprep.subr.mxu0 0.0
        %2577 = vmatpush1.msra.mxu0 0.0
        %2578 = vmatprep.subr.mxu0 0.0
        %2579 = vmatpush1.msra.mxu0 0.0
        %2580 = vmatprep.subr.mxu0 0.0
        %2581 = vmatpush1.msra.mxu0 0.0
        %2582 = vmatprep.subr.mxu0 0.0
        %2583 = vmatpush1.msra.mxu0 0.0
        %2584 = vmatprep.subr.mxu0 0.0
        %2585 = vmatpush1.msra.mxu0 0.0
        %2586 = vmatprep.subr.mxu0 0.0
        %2587 = vmatpush1.msra.mxu0 0.0
        %2588 = vmatprep.subr.mxu0 0.0
        %2589 = vmatpush1.msra.mxu0 0.0
        %2590 = vmatprep.subr.mxu0 0.0
        %2591 = vmatpush1.msra.mxu0 %v2566
        %2592 = vmatprep.subr.mxu0 0.0
        %2593 = vmatpush1.msra.mxu0 %v2565
        %2594 = vmatprep.subr.mxu0 0.0
        %2595 = vmatpush1.msra.mxu0 %v2564
        %2596 = vmatprep.subr.mxu0 0.0
        %2597 = vmatpush1.msra.mxu0 %v2563
        %2598 = vmatprep.subr.mxu0 0.0
        %2599 = vmatpush1.msra.mxu0 %v2562
        %2600 = vmatprep.subr.mxu0 0.0
        %2601 = vmatpush2.msra.mxu0 0.0
        %2602 = vmatprep.subr.mxu0 0.0
        %2603 = vmatpush2.msra.mxu0 0.0
        %2604 = vmatprep.subr.mxu0 0.0
        %2605 = vmatpush2.msra.mxu0 0.0
        %2606 = vmatprep.subr.mxu0 0.0
        %2607 = vmatpush2.msra.mxu0 0.0
        %2608 = vmatprep.subr.mxu0 0.0
        %2609 = vmatpush2.msra.mxu0 0.0
        %2610 = vmatprep.subr.mxu0 0.0
        %2611 = vmatpush2.msra.mxu0 0.0
        %2612 = vmatprep.subr.mxu0 0.0
        %2613 = vmatpush2.msra.mxu0 0.0
        %2614 = vmatprep.subr.mxu0 0.0
        %2615 = vmatpush2.msra.mxu0 0.0
        %2616 = vmatprep.subr.mxu0 0.0
        %2617 = vmatpush2.msra.mxu0 0.0
        %2618 = vmatprep.subr.mxu0 0.0
        %2619 = vmatpush2.msra.mxu0 0.0
        %2620 = vmatprep.subr.mxu0 0.0
        %2621 = vmatpush2.msra.mxu0 0.0
        %2622 = vmatprep.subr.mxu0 0.0
        %2623 = vmatpush2.msra.mxu0 0.0
        %2624 = vmatprep.subr.mxu0 0.0
        %2625 = vmatpush2.msra.mxu0 0.0
        %2626 = vmatprep.subr.mxu0 0.0
        %2627 = vmatpush2.msra.mxu0 0.0
        %2628 = vmatprep.subr.mxu0 0.0
        %2629 = vmatpush2.msra.mxu0 0.0
        %2630 = vmatprep.subr.mxu0 0.0
        %2631 = vmatpush2.msra.mxu0 0.0
        %2632 = vmatprep.mubr.f32.mxu0 0.0
        %2633 = vmatmul.mubr.f32.gmra.mxu0 %v293
        %v2634 = vpop.f32.mrf.mxu0
        %v2635 = vadd.f32 %v289, %v2634
        %v2636 = vpop.f32.mrf.mxu0
        %2637 = vdwg.mxu0
        %v2639 = vcombine.high %v2635, %v2635
        %v2641 = vunpack.c.l.s4 1966171168
        %v2642 = vunpack.c.0.s8 %v2641
        %v2643 = vlaneseq
        %v2644 = vshrl.u32 %v2643, 7
        %v2645 = vsub.s32 %v2642, %v2644
        %v2646 = vrot.slane %v2635, %v2645
        %v2648 = vunpack.c.l.s4 1966171168
        %v2649 = vunpack.c.0.s8 %v2648
        %v2650 = vlaneseq
        %v2651 = vshrl.u32 %v2650, 7
        %v2652 = vsub.s32 %v2649, %v2651
        %v2653 = vrot.slane %v2639, %v2652
        %v2654 = vcombine.high %v2646, %v2646
        %v2655 = vcombine.high %v2653, %v2653
        %v2657 = vunpack.c.l.s4 1966171168
        %v2658 = vunpack.c.0.s8 %v2657
        %v2659 = vlaneseq
        %v2660 = vshrl.u32 %v2659, 7
        %v2661 = vsub.s32 %v2658, %v2660
        %v2662 = vrot.slane %v2646, %v2661
        %v2664 = vunpack.c.l.s4 1966171168
        %v2665 = vunpack.c.0.s8 %v2664
        %v2666 = vlaneseq
        %v2667 = vshrl.u32 %v2666, 7
        %v2668 = vsub.s32 %v2665, %v2667
        %v2669 = vrot.slane %v2653, %v2668
        %v2671 = vunpack.c.l.s4 1966171168
        %v2672 = vunpack.c.0.s8 %v2671
        %v2673 = vlaneseq
        %v2674 = vshrl.u32 %v2673, 7
        %v2675 = vsub.s32 %v2672, %v2674
        %v2676 = vrot.slane %v2654, %v2675
        %v2678 = vunpack.c.l.s4 1966171168
        %v2679 = vunpack.c.0.s8 %v2678
        %v2680 = vlaneseq
        %v2681 = vshrl.u32 %v2680, 7
        %v2682 = vsub.s32 %v2679, %v2681
        %v2683 = vrot.slane %v2655, %v2682
        %v2684 = vcombine.high %v2662, %v2662
        %v2685 = vcombine.high %v2669, %v2669
        %v2686 = vcombine.high %v2676, %v2676
        %v2687 = vcombine.high %v2683, %v2683
        %2696 = vst.msk [vmem:[%s177 + $0xa] sm:$0x1] %vm425, %v2662
        %2697 = vst.msk [vmem:[%s177 + $0x1a] sm:$0x1] %vm425, %v2676
        %2698 = vst.msk [vmem:[%s177 + $0x2a] sm:$0x1] %vm425, %v2684
        %2699 = vst.msk [vmem:[%s177 + $0x3a] sm:$0x1] %vm425, %v2686
        %2700 = vst.msk [vmem:[%s177 + $0x4a] sm:$0x1] %vm425, %v2669
        %2701 = vst.msk [vmem:[%s177 + $0x5a] sm:$0x1] %vm425, %v2683
        %2702 = vst.msk [vmem:[%s177 + $0x6a] sm:$0x1] %vm425, %v2685
        %2703 = vst.msk [vmem:[%s177 + $0x7a] sm:$0x1] %vm425, %v2687
        %v2704 = vld [vmem:[%s2259] sm:$0x1]
        %v2705 = vld [vmem:[%s2259 + $0x18] sm:$0x1]
        %v2706 = vld [vmem:[%s2259 + $0x30] sm:$0x1]
        %v2707 = vld [vmem:[%s2259 + $0x48] sm:$0x1]
        %v2708 = vld [vmem:[%s2486] sm:$0x1]
        %v2709 = vld [vmem:[%s2486 + $0x18] sm:$0x1]
        %v2710 = vld [vmem:[%s2486 + $0x30] sm:$0x1]
        %v2711 = vld [vmem:[%s2486 + $0x48] sm:$0x1]
        %s2712 = sadd.s32 %s184, 13
        %s2713 = scalar_lea.vmem %s182, %s2712
        %v2714 = vld [vmem:[%s2713] sm:$0x1]
        %v2715 = vld [vmem:[%s2713 + $0x18] sm:$0x1]
        %v2716 = vld [vmem:[%s2713 + $0x30] sm:$0x1]
        %v2717 = vld [vmem:[%s2713 + $0x48] sm:$0x1]
        %v2722 = vrot.slane %v2705, 7
        %v2723 = vsel %vm209, %v2722, %v2704
        %v2724 = vrot.slane %v2706, 6
        %v2725 = vsel %vm212, %v2724, %v2723
        %v2726 = vrot.slane %v2707, 5
        %v2727 = vsel %vm215, %v2726, %v2725
        %v2729 = vrot.slane %v2704, 4
        %v2730 = vrot.slane %v2705, 3
        %v2731 = vsel %vm220, %v2730, %v2729
        %v2732 = vrot.slane %v2706, 2
        %v2733 = vsel %vm223, %v2732, %v2731
        %v2734 = vrot.slane %v2707, 1
        %v2735 = vsel %vm226, %v2734, %v2733
        %2736 = vrot.lane.b32.xlu0 %v2735, 127
        %v2737 = vpop.permute.xlu0 %2736
        %2739 = vrot.lane.b32.xlu0 %v2727, 126
        %v2740 = vpop.permute.xlu0 %2739
        %v2746 = vrot.slane %v2708, 4
        %v2747 = vrot.slane %v2709, 3
        %v2748 = vsel %vm220, %v2747, %v2746
        %v2749 = vrot.slane %v2710, 2
        %v2750 = vsel %vm223, %v2749, %v2748
        %v2751 = vrot.slane %v2711, 1
        %v2752 = vsel %vm226, %v2751, %v2750
        %v2754 = vrot.slane %v2709, 7
        %v2755 = vsel %vm209, %v2754, %v2708
        %v2756 = vrot.slane %v2710, 6
        %v2757 = vsel %vm212, %v2756, %v2755
        %v2758 = vrot.slane %v2711, 5
        %v2759 = vsel %vm215, %v2758, %v2757
        %2760 = vrot.lane.b32.xlu0 %v2759, 127
        %v2761 = vpop.permute.xlu0 %2760
        %2763 = vrot.lane.b32.xlu0 %v2752, 126
        %v2764 = vpop.permute.xlu0 %2763
        %v2770 = vrot.slane %v2715, 7
        %v2771 = vsel %vm209, %v2770, %v2714
        %v2772 = vrot.slane %v2716, 6
        %v2773 = vsel %vm212, %v2772, %v2771
        %v2774 = vrot.slane %v2717, 5
        %v2775 = vsel %vm215, %v2774, %v2773
        %v2777 = vrot.slane %v2714, 4
        %v2778 = vrot.slane %v2715, 3
        %v2779 = vsel %vm220, %v2778, %v2777
        %v2780 = vrot.slane %v2716, 2
        %v2781 = vsel %vm223, %v2780, %v2779
        %v2782 = vrot.slane %v2717, 1
        %v2783 = vsel %vm226, %v2782, %v2781
        %2784 = vrot.lane.b32.xlu0 %v2783, 127
        %v2785 = vpop.permute.xlu0 %2784
        %2787 = vrot.lane.b32.xlu0 %v2775, 126
        %v2788 = vpop.permute.xlu0 %2787
        %v2789 = vsel %vm281, %v2727, %v2737
        %v2790 = vsel %vm281, %v2740, %v2752
        %v2791 = vsel %vm281, %v2761, %v2764
        %v2792 = vsel %vm281, %v2775, %v2785
        %v2793 = vsel %vm281, %v2788, 0
        %2795 = vmatprep.subr.mxu0 0.0
        %2796 = vmatpush1.msra.mxu0 0.0
        %2797 = vmatprep.subr.mxu0 0.0
        %2798 = vmatpush1.msra.mxu0 0.0
        %2799 = vmatprep.subr.mxu0 0.0
        %2800 = vmatpush1.msra.mxu0 0.0
        %2801 = vmatprep.subr.mxu0 0.0
        %2802 = vmatpush1.msra.mxu0 0.0
        %2803 = vmatprep.subr.mxu0 0.0
        %2804 = vmatpush1.msra.mxu0 0.0
        %2805 = vmatprep.subr.mxu0 0.0
        %2806 = vmatpush1.msra.mxu0 0.0
        %2807 = vmatprep.subr.mxu0 0.0
        %2808 = vmatpush1.msra.mxu0 0.0
        %2809 = vmatprep.subr.mxu0 0.0
        %2810 = vmatpush1.msra.mxu0 0.0
        %2811 = vmatprep.subr.mxu0 0.0
        %2812 = vmatpush1.msra.mxu0 0.0
        %2813 = vmatprep.subr.mxu0 0.0
        %2814 = vmatpush1.msra.mxu0 0.0
        %2815 = vmatprep.subr.mxu0 0.0
        %2816 = vmatpush1.msra.mxu0 0.0
        %2817 = vmatprep.subr.mxu0 0.0
        %2818 = vmatpush1.msra.mxu0 %v2793
        %2819 = vmatprep.subr.mxu0 0.0
        %2820 = vmatpush1.msra.mxu0 %v2792
        %2821 = vmatprep.subr.mxu0 0.0
        %2822 = vmatpush1.msra.mxu0 %v2791
        %2823 = vmatprep.subr.mxu0 0.0
        %2824 = vmatpush1.msra.mxu0 %v2790
        %2825 = vmatprep.subr.mxu0 0.0
        %2826 = vmatpush1.msra.mxu0 %v2789
        %2827 = vmatprep.subr.mxu0 0.0
        %2828 = vmatpush2.msra.mxu0 0.0
        %2829 = vmatprep.subr.mxu0 0.0
        %2830 = vmatpush2.msra.mxu0 0.0
        %2831 = vmatprep.subr.mxu0 0.0
        %2832 = vmatpush2.msra.mxu0 0.0
        %2833 = vmatprep.subr.mxu0 0.0
        %2834 = vmatpush2.msra.mxu0 0.0
        %2835 = vmatprep.subr.mxu0 0.0
        %2836 = vmatpush2.msra.mxu0 0.0
        %2837 = vmatprep.subr.mxu0 0.0
        %2838 = vmatpush2.msra.mxu0 0.0
        %2839 = vmatprep.subr.mxu0 0.0
        %2840 = vmatpush2.msra.mxu0 0.0
        %2841 = vmatprep.subr.mxu0 0.0
        %2842 = vmatpush2.msra.mxu0 0.0
        %2843 = vmatprep.subr.mxu0 0.0
        %2844 = vmatpush2.msra.mxu0 0.0
        %2845 = vmatprep.subr.mxu0 0.0
        %2846 = vmatpush2.msra.mxu0 0.0
        %2847 = vmatprep.subr.mxu0 0.0
        %2848 = vmatpush2.msra.mxu0 0.0
        %2849 = vmatprep.subr.mxu0 0.0
        %2850 = vmatpush2.msra.mxu0 0.0
        %2851 = vmatprep.subr.mxu0 0.0
        %2852 = vmatpush2.msra.mxu0 0.0
        %2853 = vmatprep.subr.mxu0 0.0
        %2854 = vmatpush2.msra.mxu0 0.0
        %2855 = vmatprep.subr.mxu0 0.0
        %2856 = vmatpush2.msra.mxu0 0.0
        %2857 = vmatprep.subr.mxu0 0.0
        %2858 = vmatpush2.msra.mxu0 0.0
        %2859 = vmatprep.mubr.f32.mxu0 0.0
        %2860 = vmatmul.mubr.f32.gmra.mxu0 %v293
        %v2861 = vpop.f32.mrf.mxu0
        %v2862 = vadd.f32 %v289, %v2861
        %v2863 = vpop.f32.mrf.mxu0
        %2864 = vdwg.mxu0
        %v2866 = vcombine.high %v2862, %v2862
        %v2868 = vunpack.c.l.s4 1966171168
        %v2869 = vunpack.c.0.s8 %v2868
        %v2870 = vlaneseq
        %v2871 = vshrl.u32 %v2870, 7
        %v2872 = vsub.s32 %v2869, %v2871
        %v2873 = vrot.slane %v2862, %v2872
        %v2875 = vunpack.c.l.s4 1966171168
        %v2876 = vunpack.c.0.s8 %v2875
        %v2877 = vlaneseq
        %v2878 = vshrl.u32 %v2877, 7
        %v2879 = vsub.s32 %v2876, %v2878
        %v2880 = vrot.slane %v2866, %v2879
        %v2881 = vcombine.high %v2873, %v2873
        %v2882 = vcombine.high %v2880, %v2880
        %v2884 = vunpack.c.l.s4 1966171168
        %v2885 = vunpack.c.0.s8 %v2884
        %v2886 = vlaneseq
        %v2887 = vshrl.u32 %v2886, 7
        %v2888 = vsub.s32 %v2885, %v2887
        %v2889 = vrot.slane %v2873, %v2888
        %v2891 = vunpack.c.l.s4 1966171168
        %v2892 = vunpack.c.0.s8 %v2891
        %v2893 = vlaneseq
        %v2894 = vshrl.u32 %v2893, 7
        %v2895 = vsub.s32 %v2892, %v2894
        %v2896 = vrot.slane %v2880, %v2895
        %v2898 = vunpack.c.l.s4 1966171168
        %v2899 = vunpack.c.0.s8 %v2898
        %v2900 = vlaneseq
        %v2901 = vshrl.u32 %v2900, 7
        %v2902 = vsub.s32 %v2899, %v2901
        %v2903 = vrot.slane %v2881, %v2902
        %v2905 = vunpack.c.l.s4 1966171168
        %v2906 = vunpack.c.0.s8 %v2905
        %v2907 = vlaneseq
        %v2908 = vshrl.u32 %v2907, 7
        %v2909 = vsub.s32 %v2906, %v2908
        %v2910 = vrot.slane %v2882, %v2909
        %v2911 = vcombine.high %v2889, %v2889
        %v2912 = vcombine.high %v2896, %v2896
        %v2913 = vcombine.high %v2903, %v2903
        %v2914 = vcombine.high %v2910, %v2910
        %2923 = vst.msk [vmem:[%s177 + $0xb] sm:$0x1] %vm425, %v2889
        %2924 = vst.msk [vmem:[%s177 + $0x1b] sm:$0x1] %vm425, %v2903
        %2925 = vst.msk [vmem:[%s177 + $0x2b] sm:$0x1] %vm425, %v2911
        %2926 = vst.msk [vmem:[%s177 + $0x3b] sm:$0x1] %vm425, %v2913
        %2927 = vst.msk [vmem:[%s177 + $0x4b] sm:$0x1] %vm425, %v2896
        %2928 = vst.msk [vmem:[%s177 + $0x5b] sm:$0x1] %vm425, %v2910
        %2929 = vst.msk [vmem:[%s177 + $0x6b] sm:$0x1] %vm425, %v2912
        %2930 = vst.msk [vmem:[%s177 + $0x7b] sm:$0x1] %vm425, %v2914
        %v2931 = vld [vmem:[%s2486] sm:$0x1]
        %v2932 = vld [vmem:[%s2486 + $0x18] sm:$0x1]
        %v2933 = vld [vmem:[%s2486 + $0x30] sm:$0x1]
        %v2934 = vld [vmem:[%s2486 + $0x48] sm:$0x1]
        %v2935 = vld [vmem:[%s2713] sm:$0x1]
        %v2936 = vld [vmem:[%s2713 + $0x18] sm:$0x1]
        %v2937 = vld [vmem:[%s2713 + $0x30] sm:$0x1]
        %v2938 = vld [vmem:[%s2713 + $0x48] sm:$0x1]
        %s2939 = sadd.s32 %s184, 14
        %s2940 = scalar_lea.vmem %s182, %s2939
        %v2941 = vld [vmem:[%s2940] sm:$0x1]
        %v2942 = vld [vmem:[%s2940 + $0x18] sm:$0x1]
        %v2943 = vld [vmem:[%s2940 + $0x30] sm:$0x1]
        %v2944 = vld [vmem:[%s2940 + $0x48] sm:$0x1]
        %v2949 = vrot.slane %v2932, 7
        %v2950 = vsel %vm209, %v2949, %v2931
        %v2951 = vrot.slane %v2933, 6
        %v2952 = vsel %vm212, %v2951, %v2950
        %v2953 = vrot.slane %v2934, 5
        %v2954 = vsel %vm215, %v2953, %v2952
        %v2956 = vrot.slane %v2931, 4
        %v2957 = vrot.slane %v2932, 3
        %v2958 = vsel %vm220, %v2957, %v2956
        %v2959 = vrot.slane %v2933, 2
        %v2960 = vsel %vm223, %v2959, %v2958
        %v2961 = vrot.slane %v2934, 1
        %v2962 = vsel %vm226, %v2961, %v2960
        %2963 = vrot.lane.b32.xlu0 %v2962, 127
        %v2964 = vpop.permute.xlu0 %2963
        %2966 = vrot.lane.b32.xlu0 %v2954, 126
        %v2967 = vpop.permute.xlu0 %2966
        %v2973 = vrot.slane %v2935, 4
        %v2974 = vrot.slane %v2936, 3
        %v2975 = vsel %vm220, %v2974, %v2973
        %v2976 = vrot.slane %v2937, 2
        %v2977 = vsel %vm223, %v2976, %v2975
        %v2978 = vrot.slane %v2938, 1
        %v2979 = vsel %vm226, %v2978, %v2977
        %v2981 = vrot.slane %v2936, 7
        %v2982 = vsel %vm209, %v2981, %v2935
        %v2983 = vrot.slane %v2937, 6
        %v2984 = vsel %vm212, %v2983, %v2982
        %v2985 = vrot.slane %v2938, 5
        %v2986 = vsel %vm215, %v2985, %v2984
        %2987 = vrot.lane.b32.xlu0 %v2986, 127
        %v2988 = vpop.permute.xlu0 %2987
        %2990 = vrot.lane.b32.xlu0 %v2979, 126
        %v2991 = vpop.permute.xlu0 %2990
        %v2997 = vrot.slane %v2942, 7
        %v2998 = vsel %vm209, %v2997, %v2941
        %v2999 = vrot.slane %v2943, 6
        %v3000 = vsel %vm212, %v2999, %v2998
        %v3001 = vrot.slane %v2944, 5
        %v3002 = vsel %vm215, %v3001, %v3000
        %v3004 = vrot.slane %v2941, 4
        %v3005 = vrot.slane %v2942, 3
        %v3006 = vsel %vm220, %v3005, %v3004
        %v3007 = vrot.slane %v2943, 2
        %v3008 = vsel %vm223, %v3007, %v3006
        %v3009 = vrot.slane %v2944, 1
        %v3010 = vsel %vm226, %v3009, %v3008
        %3011 = vrot.lane.b32.xlu0 %v3010, 127
        %v3012 = vpop.permute.xlu0 %3011
        %3014 = vrot.lane.b32.xlu0 %v3002, 126
        %v3015 = vpop.permute.xlu0 %3014
        %v3016 = vsel %vm281, %v2954, %v2964
        %v3017 = vsel %vm281, %v2967, %v2979
        %v3018 = vsel %vm281, %v2988, %v2991
        %v3019 = vsel %vm281, %v3002, %v3012
        %v3020 = vsel %vm281, %v3015, 0
        %3022 = vmatprep.subr.mxu0 0.0
        %3023 = vmatpush1.msra.mxu0 0.0
        %3024 = vmatprep.subr.mxu0 0.0
        %3025 = vmatpush1.msra.mxu0 0.0
        %3026 = vmatprep.subr.mxu0 0.0
        %3027 = vmatpush1.msra.mxu0 0.0
        %3028 = vmatprep.subr.mxu0 0.0
        %3029 = vmatpush1.msra.mxu0 0.0
        %3030 = vmatprep.subr.mxu0 0.0
        %3031 = vmatpush1.msra.mxu0 0.0
        %3032 = vmatprep.subr.mxu0 0.0
        %3033 = vmatpush1.msra.mxu0 0.0
        %3034 = vmatprep.subr.mxu0 0.0
        %3035 = vmatpush1.msra.mxu0 0.0
        %3036 = vmatprep.subr.mxu0 0.0
        %3037 = vmatpush1.msra.mxu0 0.0
        %3038 = vmatprep.subr.mxu0 0.0
        %3039 = vmatpush1.msra.mxu0 0.0
        %3040 = vmatprep.subr.mxu0 0.0
        %3041 = vmatpush1.msra.mxu0 0.0
        %3042 = vmatprep.subr.mxu0 0.0
        %3043 = vmatpush1.msra.mxu0 0.0
        %3044 = vmatprep.subr.mxu0 0.0
        %3045 = vmatpush1.msra.mxu0 %v3020
        %3046 = vmatprep.subr.mxu0 0.0
        %3047 = vmatpush1.msra.mxu0 %v3019
        %3048 = vmatprep.subr.mxu0 0.0
        %3049 = vmatpush1.msra.mxu0 %v3018
        %3050 = vmatprep.subr.mxu0 0.0
        %3051 = vmatpush1.msra.mxu0 %v3017
        %3052 = vmatprep.subr.mxu0 0.0
        %3053 = vmatpush1.msra.mxu0 %v3016
        %3054 = vmatprep.subr.mxu0 0.0
        %3055 = vmatpush2.msra.mxu0 0.0
        %3056 = vmatprep.subr.mxu0 0.0
        %3057 = vmatpush2.msra.mxu0 0.0
        %3058 = vmatprep.subr.mxu0 0.0
        %3059 = vmatpush2.msra.mxu0 0.0
        %3060 = vmatprep.subr.mxu0 0.0
        %3061 = vmatpush2.msra.mxu0 0.0
        %3062 = vmatprep.subr.mxu0 0.0
        %3063 = vmatpush2.msra.mxu0 0.0
        %3064 = vmatprep.subr.mxu0 0.0
        %3065 = vmatpush2.msra.mxu0 0.0
        %3066 = vmatprep.subr.mxu0 0.0
        %3067 = vmatpush2.msra.mxu0 0.0
        %3068 = vmatprep.subr.mxu0 0.0
        %3069 = vmatpush2.msra.mxu0 0.0
        %3070 = vmatprep.subr.mxu0 0.0
        %3071 = vmatpush2.msra.mxu0 0.0
        %3072 = vmatprep.subr.mxu0 0.0
        %3073 = vmatpush2.msra.mxu0 0.0
        %3074 = vmatprep.subr.mxu0 0.0
        %3075 = vmatpush2.msra.mxu0 0.0
        %3076 = vmatprep.subr.mxu0 0.0
        %3077 = vmatpush2.msra.mxu0 0.0
        %3078 = vmatprep.subr.mxu0 0.0
        %3079 = vmatpush2.msra.mxu0 0.0
        %3080 = vmatprep.subr.mxu0 0.0
        %3081 = vmatpush2.msra.mxu0 0.0
        %3082 = vmatprep.subr.mxu0 0.0
        %3083 = vmatpush2.msra.mxu0 0.0
        %3084 = vmatprep.subr.mxu0 0.0
        %3085 = vmatpush2.msra.mxu0 0.0
        %3086 = vmatprep.mubr.f32.mxu0 0.0
        %3087 = vmatmul.mubr.f32.gmra.mxu0 %v293
        %v3088 = vpop.f32.mrf.mxu0
        %v3089 = vadd.f32 %v289, %v3088
        %v3090 = vpop.f32.mrf.mxu0
        %3091 = vdwg.mxu0
        %v3093 = vcombine.high %v3089, %v3089
        %v3095 = vunpack.c.l.s4 1966171168
        %v3096 = vunpack.c.0.s8 %v3095
        %v3097 = vlaneseq
        %v3098 = vshrl.u32 %v3097, 7
        %v3099 = vsub.s32 %v3096, %v3098
        %v3100 = vrot.slane %v3089, %v3099
        %v3102 = vunpack.c.l.s4 1966171168
        %v3103 = vunpack.c.0.s8 %v3102
        %v3104 = vlaneseq
        %v3105 = vshrl.u32 %v3104, 7
        %v3106 = vsub.s32 %v3103, %v3105
        %v3107 = vrot.slane %v3093, %v3106
        %v3108 = vcombine.high %v3100, %v3100
        %v3109 = vcombine.high %v3107, %v3107
        %v3111 = vunpack.c.l.s4 1966171168
        %v3112 = vunpack.c.0.s8 %v3111
        %v3113 = vlaneseq
        %v3114 = vshrl.u32 %v3113, 7
        %v3115 = vsub.s32 %v3112, %v3114
        %v3116 = vrot.slane %v3100, %v3115
        %v3118 = vunpack.c.l.s4 1966171168
        %v3119 = vunpack.c.0.s8 %v3118
        %v3120 = vlaneseq
        %v3121 = vshrl.u32 %v3120, 7
        %v3122 = vsub.s32 %v3119, %v3121
        %v3123 = vrot.slane %v3107, %v3122
        %v3125 = vunpack.c.l.s4 1966171168
        %v3126 = vunpack.c.0.s8 %v3125
        %v3127 = vlaneseq
        %v3128 = vshrl.u32 %v3127, 7
        %v3129 = vsub.s32 %v3126, %v3128
        %v3130 = vrot.slane %v3108, %v3129
        %v3132 = vunpack.c.l.s4 1966171168
        %v3133 = vunpack.c.0.s8 %v3132
        %v3134 = vlaneseq
        %v3135 = vshrl.u32 %v3134, 7
        %v3136 = vsub.s32 %v3133, %v3135
        %v3137 = vrot.slane %v3109, %v3136
        %v3138 = vcombine.high %v3116, %v3116
        %v3139 = vcombine.high %v3123, %v3123
        %v3140 = vcombine.high %v3130, %v3130
        %v3141 = vcombine.high %v3137, %v3137
        %3150 = vst.msk [vmem:[%s177 + $0xc] sm:$0x1] %vm425, %v3116
        %3151 = vst.msk [vmem:[%s177 + $0x1c] sm:$0x1] %vm425, %v3130
        %3152 = vst.msk [vmem:[%s177 + $0x2c] sm:$0x1] %vm425, %v3138
        %3153 = vst.msk [vmem:[%s177 + $0x3c] sm:$0x1] %vm425, %v3140
        %3154 = vst.msk [vmem:[%s177 + $0x4c] sm:$0x1] %vm425, %v3123
        %3155 = vst.msk [vmem:[%s177 + $0x5c] sm:$0x1] %vm425, %v3137
        %3156 = vst.msk [vmem:[%s177 + $0x6c] sm:$0x1] %vm425, %v3139
        %3157 = vst.msk [vmem:[%s177 + $0x7c] sm:$0x1] %vm425, %v3141
        %v3158 = vld [vmem:[%s2713] sm:$0x1]
        %v3159 = vld [vmem:[%s2713 + $0x18] sm:$0x1]
        %v3160 = vld [vmem:[%s2713 + $0x30] sm:$0x1]
        %v3161 = vld [vmem:[%s2713 + $0x48] sm:$0x1]
        %v3162 = vld [vmem:[%s2940] sm:$0x1]
        %v3163 = vld [vmem:[%s2940 + $0x18] sm:$0x1]
        %v3164 = vld [vmem:[%s2940 + $0x30] sm:$0x1]
        %v3165 = vld [vmem:[%s2940 + $0x48] sm:$0x1]
        %s3166 = sadd.s32 %s184, 15
        %s3167 = scalar_lea.vmem %s182, %s3166
        %v3168 = vld [vmem:[%s3167] sm:$0x1]
        %v3169 = vld [vmem:[%s3167 + $0x18] sm:$0x1]
        %v3170 = vld [vmem:[%s3167 + $0x30] sm:$0x1]
        %v3171 = vld [vmem:[%s3167 + $0x48] sm:$0x1]
        %v3176 = vrot.slane %v3159, 7
        %v3177 = vsel %vm209, %v3176, %v3158
        %v3178 = vrot.slane %v3160, 6
        %v3179 = vsel %vm212, %v3178, %v3177
        %v3180 = vrot.slane %v3161, 5
        %v3181 = vsel %vm215, %v3180, %v3179
        %v3183 = vrot.slane %v3158, 4
        %v3184 = vrot.slane %v3159, 3
        %v3185 = vsel %vm220, %v3184, %v3183
        %v3186 = vrot.slane %v3160, 2
        %v3187 = vsel %vm223, %v3186, %v3185
        %v3188 = vrot.slane %v3161, 1
        %v3189 = vsel %vm226, %v3188, %v3187
        %3190 = vrot.lane.b32.xlu0 %v3189, 127
        %v3191 = vpop.permute.xlu0 %3190
        %3193 = vrot.lane.b32.xlu0 %v3181, 126
        %v3194 = vpop.permute.xlu0 %3193
        %v3200 = vrot.slane %v3162, 4
        %v3201 = vrot.slane %v3163, 3
        %v3202 = vsel %vm220, %v3201, %v3200
        %v3203 = vrot.slane %v3164, 2
        %v3204 = vsel %vm223, %v3203, %v3202
        %v3205 = vrot.slane %v3165, 1
        %v3206 = vsel %vm226, %v3205, %v3204
        %v3208 = vrot.slane %v3163, 7
        %v3209 = vsel %vm209, %v3208, %v3162
        %v3210 = vrot.slane %v3164, 6
        %v3211 = vsel %vm212, %v3210, %v3209
        %v3212 = vrot.slane %v3165, 5
        %v3213 = vsel %vm215, %v3212, %v3211
        %3214 = vrot.lane.b32.xlu0 %v3213, 127
        %v3215 = vpop.permute.xlu0 %3214
        %3217 = vrot.lane.b32.xlu0 %v3206, 126
        %v3218 = vpop.permute.xlu0 %3217
        %v3224 = vrot.slane %v3169, 7
        %v3225 = vsel %vm209, %v3224, %v3168
        %v3226 = vrot.slane %v3170, 6
        %v3227 = vsel %vm212, %v3226, %v3225
        %v3228 = vrot.slane %v3171, 5
        %v3229 = vsel %vm215, %v3228, %v3227
        %v3231 = vrot.slane %v3168, 4
        %v3232 = vrot.slane %v3169, 3
        %v3233 = vsel %vm220, %v3232, %v3231
        %v3234 = vrot.slane %v3170, 2
        %v3235 = vsel %vm223, %v3234, %v3233
        %v3236 = vrot.slane %v3171, 1
        %v3237 = vsel %vm226, %v3236, %v3235
        %3238 = vrot.lane.b32.xlu0 %v3237, 127
        %v3239 = vpop.permute.xlu0 %3238
        %3241 = vrot.lane.b32.xlu0 %v3229, 126
        %v3242 = vpop.permute.xlu0 %3241
        %v3243 = vsel %vm281, %v3181, %v3191
        %v3244 = vsel %vm281, %v3194, %v3206
        %v3245 = vsel %vm281, %v3215, %v3218
        %v3246 = vsel %vm281, %v3229, %v3239
        %v3247 = vsel %vm281, %v3242, 0
        %3249 = vmatprep.subr.mxu0 0.0
        %3250 = vmatpush1.msra.mxu0 0.0
        %3251 = vmatprep.subr.mxu0 0.0
        %3252 = vmatpush1.msra.mxu0 0.0
        %3253 = vmatprep.subr.mxu0 0.0
        %3254 = vmatpush1.msra.mxu0 0.0
        %3255 = vmatprep.subr.mxu0 0.0
        %3256 = vmatpush1.msra.mxu0 0.0
        %3257 = vmatprep.subr.mxu0 0.0
        %3258 = vmatpush1.msra.mxu0 0.0
        %3259 = vmatprep.subr.mxu0 0.0
        %3260 = vmatpush1.msra.mxu0 0.0
        %3261 = vmatprep.subr.mxu0 0.0
        %3262 = vmatpush1.msra.mxu0 0.0
        %3263 = vmatprep.subr.mxu0 0.0
        %3264 = vmatpush1.msra.mxu0 0.0
        %3265 = vmatprep.subr.mxu0 0.0
        %3266 = vmatpush1.msra.mxu0 0.0
        %3267 = vmatprep.subr.mxu0 0.0
        %3268 = vmatpush1.msra.mxu0 0.0
        %3269 = vmatprep.subr.mxu0 0.0
        %3270 = vmatpush1.msra.mxu0 0.0
        %3271 = vmatprep.subr.mxu0 0.0
        %3272 = vmatpush1.msra.mxu0 %v3247
        %3273 = vmatprep.subr.mxu0 0.0
        %3274 = vmatpush1.msra.mxu0 %v3246
        %3275 = vmatprep.subr.mxu0 0.0
        %3276 = vmatpush1.msra.mxu0 %v3245
        %3277 = vmatprep.subr.mxu0 0.0
        %3278 = vmatpush1.msra.mxu0 %v3244
        %3279 = vmatprep.subr.mxu0 0.0
        %3280 = vmatpush1.msra.mxu0 %v3243
        %3281 = vmatprep.subr.mxu0 0.0
        %3282 = vmatpush2.msra.mxu0 0.0
        %3283 = vmatprep.subr.mxu0 0.0
        %3284 = vmatpush2.msra.mxu0 0.0
        %3285 = vmatprep.subr.mxu0 0.0
        %3286 = vmatpush2.msra.mxu0 0.0
        %3287 = vmatprep.subr.mxu0 0.0
        %3288 = vmatpush2.msra.mxu0 0.0
        %3289 = vmatprep.subr.mxu0 0.0
        %3290 = vmatpush2.msra.mxu0 0.0
        %3291 = vmatprep.subr.mxu0 0.0
        %3292 = vmatpush2.msra.mxu0 0.0
        %3293 = vmatprep.subr.mxu0 0.0
        %3294 = vmatpush2.msra.mxu0 0.0
        %3295 = vmatprep.subr.mxu0 0.0
        %3296 = vmatpush2.msra.mxu0 0.0
        %3297 = vmatprep.subr.mxu0 0.0
        %3298 = vmatpush2.msra.mxu0 0.0
        %3299 = vmatprep.subr.mxu0 0.0
        %3300 = vmatpush2.msra.mxu0 0.0
        %3301 = vmatprep.subr.mxu0 0.0
        %3302 = vmatpush2.msra.mxu0 0.0
        %3303 = vmatprep.subr.mxu0 0.0
        %3304 = vmatpush2.msra.mxu0 0.0
        %3305 = vmatprep.subr.mxu0 0.0
        %3306 = vmatpush2.msra.mxu0 0.0
        %3307 = vmatprep.subr.mxu0 0.0
        %3308 = vmatpush2.msra.mxu0 0.0
        %3309 = vmatprep.subr.mxu0 0.0
        %3310 = vmatpush2.msra.mxu0 0.0
        %3311 = vmatprep.subr.mxu0 0.0
        %3312 = vmatpush2.msra.mxu0 0.0
        %3313 = vmatprep.mubr.f32.mxu0 0.0
        %3314 = vmatmul.mubr.f32.gmra.mxu0 %v293
        %v3315 = vpop.f32.mrf.mxu0
        %v3316 = vadd.f32 %v289, %v3315
        %v3317 = vpop.f32.mrf.mxu0
        %3318 = vdwg.mxu0
        %v3320 = vcombine.high %v3316, %v3316
        %v3322 = vunpack.c.l.s4 1966171168
        %v3323 = vunpack.c.0.s8 %v3322
        %v3324 = vlaneseq
        %v3325 = vshrl.u32 %v3324, 7
        %v3326 = vsub.s32 %v3323, %v3325
        %v3327 = vrot.slane %v3316, %v3326
        %v3329 = vunpack.c.l.s4 1966171168
        %v3330 = vunpack.c.0.s8 %v3329
        %v3331 = vlaneseq
        %v3332 = vshrl.u32 %v3331, 7
        %v3333 = vsub.s32 %v3330, %v3332
        %v3334 = vrot.slane %v3320, %v3333
        %v3335 = vcombine.high %v3327, %v3327
        %v3336 = vcombine.high %v3334, %v3334
        %v3338 = vunpack.c.l.s4 1966171168
        %v3339 = vunpack.c.0.s8 %v3338
        %v3340 = vlaneseq
        %v3341 = vshrl.u32 %v3340, 7
        %v3342 = vsub.s32 %v3339, %v3341
        %v3343 = vrot.slane %v3327, %v3342
        %v3345 = vunpack.c.l.s4 1966171168
        %v3346 = vunpack.c.0.s8 %v3345
        %v3347 = vlaneseq
        %v3348 = vshrl.u32 %v3347, 7
        %v3349 = vsub.s32 %v3346, %v3348
        %v3350 = vrot.slane %v3334, %v3349
        %v3352 = vunpack.c.l.s4 1966171168
        %v3353 = vunpack.c.0.s8 %v3352
        %v3354 = vlaneseq
        %v3355 = vshrl.u32 %v3354, 7
        %v3356 = vsub.s32 %v3353, %v3355
        %v3357 = vrot.slane %v3335, %v3356
        %v3359 = vunpack.c.l.s4 1966171168
        %v3360 = vunpack.c.0.s8 %v3359
        %v3361 = vlaneseq
        %v3362 = vshrl.u32 %v3361, 7
        %v3363 = vsub.s32 %v3360, %v3362
        %v3364 = vrot.slane %v3336, %v3363
        %v3365 = vcombine.high %v3343, %v3343
        %v3366 = vcombine.high %v3350, %v3350
        %v3367 = vcombine.high %v3357, %v3357
        %v3368 = vcombine.high %v3364, %v3364
        %3377 = vst.msk [vmem:[%s177 + $0xd] sm:$0x1] %vm425, %v3343
        %3378 = vst.msk [vmem:[%s177 + $0x1d] sm:$0x1] %vm425, %v3357
        %3379 = vst.msk [vmem:[%s177 + $0x2d] sm:$0x1] %vm425, %v3365
        %3380 = vst.msk [vmem:[%s177 + $0x3d] sm:$0x1] %vm425, %v3367
        %3381 = vst.msk [vmem:[%s177 + $0x4d] sm:$0x1] %vm425, %v3350
        %3382 = vst.msk [vmem:[%s177 + $0x5d] sm:$0x1] %vm425, %v3364
        %3383 = vst.msk [vmem:[%s177 + $0x6d] sm:$0x1] %vm425, %v3366
        %3384 = vst.msk [vmem:[%s177 + $0x7d] sm:$0x1] %vm425, %v3368
        %v3385 = vld [vmem:[%s2940] sm:$0x1]
        %v3386 = vld [vmem:[%s2940 + $0x18] sm:$0x1]
        %v3387 = vld [vmem:[%s2940 + $0x30] sm:$0x1]
        %v3388 = vld [vmem:[%s2940 + $0x48] sm:$0x1]
        %v3389 = vld [vmem:[%s3167] sm:$0x1]
        %v3390 = vld [vmem:[%s3167 + $0x18] sm:$0x1]
        %v3391 = vld [vmem:[%s3167 + $0x30] sm:$0x1]
        %v3392 = vld [vmem:[%s3167 + $0x48] sm:$0x1]
        %s3393 = sadd.s32 %s184, 16
        %s3394 = scalar_lea.vmem %s182, %s3393
        %v3395 = vld [vmem:[%s3394] sm:$0x1]
        %v3396 = vld [vmem:[%s3394 + $0x18] sm:$0x1]
        %v3397 = vld [vmem:[%s3394 + $0x30] sm:$0x1]
        %v3398 = vld [vmem:[%s3394 + $0x48] sm:$0x1]
        %v3403 = vrot.slane %v3386, 7
        %v3404 = vsel %vm209, %v3403, %v3385
        %v3405 = vrot.slane %v3387, 6
        %v3406 = vsel %vm212, %v3405, %v3404
        %v3407 = vrot.slane %v3388, 5
        %v3408 = vsel %vm215, %v3407, %v3406
        %v3410 = vrot.slane %v3385, 4
        %v3411 = vrot.slane %v3386, 3
        %v3412 = vsel %vm220, %v3411, %v3410
        %v3413 = vrot.slane %v3387, 2
        %v3414 = vsel %vm223, %v3413, %v3412
        %v3415 = vrot.slane %v3388, 1
        %v3416 = vsel %vm226, %v3415, %v3414
        %3417 = vrot.lane.b32.xlu0 %v3416, 127
        %v3418 = vpop.permute.xlu0 %3417
        %3420 = vrot.lane.b32.xlu0 %v3408, 126
        %v3421 = vpop.permute.xlu0 %3420
        %v3427 = vrot.slane %v3389, 4
        %v3428 = vrot.slane %v3390, 3
        %v3429 = vsel %vm220, %v3428, %v3427
        %v3430 = vrot.slane %v3391, 2
        %v3431 = vsel %vm223, %v3430, %v3429
        %v3432 = vrot.slane %v3392, 1
        %v3433 = vsel %vm226, %v3432, %v3431
        %v3435 = vrot.slane %v3390, 7
        %v3436 = vsel %vm209, %v3435, %v3389
        %v3437 = vrot.slane %v3391, 6
        %v3438 = vsel %vm212, %v3437, %v3436
        %v3439 = vrot.slane %v3392, 5
        %v3440 = vsel %vm215, %v3439, %v3438
        %3441 = vrot.lane.b32.xlu0 %v3440, 127
        %v3442 = vpop.permute.xlu0 %3441
        %3444 = vrot.lane.b32.xlu0 %v3433, 126
        %v3445 = vpop.permute.xlu0 %3444
        %v3451 = vrot.slane %v3396, 7
        %v3452 = vsel %vm209, %v3451, %v3395
        %v3453 = vrot.slane %v3397, 6
        %v3454 = vsel %vm212, %v3453, %v3452
        %v3455 = vrot.slane %v3398, 5
        %v3456 = vsel %vm215, %v3455, %v3454
        %v3458 = vrot.slane %v3395, 4
        %v3459 = vrot.slane %v3396, 3
        %v3460 = vsel %vm220, %v3459, %v3458
        %v3461 = vrot.slane %v3397, 2
        %v3462 = vsel %vm223, %v3461, %v3460
        %v3463 = vrot.slane %v3398, 1
        %v3464 = vsel %vm226, %v3463, %v3462
        %3465 = vrot.lane.b32.xlu0 %v3464, 127
        %v3466 = vpop.permute.xlu0 %3465
        %3468 = vrot.lane.b32.xlu0 %v3456, 126
        %v3469 = vpop.permute.xlu0 %3468
        %v3470 = vsel %vm281, %v3408, %v3418
        %v3471 = vsel %vm281, %v3421, %v3433
        %v3472 = vsel %vm281, %v3442, %v3445
        %v3473 = vsel %vm281, %v3456, %v3466
        %v3474 = vsel %vm281, %v3469, 0
        %3476 = vmatprep.subr.mxu0 0.0
        %3477 = vmatpush1.msra.mxu0 0.0
        %3478 = vmatprep.subr.mxu0 0.0
        %3479 = vmatpush1.msra.mxu0 0.0
        %3480 = vmatprep.subr.mxu0 0.0
        %3481 = vmatpush1.msra.mxu0 0.0
        %3482 = vmatprep.subr.mxu0 0.0
        %3483 = vmatpush1.msra.mxu0 0.0
        %3484 = vmatprep.subr.mxu0 0.0
        %3485 = vmatpush1.msra.mxu0 0.0
        %3486 = vmatprep.subr.mxu0 0.0
        %3487 = vmatpush1.msra.mxu0 0.0
        %3488 = vmatprep.subr.mxu0 0.0
        %3489 = vmatpush1.msra.mxu0 0.0
        %3490 = vmatprep.subr.mxu0 0.0
        %3491 = vmatpush1.msra.mxu0 0.0
        %3492 = vmatprep.subr.mxu0 0.0
        %3493 = vmatpush1.msra.mxu0 0.0
        %3494 = vmatprep.subr.mxu0 0.0
        %3495 = vmatpush1.msra.mxu0 0.0
        %3496 = vmatprep.subr.mxu0 0.0
        %3497 = vmatpush1.msra.mxu0 0.0
        %3498 = vmatprep.subr.mxu0 0.0
        %3499 = vmatpush1.msra.mxu0 %v3474
        %3500 = vmatprep.subr.mxu0 0.0
        %3501 = vmatpush1.msra.mxu0 %v3473
        %3502 = vmatprep.subr.mxu0 0.0
        %3503 = vmatpush1.msra.mxu0 %v3472
        %3504 = vmatprep.subr.mxu0 0.0
        %3505 = vmatpush1.msra.mxu0 %v3471
        %3506 = vmatprep.subr.mxu0 0.0
        %3507 = vmatpush1.msra.mxu0 %v3470
        %3508 = vmatprep.subr.mxu0 0.0
        %3509 = vmatpush2.msra.mxu0 0.0
        %3510 = vmatprep.subr.mxu0 0.0
        %3511 = vmatpush2.msra.mxu0 0.0
        %3512 = vmatprep.subr.mxu0 0.0
        %3513 = vmatpush2.msra.mxu0 0.0
        %3514 = vmatprep.subr.mxu0 0.0
        %3515 = vmatpush2.msra.mxu0 0.0
        %3516 = vmatprep.subr.mxu0 0.0
        %3517 = vmatpush2.msra.mxu0 0.0
        %3518 = vmatprep.subr.mxu0 0.0
        %3519 = vmatpush2.msra.mxu0 0.0
        %3520 = vmatprep.subr.mxu0 0.0
        %3521 = vmatpush2.msra.mxu0 0.0
        %3522 = vmatprep.subr.mxu0 0.0
        %3523 = vmatpush2.msra.mxu0 0.0
        %3524 = vmatprep.subr.mxu0 0.0
        %3525 = vmatpush2.msra.mxu0 0.0
        %3526 = vmatprep.subr.mxu0 0.0
        %3527 = vmatpush2.msra.mxu0 0.0
        %3528 = vmatprep.subr.mxu0 0.0
        %3529 = vmatpush2.msra.mxu0 0.0
        %3530 = vmatprep.subr.mxu0 0.0
        %3531 = vmatpush2.msra.mxu0 0.0
        %3532 = vmatprep.subr.mxu0 0.0
        %3533 = vmatpush2.msra.mxu0 0.0
        %3534 = vmatprep.subr.mxu0 0.0
        %3535 = vmatpush2.msra.mxu0 0.0
        %3536 = vmatprep.subr.mxu0 0.0
        %3537 = vmatpush2.msra.mxu0 0.0
        %3538 = vmatprep.subr.mxu0 0.0
        %3539 = vmatpush2.msra.mxu0 0.0
        %3540 = vmatprep.mubr.f32.mxu0 0.0
        %3541 = vmatmul.mubr.f32.gmra.mxu0 %v293
        %v3542 = vpop.f32.mrf.mxu0
        %v3543 = vadd.f32 %v289, %v3542
        %v3544 = vpop.f32.mrf.mxu0
        %3545 = vdwg.mxu0
        %v3547 = vcombine.high %v3543, %v3543
        %v3549 = vunpack.c.l.s4 1966171168
        %v3550 = vunpack.c.0.s8 %v3549
        %v3551 = vlaneseq
        %v3552 = vshrl.u32 %v3551, 7
        %v3553 = vsub.s32 %v3550, %v3552
        %v3554 = vrot.slane %v3543, %v3553
        %v3556 = vunpack.c.l.s4 1966171168
        %v3557 = vunpack.c.0.s8 %v3556
        %v3558 = vlaneseq
        %v3559 = vshrl.u32 %v3558, 7
        %v3560 = vsub.s32 %v3557, %v3559
        %v3561 = vrot.slane %v3547, %v3560
        %v3562 = vcombine.high %v3554, %v3554
        %v3563 = vcombine.high %v3561, %v3561
        %v3565 = vunpack.c.l.s4 1966171168
        %v3566 = vunpack.c.0.s8 %v3565
        %v3567 = vlaneseq
        %v3568 = vshrl.u32 %v3567, 7
        %v3569 = vsub.s32 %v3566, %v3568
        %v3570 = vrot.slane %v3554, %v3569
        %v3572 = vunpack.c.l.s4 1966171168
        %v3573 = vunpack.c.0.s8 %v3572
        %v3574 = vlaneseq
        %v3575 = vshrl.u32 %v3574, 7
        %v3576 = vsub.s32 %v3573, %v3575
        %v3577 = vrot.slane %v3561, %v3576
        %v3579 = vunpack.c.l.s4 1966171168
        %v3580 = vunpack.c.0.s8 %v3579
        %v3581 = vlaneseq
        %v3582 = vshrl.u32 %v3581, 7
        %v3583 = vsub.s32 %v3580, %v3582
        %v3584 = vrot.slane %v3562, %v3583
        %v3586 = vunpack.c.l.s4 1966171168
        %v3587 = vunpack.c.0.s8 %v3586
        %v3588 = vlaneseq
        %v3589 = vshrl.u32 %v3588, 7
        %v3590 = vsub.s32 %v3587, %v3589
        %v3591 = vrot.slane %v3563, %v3590
        %v3592 = vcombine.high %v3570, %v3570
        %v3593 = vcombine.high %v3577, %v3577
        %v3594 = vcombine.high %v3584, %v3584
        %v3595 = vcombine.high %v3591, %v3591
        %3604 = vst.msk [vmem:[%s177 + $0xe] sm:$0x1] %vm425, %v3570
        %3605 = vst.msk [vmem:[%s177 + $0x1e] sm:$0x1] %vm425, %v3584
        %3606 = vst.msk [vmem:[%s177 + $0x2e] sm:$0x1] %vm425, %v3592
        %3607 = vst.msk [vmem:[%s177 + $0x3e] sm:$0x1] %vm425, %v3594
        %3608 = vst.msk [vmem:[%s177 + $0x4e] sm:$0x1] %vm425, %v3577
        %3609 = vst.msk [vmem:[%s177 + $0x5e] sm:$0x1] %vm425, %v3591
        %3610 = vst.msk [vmem:[%s177 + $0x6e] sm:$0x1] %vm425, %v3593
        %3611 = vst.msk [vmem:[%s177 + $0x7e] sm:$0x1] %vm425, %v3595
        %v3612 = vld [vmem:[%s3167] sm:$0x1]
        %v3613 = vld [vmem:[%s3167 + $0x18] sm:$0x1]
        %v3614 = vld [vmem:[%s3167 + $0x30] sm:$0x1]
        %v3615 = vld [vmem:[%s3167 + $0x48] sm:$0x1]
        %v3616 = vld [vmem:[%s3394] sm:$0x1]
        %v3617 = vld [vmem:[%s3394 + $0x18] sm:$0x1]
        %v3618 = vld [vmem:[%s3394 + $0x30] sm:$0x1]
        %v3619 = vld [vmem:[%s3394 + $0x48] sm:$0x1]
        %s3620 = sadd.s32 %s184, 17
        %s3621 = scalar_lea.vmem %s182, %s3620
        %v3622 = vld [vmem:[%s3621] sm:$0x1]
        %v3623 = vld [vmem:[%s3621 + $0x18] sm:$0x1]
        %v3624 = vld [vmem:[%s3621 + $0x30] sm:$0x1]
        %v3625 = vld [vmem:[%s3621 + $0x48] sm:$0x1]
        %v3630 = vrot.slane %v3613, 7
        %v3631 = vsel %vm209, %v3630, %v3612
        %v3632 = vrot.slane %v3614, 6
        %v3633 = vsel %vm212, %v3632, %v3631
        %v3634 = vrot.slane %v3615, 5
        %v3635 = vsel %vm215, %v3634, %v3633
        %v3637 = vrot.slane %v3612, 4
        %v3638 = vrot.slane %v3613, 3
        %v3639 = vsel %vm220, %v3638, %v3637
        %v3640 = vrot.slane %v3614, 2
        %v3641 = vsel %vm223, %v3640, %v3639
        %v3642 = vrot.slane %v3615, 1
        %v3643 = vsel %vm226, %v3642, %v3641
        %3644 = vrot.lane.b32.xlu0 %v3643, 127
        %v3645 = vpop.permute.xlu0 %3644
        %3647 = vrot.lane.b32.xlu0 %v3635, 126
        %v3648 = vpop.permute.xlu0 %3647
        %v3654 = vrot.slane %v3616, 4
        %v3655 = vrot.slane %v3617, 3
        %v3656 = vsel %vm220, %v3655, %v3654
        %v3657 = vrot.slane %v3618, 2
        %v3658 = vsel %vm223, %v3657, %v3656
        %v3659 = vrot.slane %v3619, 1
        %v3660 = vsel %vm226, %v3659, %v3658
        %v3662 = vrot.slane %v3617, 7
        %v3663 = vsel %vm209, %v3662, %v3616
        %v3664 = vrot.slane %v3618, 6
        %v3665 = vsel %vm212, %v3664, %v3663
        %v3666 = vrot.slane %v3619, 5
        %v3667 = vsel %vm215, %v3666, %v3665
        %3668 = vrot.lane.b32.xlu0 %v3667, 127
        %v3669 = vpop.permute.xlu0 %3668
        %3671 = vrot.lane.b32.xlu0 %v3660, 126
        %v3672 = vpop.permute.xlu0 %3671
        %v3678 = vrot.slane %v3623, 7
        %v3679 = vsel %vm209, %v3678, %v3622
        %v3680 = vrot.slane %v3624, 6
        %v3681 = vsel %vm212, %v3680, %v3679
        %v3682 = vrot.slane %v3625, 5
        %v3683 = vsel %vm215, %v3682, %v3681
        %v3685 = vrot.slane %v3622, 4
        %v3686 = vrot.slane %v3623, 3
        %v3687 = vsel %vm220, %v3686, %v3685
        %v3688 = vrot.slane %v3624, 2
        %v3689 = vsel %vm223, %v3688, %v3687
        %v3690 = vrot.slane %v3625, 1
        %v3691 = vsel %vm226, %v3690, %v3689
        %3692 = vrot.lane.b32.xlu0 %v3691, 127
        %v3693 = vpop.permute.xlu0 %3692
        %3695 = vrot.lane.b32.xlu0 %v3683, 126
        %v3696 = vpop.permute.xlu0 %3695
        %v3697 = vsel %vm281, %v3635, %v3645
        %v3698 = vsel %vm281, %v3648, %v3660
        %v3699 = vsel %vm281, %v3669, %v3672
        %v3700 = vsel %vm281, %v3683, %v3693
        %v3701 = vsel %vm281, %v3696, 0
        %3703 = vmatprep.subr.mxu0 0.0
        %3704 = vmatpush1.msra.mxu0 0.0
        %3705 = vmatprep.subr.mxu0 0.0
        %3706 = vmatpush1.msra.mxu0 0.0
        %3707 = vmatprep.subr.mxu0 0.0
        %3708 = vmatpush1.msra.mxu0 0.0
        %3709 = vmatprep.subr.mxu0 0.0
        %3710 = vmatpush1.msra.mxu0 0.0
        %3711 = vmatprep.subr.mxu0 0.0
        %3712 = vmatpush1.msra.mxu0 0.0
        %3713 = vmatprep.subr.mxu0 0.0
        %3714 = vmatpush1.msra.mxu0 0.0
        %3715 = vmatprep.subr.mxu0 0.0
        %3716 = vmatpush1.msra.mxu0 0.0
        %3717 = vmatprep.subr.mxu0 0.0
        %3718 = vmatpush1.msra.mxu0 0.0
        %3719 = vmatprep.subr.mxu0 0.0
        %3720 = vmatpush1.msra.mxu0 0.0
        %3721 = vmatprep.subr.mxu0 0.0
        %3722 = vmatpush1.msra.mxu0 0.0
        %3723 = vmatprep.subr.mxu0 0.0
        %3724 = vmatpush1.msra.mxu0 0.0
        %3725 = vmatprep.subr.mxu0 0.0
        %3726 = vmatpush1.msra.mxu0 %v3701
        %3727 = vmatprep.subr.mxu0 0.0
        %3728 = vmatpush1.msra.mxu0 %v3700
        %3729 = vmatprep.subr.mxu0 0.0
        %3730 = vmatpush1.msra.mxu0 %v3699
        %3731 = vmatprep.subr.mxu0 0.0
        %3732 = vmatpush1.msra.mxu0 %v3698
        %3733 = vmatprep.subr.mxu0 0.0
        %3734 = vmatpush1.msra.mxu0 %v3697
        %3735 = vmatprep.subr.mxu0 0.0
        %3736 = vmatpush2.msra.mxu0 0.0
        %3737 = vmatprep.subr.mxu0 0.0
        %3738 = vmatpush2.msra.mxu0 0.0
        %3739 = vmatprep.subr.mxu0 0.0
        %3740 = vmatpush2.msra.mxu0 0.0
        %3741 = vmatprep.subr.mxu0 0.0
        %3742 = vmatpush2.msra.mxu0 0.0
        %3743 = vmatprep.subr.mxu0 0.0
        %3744 = vmatpush2.msra.mxu0 0.0
        %3745 = vmatprep.subr.mxu0 0.0
        %3746 = vmatpush2.msra.mxu0 0.0
        %3747 = vmatprep.subr.mxu0 0.0
        %3748 = vmatpush2.msra.mxu0 0.0
        %3749 = vmatprep.subr.mxu0 0.0
        %3750 = vmatpush2.msra.mxu0 0.0
        %3751 = vmatprep.subr.mxu0 0.0
        %3752 = vmatpush2.msra.mxu0 0.0
        %3753 = vmatprep.subr.mxu0 0.0
        %3754 = vmatpush2.msra.mxu0 0.0
        %3755 = vmatprep.subr.mxu0 0.0
        %3756 = vmatpush2.msra.mxu0 0.0
        %3757 = vmatprep.subr.mxu0 0.0
        %3758 = vmatpush2.msra.mxu0 0.0
        %3759 = vmatprep.subr.mxu0 0.0
        %3760 = vmatpush2.msra.mxu0 0.0
        %3761 = vmatprep.subr.mxu0 0.0
        %3762 = vmatpush2.msra.mxu0 0.0
        %3763 = vmatprep.subr.mxu0 0.0
        %3764 = vmatpush2.msra.mxu0 0.0
        %3765 = vmatprep.subr.mxu0 0.0
        %3766 = vmatpush2.msra.mxu0 0.0
        %3767 = vmatprep.mubr.f32.mxu0 0.0
        %3768 = vmatmul.mubr.f32.gmra.mxu0 %v293
        %v3769 = vpop.f32.mrf.mxu0
        %v3770 = vadd.f32 %v289, %v3769
        %v3771 = vpop.f32.mrf.mxu0
        %3772 = vdwg.mxu0
        %v3774 = vcombine.high %v3770, %v3770
        %v3776 = vunpack.c.l.s4 1966171168
        %v3777 = vunpack.c.0.s8 %v3776
        %v3778 = vlaneseq
        %v3779 = vshrl.u32 %v3778, 7
        %v3780 = vsub.s32 %v3777, %v3779
        %v3781 = vrot.slane %v3770, %v3780
        %v3783 = vunpack.c.l.s4 1966171168
        %v3784 = vunpack.c.0.s8 %v3783
        %v3785 = vlaneseq
        %v3786 = vshrl.u32 %v3785, 7
        %v3787 = vsub.s32 %v3784, %v3786
        %v3788 = vrot.slane %v3774, %v3787
        %v3789 = vcombine.high %v3781, %v3781
        %v3790 = vcombine.high %v3788, %v3788
        %v3792 = vunpack.c.l.s4 1966171168
        %v3793 = vunpack.c.0.s8 %v3792
        %v3794 = vlaneseq
        %v3795 = vshrl.u32 %v3794, 7
        %v3796 = vsub.s32 %v3793, %v3795
        %v3797 = vrot.slane %v3781, %v3796
        %v3799 = vunpack.c.l.s4 1966171168
        %v3800 = vunpack.c.0.s8 %v3799
        %v3801 = vlaneseq
        %v3802 = vshrl.u32 %v3801, 7
        %v3803 = vsub.s32 %v3800, %v3802
        %v3804 = vrot.slane %v3788, %v3803
        %v3806 = vunpack.c.l.s4 1966171168
        %v3807 = vunpack.c.0.s8 %v3806
        %v3808 = vlaneseq
        %v3809 = vshrl.u32 %v3808, 7
        %v3810 = vsub.s32 %v3807, %v3809
        %v3811 = vrot.slane %v3789, %v3810
        %v3813 = vunpack.c.l.s4 1966171168
        %v3814 = vunpack.c.0.s8 %v3813
        %v3815 = vlaneseq
        %v3816 = vshrl.u32 %v3815, 7
        %v3817 = vsub.s32 %v3814, %v3816
        %v3818 = vrot.slane %v3790, %v3817
        %v3819 = vcombine.high %v3797, %v3797
        %v3820 = vcombine.high %v3804, %v3804
        %v3821 = vcombine.high %v3811, %v3811
        %v3822 = vcombine.high %v3818, %v3818
        %3831 = vst.msk [vmem:[%s177 + $0xf] sm:$0x1] %vm425, %v3797
        %3832 = vst.msk [vmem:[%s177 + $0x1f] sm:$0x1] %vm425, %v3811
        %3833 = vst.msk [vmem:[%s177 + $0x2f] sm:$0x1] %vm425, %v3819
        %3834 = vst.msk [vmem:[%s177 + $0x3f] sm:$0x1] %vm425, %v3821
        %3835 = vst.msk [vmem:[%s177 + $0x4f] sm:$0x1] %vm425, %v3804
        %3836 = vst.msk [vmem:[%s177 + $0x5f] sm:$0x1] %vm425, %v3818
        %3837 = vst.msk [vmem:[%s177 + $0x6f] sm:$0x1] %vm425, %v3820
        %3838 = vst.msk [vmem:[%s177 + $0x7f] sm:$0x1] %vm425, %v3822
        %s3839 = sand.u32 %s107, 1
        %s3840 = scalar_lea.sflag [#allocation3], %s3839
        %s3841 = sand.u32 %s107, 1
        %s3842 = smul.addr %s3841, 128
        %s3843 = scalar_lea.vmem [#allocation2], %s3842
        // Predicated region
        $region33: #{dconv_forward.1} parent=31 // pred_check
          %p3844 = pneg %p117
        $region34: #{dconv_forward.1} parent=31 // pred_check_branch
          %3846 = sbr.rel (%p3844) target = $region36
        $region35: #{dconv_forward.1} parent=31 // pred_region
          %s3847 = smul.u32 2, %s22
          %s3849 = ssub.s32 2048, 2048
          %3850 = vsyncadd %s3840, %s3849
          %s3851 = smul.addr %s21, 16
          %s3852 = sadd.s32 %s3847, %s3851
          %s3853 = smul.addr %s3852, 128
          %s3854 = scalar_lea.hbm %s3, %s3853
          %s3855 = sshll.u32 %s3843, 4
          %s3856 = int_to_ptr.vmem [resolvable:$true] %s3855
          %3861 = dma.vmem_to_hbm [thread:$0]  %s3856, 2048, %s3854, %s3840, 128, 128, 8
        $region36: #{dconv_forward.1} parent=31 // pred_fallthru
          _
      $region32: #{dconv_forward.1} parent=5 // pred_fallthru
        _
      %p3862 = scmp.le.s32.totalorder 2, %s12
      // Predicated region
      $region37: #{dconv_forward.1} parent=5 // pred_check
        %p3863 = pneg %p3862
      $region38: #{dconv_forward.1} parent=5 // pred_check_branch
        %3865 = sbr.rel (%p3863) target = $region40
      $region39: #{dconv_forward.1} parent=5 // pred_region
        %s3866 = ssub.s32 %s12, 2
        // Predicated region
        $region41: #{dconv_forward.1} parent=39 // pred_check
          %p3867 = pneg %p123
        $region42: #{dconv_forward.1} parent=39 // pred_check_branch
          %3869 = sbr.rel (%p3867) target = $region44
        $region43: #{dconv_forward.1} parent=39 // pred_region
          %s3870 = sand.u32 %s108, 1
          %s3871 = scalar_lea.sflag [#allocation3], %s3870
          %s3872 = sand.u32 %s108, 1
          %s3873 = smul.addr %s3872, 128
          %s3874 = scalar_lea.vmem [#allocation2], %s3873
          %3875 = dma.done %s3871, 2048
        $region44: #{dconv_forward.1} parent=39 // pred_fallthru
          _
      $region40: #{dconv_forward.1} parent=5 // pred_fallthru
        _
    $region6: #{dconv_forward.1} parent=1 // loop_footer
      %s16 = sadd.s32 1, %s12
    $region7: #{dconv_forward.1} parent=1 // loop_footer_branch
      %11 = sbr.rel target = $region3
    $region8: #{dconv_forward.1} parent=1 // loop_exit
      _
    %3876 = vsyncpa [#allocation3], 1
    %s3877 = scalar_lea.sflag [#allocation3], 1
    %3878 = vsyncpa %s3877, 1

</llo_original>
